<compile_context>
chip_gen: v7x
topology: tpu7x:2x2x1
jax: 0.10.0
libtpu: 0.0.40
codegen_flags: <defaults>
</compile_context>

<pallas_src>
import functools

import jax
import jax.numpy as jnp
from jax.experimental import pallas as pl
from jax.experimental.pallas import tpu as pltpu

LANES = 128
_VMEM = pl.BlockSpec(memory_space=pltpu.MemorySpace.VMEM)


def _round_up(x, m):
    return ((x + m - 1) // m) * m


# --------------------------------------------------------------------------
# Fused kernel: two-hot gate-input gather + merged masked GRU + pooling + MLP
# --------------------------------------------------------------------------
def _fused_kernel(Tmax, Bp, tok_ref, lens_ref, feat_ref,
                  gitab_ref, whh_ref, headw_ref, bias_ref, out_ref):
    """tok_ref   : (2, Tmax*Bp, 1) int32 time-major token ids
                   [0] = news tokens, [1] = title tokens + vocab offset
       lens_ref  : (Bp, 128) int32 per-lane valid lengths (news lanes use
                   text_len, title lanes title_len, padding lanes 1)
       feat_ref  : (Bp, 128) f32 features zero-padded to 128 lanes
       gitab_ref : (Vp, 3*128) per-token gate-input table (biases folded)
       whh_ref   : (128, 3*128) block-diagonal, gate-slab-packed hidden weights
       headw_ref : (8, 128, 128) stacked head weight blocks
       bias_ref  : (6, 1, 128) stacked bias rows
       out_ref   : (Bp, 128) lane-dense output; column 0 is the model output."""
    N = Tmax * Bp
    Vp = gitab_ref.shape[0]

    def dot(a, b):
        return jnp.dot(a, b, preferred_element_type=jnp.float32)

    def leaky(x):
        return jnp.where(x >= 0.0, x, 0.01 * x)

    def sig(x):                       # sigmoid via a single tanh (one EUP op)
        return 0.5 * jnp.tanh(0.5 * x) + 0.5

    # ---- per-token gate inputs for BOTH GRUs via one "two-hot" MXU gather ----
    lane = jax.lax.broadcasted_iota(jnp.int32, (N, Vp), 1)
    hot = jnp.where((lane == tok_ref[0]) | (lane == tok_ref[1]), 1.0, 0.0)
    gi_all = dot(hot, gitab_ref[...])                    # (Tmax*Bp, 3*128)

    # ---- merged block-diagonal masked GRU recurrence -------------------------
    lens = lens_ref[...]                                 # (Bp, 128) int32
    whh = whh_ref[...]                                   # (128, 3*128)
    bhhn = jnp.broadcast_to(bias_ref[5], (Bp, LANES))    # hoisted broadcast
    h = jnp.zeros((Bp, LANES), jnp.float32)
    s = jnp.zeros((Bp, LANES), jnp.float32)
    m = jnp.full((Bp, LANES), -jnp.inf, jnp.float32)

    # TODO(synk): at much larger Tmax switch to lax.fori_loop with partial
    # unroll and pl.ds(t*Bp, Bp) slices to bound code size.
    for t in range(Tmax):
        gh = dot(h, whh)                                 # ONE MXU push per step
        gi = gi_all[t * Bp:(t + 1) * Bp, :]              # static aligned slice
        r = sig(gi[:, :LANES] + gh[:, :LANES])
        z = sig(gi[:, LANES:2 * LANES] + gh[:, LANES:2 * LANES])
        n = jnp.tanh(gi[:, 2 * LANES:] + r * (gh[:, 2 * LANES:] + bhhn))
        h_new = n + z * (h - n)                          # = (1-z)*n + z*h
        valid = lens > t                                 # per-lane length mask
        h = jnp.where(valid, h_new, h)
        s = s + jnp.where(valid, h_new, 0.0)
        m = jnp.where(valid, jnp.maximum(m, h_new), m)

    # ---- pooling + MLP head (split-and-accumulate, no lane concats) ----------
    # Contract (same as pack_padded_sequence): all real lengths >= 1, so m is
    # finite and the division is safe.
    avg = s / lens.astype(jnp.float32)
    out_nt = leaky(dot(h, headw_ref[0]) + dot(avg, headw_ref[1])
                   + dot(m, headw_ref[2]) + bias_ref[0])          # [news|title]
    fx = jnp.maximum(dot(feat_ref[...], headw_ref[3]) + bias_ref[1], 0.0)
    fx = leaky(dot(fx, headw_ref[4]) + bias_ref[2])               # fc2_X + BN
    o = jnp.maximum(dot(out_nt, headw_ref[5]) + dot(fx, headw_ref[6])
                    + bias_ref[3], 0.0)                           # fc2 + BN
    out_ref[...] = dot(o, headw_ref[7]) + bias_ref[4]             # fc3, lane-dense


# --------------------------------------------------------------------------
# One-time weight packing (outside jit of the forward pass)
# --------------------------------------------------------------------------
def prepare_params(p):
    emb = p['embedding'].astype(jnp.float32)
    V, _ = emb.shape
    wih_n, whh_n, bih_n, bhh_n = p['gru_news']
    wih_t, whh_t, bih_t, bhh_t = p['gru_title']
    Hn = whh_n.shape[-1]
    Ht = whh_t.shape[-1]
    Hc = Hn + Ht
    assert Hc <= LANES
    Vp = _round_up(2 * V, LANES)

    # TODO(synk): the in-kernel two-hot embedding gather assumes the per-token
    # gate table (2*vocab, 3*128) f32 fits comfortably in VMEM; for a large
    # production vocab keep the table gather outside the kernel instead.
    tab = jnp.zeros((Vp, 3 * LANES), jnp.float32)
    whh_p = jnp.zeros((LANES, 3 * LANES), jnp.float32)
    for g in range(3):                                   # gates [r, z, n]
        bn_g = bih_n[g] + (bhh_n[g] if g < 2 else 0.0)   # b_hn stays in r*(...)
        bt_g = bih_t[g] + (bhh_t[g] if g < 2 else 0.0)
        tab = tab.at[:V, g * LANES:g * LANES + Hn].set(emb @ wih_n[g] + bn_g)
        tab = tab.at[V:2 * V, g * LANES + Hn:g * LANES + Hc].set(emb @ wih_t[g] + bt_g)
        whh_p = whh_p.at[:Hn, g * LANES:g * LANES + Hn].set(whh_n[g])
        whh_p = whh_p.at[Hn:Hc, g * LANES + Hn:g * LANES + Hc].set(whh_t[g])

    def block(w):
        z = jnp.zeros((LANES, LANES), jnp.float32)
        return z.at[:w.shape[0], :w.shape[1]].set(w)

    def brow(b):
        z = jnp.zeros((1, LANES), jnp.float32)
        return z.at[:, :b.shape[1]].set(b)

    wn, bn = p['wn'], p['bn']
    wt, bt = p['wt'], p['bt']
    Nn, Nt = wn.shape[1], wt.shape[1]
    n_cat = Nn + Nt

    # Pool heads: one block per pool component (last / avg / max); news output
    # in cols [0,Nn), title in cols [Nn,Nn+Nt) — same order fc2 expects.
    w_pool = []
    for g in range(3):
        blk = jnp.zeros((LANES, LANES), jnp.float32)
        blk = blk.at[:Hn, :Nn].set(wn[g * Hn:(g + 1) * Hn])
        blk = blk.at[Hn:Hc, Nn:n_cat].set(wt[g * Ht:(g + 1) * Ht])
        w_pool.append(blk)

    # Fold eval-mode BatchNorms into the preceding linears.
    w2x_s = p['w2x'] * p['s2x']
    b2x_s = p['b2x'] * p['s2x'] + p['t2x']
    w2_s = p['w2'] * p['s2']
    b2_s = p['b2'] * p['s2'] + p['t2']

    head_w = jnp.stack([w_pool[0], w_pool[1], w_pool[2],
                        block(p['w1x']), block(w2x_s),
                        block(w2_s[:n_cat]), block(w2_s[n_cat:]),
                        block(p['w3'])], axis=0)

    b_nt = jnp.zeros((1, LANES), jnp.float32)
    b_nt = b_nt.at[:, :Nn].set(bn).at[:, Nn:n_cat].set(bt)
    bhhn_row = jnp.zeros((1, LANES), jnp.float32)
    bhhn_row = bhhn_row.at[:, :Hn].set(bhh_n[2]).at[:, Hn:Hc].set(bhh_t[2])
    bias_pack = jnp.stack([b_nt, brow(p['b1x']), brow(b2x_s), brow(b2_s),
                           brow(p['b3']), bhhn_row], axis=0)

    return dict(gi_table=tab, whh=whh_p, head_w=head_w, bias=bias_pack,
                Hn=Hn, Ht=Ht, vocab=V)


# --------------------------------------------------------------------------
# Full forward (jit-able; only tiny per-call input prep happens outside kernel)
# --------------------------------------------------------------------------
def model_forward(packed, text, text_len, title, title_len, features):
    B, T_news = text.shape
    _, T_title = title.shape
    Tmax = max(T_news, T_title)
    Bp = _round_up(max(B, 8), 8)
    F = features.shape[1]
    Hn, Ht, vocab = packed['Hn'], packed['Ht'], packed['vocab']

    # Time-major flattened token ids; title ids offset by vocab into the
    # combined table so both GRUs are gathered with one two-hot matmul.
    text_p = jnp.zeros((Bp, Tmax), jnp.int32).at[:B, :T_news].set(text.astype(jnp.int32))
    title_p = jnp.zeros((Bp, Tmax), jnp.int32).at[:B, :T_title].set(title.astype(jnp.int32))
    tok = jnp.stack([text_p.T.reshape(Tmax * Bp, 1),
                     title_p.T.reshape(Tmax * Bp, 1) + vocab],
                    axis=0).astype(jnp.int32)

    # Per-lane lengths: lanes [0,Hn) follow text_len, [Hn,Hn+Ht) title_len,
    # padding lanes/rows use 1 (results discarded by the final slice).
    tl = jnp.ones((Bp, 1), jnp.int32).at[:B, 0].set(text_len.astype(jnp.int32))
    ttl = jnp.ones((Bp, 1), jnp.int32).at[:B, 0].set(title_len.astype(jnp.int32))
    lane = jnp.arange(LANES)[None, :]
    lens_lanes = jnp.where(lane < Hn, tl,
                           jnp.where(lane < Hn + Ht, ttl, 1)).astype(jnp.int32)

    feat_p = jnp.zeros((Bp, LANES), jnp.float32).at[:B, :F].set(
        features.astype(jnp.float32))

    # TODO(synk): for large deployment batches add a ("parallel",) grid over
    # 8-row batch blocks so both v7x TensorCores are used; at Bp=8 it is moot.
    out = pl.pallas_call(
        functools.partial(_fused_kernel, Tmax, Bp),
        out_shape=jax.ShapeDtypeStruct((Bp, LANES), jnp.float32),
        in_specs=[_VMEM] * 7,
        out_specs=_VMEM,
    )(tok, lens_lanes, feat_p, packed['gi_table'], packed['whh'],
      packed['head_w'], packed['bias'])
    return out[:B, :1]


# --------------------------------------------------------------------------
# Pure-JAX reference (same math, raw params) for correctness check
# --------------------------------------------------------------------------
def _gru_pool_ref(x_bte, lens, wih, whh, bih, bhh):
    B, T, _ = x_bte.shape
    H = whh.shape[-1]
    lens2 = lens[:, None].astype(jnp.int32)
    h = jnp.zeros((B, H), jnp.float32)
    s = jnp.zeros((B, H), jnp.float32)
    m = jnp.full((B, H), -jnp.inf, jnp.float32)
    for t in range(T):
        x_t = x_bte[:, t, :]
        r = jax.nn.sigmoid(x_t @ wih[0] + bih[0] + h @ whh[0] + bhh[0])
        z = jax.nn.sigmoid(x_t @ wih[1] + bih[1] + h @ whh[1] + bhh[1])
        n = jnp.tanh(x_t @ wih[2] + bih[2] + r * (h @ whh[2] + bhh[2]))
        h_new = (1.0 - z) * n + z * h
        valid = lens2 > t
        h = jnp.where(valid, h_new, h)
        s = s + jnp.where(valid, h_new, 0.0)
        m = jnp.where(valid, jnp.maximum(m, h_new), m)
    avg = s / lens2.astype(jnp.float32)
    return jnp.concatenate([h, avg, m], axis=1)


def _forward_ref(p, text, text_len, title, title_len, features):
    leaky = lambda x: jnp.where(x >= 0.0, x, 0.01 * x)
    pool_n = _gru_pool_ref(p['embedding'][text], text_len, *p['gru_news'])
    pool_t = _gru_pool_ref(p['embedding'][title], title_len, *p['gru_title'])
    news = leaky(pool_n @ p['wn'] + p['bn'])
    titl = leaky(pool_t @ p['wt'] + p['bt'])
    f = jnp.maximum(features @ p['w1x'] + p['b1x'], 0.0)
    f = f @ p['w2x'] + p['b2x']
    f = leaky(f * p['s2x'] + p['t2x'])
    cat = jnp.concatenate([news, titl, f], axis=1)
    o = cat @ p['w2'] + p['b2']
    o = jnp.maximum(o * p['s2'] + p['t2'], 0.0)
    return o @ p['w3'] + p['b3']


# --------------------------------------------------------------------------
# Deterministic parameter init (eval-mode model; BN as scale/shift)
# --------------------------------------------------------------------------
def make_params(key, vocab_size, emb_size, h_news, h_title, feat_size):
    ks = iter(jax.random.split(key, 64))

    def nrm(shape, scale=0.1):
        return (scale * jax.random.normal(next(ks), shape)).astype(jnp.float32)

    def linear(n_in, n_out):
        return nrm((n_in, n_out)), nrm((1, n_out))

    def gru(n_in, h):
        # Gates stacked on a leading axis [r, z, n] (math layout: x @ W).
        return (nrm((3, n_in, h)), nrm((3, h, h)),
                nrm((3, 1, h)), nrm((3, 1, h)))

    def bn_fold(n):
        gamma = 1.0 + nrm((1, n))
        beta = nrm((1, n))
        mean = nrm((1, n))
        var = 1.0 + jnp.abs(nrm((1, n)))
        scale = gamma / jnp.sqrt(var + 1e-5)
        shift = beta - mean * scale
        return scale.astype(jnp.float32), shift.astype(jnp.float32)

    emb = nrm((vocab_size, emb_size))
    emb = emb.at[0].set(0.0)                               # padding_idx=0

    p = {'embedding': emb,
         'gru_news': gru(emb_size, h_news),
         'gru_title': gru(emb_size, h_title)}
    p['wn'], p['bn'] = linear(3 * h_news, 12)              # fc_news1
    p['wt'], p['bt'] = linear(3 * h_title, 8)              # fc_title1
    p['w1x'], p['b1x'] = linear(feat_size, 32)             # fc1_X
    p['w2x'], p['b2x'] = linear(32, 16)                    # fc2_X
    p['s2x'], p['t2x'] = bn_fold(16)                       # norm2_X (eval)
    p['w2'], p['b2'] = linear(12 + 8 + 16, 8)              # fc2
    p['s2'], p['t2'] = bn_fold(8)                          # norm2 (eval)
    p['w3'], p['b3'] = linear(8, 1)                        # fc3
    # TODO(synk): norm_news1 / norm_title1 exist in __init__ but are never used
    # in forward; dropout layers are identity in eval — nothing to translate.
    return p


# --------------------------------------------------------------------------
if __name__ == "__main__":
    B = 4
    VOCAB, EMB = 50, 30
    H_NEWS = H_TITLE = 10
    MAX_LEN, MAX_TITLE_LEN = 12, 8
    FEAT = 6

    key = jax.random.PRNGKey(0)
    k_p, k_text, k_title, k_feat = jax.random.split(key, 4)

    params = make_params(k_p, VOCAB, EMB, H_NEWS, H_TITLE, FEAT)
    packed = prepare_params(params)            # one-time weight packing

    text_len = jnp.array([12, 7, 3, 9], dtype=jnp.int32)
    title_len = jnp.array([8, 5, 2, 6], dtype=jnp.int32)

    text = jax.random.randint(k_text, (B, MAX_LEN), 1, VOCAB, dtype=jnp.int32)
    text = jnp.where(jnp.arange(MAX_LEN)[None, :] < text_len[:, None], text, 0)
    title = jax.random.randint(k_title, (B, MAX_TITLE_LEN), 1, VOCAB, dtype=jnp.int32)
    title = jnp.where(jnp.arange(MAX_TITLE_LEN)[None, :] < title_len[:, None], title, 0)
    features = (0.5 * jax.random.normal(k_feat, (B, FEAT))).astype(jnp.float32)

    fwd = jax.jit(model_forward)
    out = jax.block_until_ready(
        fwd(packed, text, text_len, title, title_len, features))

    ref = jax.block_until_ready(
        _forward_ref(params, text, text_len, title, title_len, features))

    assert out.shape == (B, 1), out.shape
    assert jnp.allclose(out, ref, rtol=1e-2, atol=2e-3), (out, ref)
    print("KERNEL_OK")
</pallas_src>

<mosaic_0001>
module attributes {stable_mosaic.version = 11 : i64} {
  func.func @_fused_kernel(%arg0: memref<2x96x1xi32, #tpu.memory_space<vmem>>, %arg1: memref<8x128xi32, #tpu.memory_space<vmem>>, %arg2: memref<8x128xf32, #tpu.memory_space<vmem>>, %arg3: memref<128x384xf32, #tpu.memory_space<vmem>>, %arg4: memref<128x384xf32, #tpu.memory_space<vmem>>, %arg5: memref<8x128x128xf32, #tpu.memory_space<vmem>>, %arg6: memref<6x1x128xf32, #tpu.memory_space<vmem>>, %arg7: memref<8x128xf32, #tpu.memory_space<vmem>>) attributes {dimension_semantics = [], scalar_prefetch = 0 : i64, scratch_operands = 0 : i64, tpu.core_type = #tpu.core_type<tc>} {
    %0 = tpu.iota {dimensions = array<i32: 1>} : vector<96x128xi32>
    %c0 = arith.constant 0 : index
    %c0_0 = arith.constant 0 : index
    %c0_1 = arith.constant 0 : index
    %1 = vector.load %arg0[%c0, %c0_0, %c0_1] : memref<2x96x1xi32, #tpu.memory_space<vmem>>, vector<1x96x1xi32>
    %2 = vector.shape_cast %1 : vector<1x96x1xi32> to vector<96x1xi32>
    %3 = vector.broadcast %2 : vector<96x1xi32> to vector<96x128xi32>
    %4 = arith.cmpi eq, %0, %3 : vector<96x128xi32>
    %c1 = arith.constant 1 : index
    %c0_2 = arith.constant 0 : index
    %c0_3 = arith.constant 0 : index
    %5 = vector.load %arg0[%c1, %c0_2, %c0_3] : memref<2x96x1xi32, #tpu.memory_space<vmem>>, vector<1x96x1xi32>
    %6 = vector.shape_cast %5 : vector<1x96x1xi32> to vector<96x1xi32>
    %7 = vector.broadcast %6 : vector<96x1xi32> to vector<96x128xi32>
    %8 = arith.cmpi eq, %0, %7 : vector<96x128xi32>
    %9 = arith.ori %4, %8 : vector<96x128xi1>
    %cst = arith.constant 1.000000e+00 : f32
    %cst_4 = arith.constant 0.000000e+00 : f32
    %10 = vector.broadcast %cst : f32 to vector<96x128xf32>
    %11 = vector.broadcast %cst_4 : f32 to vector<96x128xf32>
    %12 = arith.select %9, %10, %11 : vector<96x128xi1>, vector<96x128xf32>
    %c0_5 = arith.constant 0 : index
    %c0_6 = arith.constant 0 : index
    %13 = vector.load %arg3[%c0_5, %c0_6] : memref<128x384xf32, #tpu.memory_space<vmem>>, vector<128x384xf32>
    %cst_7 = arith.constant dense<0.000000e+00> : vector<96x384xf32>
    %14 = tpu.matmul %12, %13, %cst_7 {dimension_numbers = #tpu.dot_dimension_numbers<[1], [0], [0], [1], [0, 0, 1, 1], [], []>} : vector<96x128xf32>, vector<128x384xf32>, vector<96x384xf32> -> vector<96x384xf32>
    %c0_8 = arith.constant 0 : index
    %c0_9 = arith.constant 0 : index
    %15 = vector.load %arg1[%c0_8, %c0_9] : memref<8x128xi32, #tpu.memory_space<vmem>>, vector<8x128xi32>
    %c0_10 = arith.constant 0 : index
    %c0_11 = arith.constant 0 : index
    %16 = vector.load %arg4[%c0_10, %c0_11] : memref<128x384xf32, #tpu.memory_space<vmem>>, vector<128x384xf32>
    %c5 = arith.constant 5 : index
    %c0_12 = arith.constant 0 : index
    %c0_13 = arith.constant 0 : index
    %17 = vector.load %arg6[%c5, %c0_12, %c0_13] : memref<6x1x128xf32, #tpu.memory_space<vmem>>, vector<1x1x128xf32>
    %18 = vector.shape_cast %17 : vector<1x1x128xf32> to vector<1x128xf32>
    %19 = vector.shape_cast %18 : vector<1x128xf32> to vector<1x128xf32>
    %20 = vector.broadcast %19 : vector<1x128xf32> to vector<8x128xf32>
    %cst_14 = arith.constant 0.000000e+00 : f32
    %21 = vector.broadcast %cst_14 : f32 to vector<8x128xf32>
    %cst_15 = arith.constant 0.000000e+00 : f32
    %22 = vector.broadcast %cst_15 : f32 to vector<8x128xf32>
    %cst_16 = arith.constant 0xFF800000 : f32
    %23 = vector.broadcast %cst_16 : f32 to vector<8x128xf32>
    %cst_17 = arith.constant dense<0.000000e+00> : vector<8x384xf32>
    %24 = tpu.matmul %21, %16, %cst_17 {dimension_numbers = #tpu.dot_dimension_numbers<[1], [0], [0], [1], [0, 0, 1, 1], [], []>} : vector<8x128xf32>, vector<128x384xf32>, vector<8x384xf32> -> vector<8x384xf32>
    %25 = vector.extract_strided_slice %14 {offsets = [0, 0], sizes = [8, 384], strides = [1, 1]} : vector<96x384xf32> to vector<8x384xf32>
    %26 = vector.extract_strided_slice %25 {offsets = [0, 0], sizes = [8, 128], strides = [1, 1]} : vector<8x384xf32> to vector<8x128xf32>
    %27 = vector.extract_strided_slice %24 {offsets = [0, 0], sizes = [8, 128], strides = [1, 1]} : vector<8x384xf32> to vector<8x128xf32>
    %28 = arith.addf %26, %27 : vector<8x128xf32>
    %cst_18 = arith.constant 5.000000e-01 : f32
    %29 = vector.broadcast %cst_18 : f32 to vector<8x128xf32>
    %30 = arith.mulf %29, %28 : vector<8x128xf32>
    %31 = math.tanh %30 : vector<8x128xf32>
    %cst_19 = arith.constant 5.000000e-01 : f32
    %32 = vector.broadcast %cst_19 : f32 to vector<8x128xf32>
    %33 = arith.mulf %32, %31 : vector<8x128xf32>
    %cst_20 = arith.constant 5.000000e-01 : f32
    %34 = vector.broadcast %cst_20 : f32 to vector<8x128xf32>
    %35 = arith.addf %33, %34 : vector<8x128xf32>
    %36 = vector.extract_strided_slice %25 {offsets = [0, 128], sizes = [8, 128], strides = [1, 1]} : vector<8x384xf32> to vector<8x128xf32>
    %37 = vector.extract_strided_slice %24 {offsets = [0, 128], sizes = [8, 128], strides = [1, 1]} : vector<8x384xf32> to vector<8x128xf32>
    %38 = arith.addf %36, %37 : vector<8x128xf32>
    %cst_21 = arith.constant 5.000000e-01 : f32
    %39 = vector.broadcast %cst_21 : f32 to vector<8x128xf32>
    %40 = arith.mulf %39, %38 : vector<8x128xf32>
    %41 = math.tanh %40 : vector<8x128xf32>
    %cst_22 = arith.constant 5.000000e-01 : f32
    %42 = vector.broadcast %cst_22 : f32 to vector<8x128xf32>
    %43 = arith.mulf %42, %41 : vector<8x128xf32>
    %cst_23 = arith.constant 5.000000e-01 : f32
    %44 = vector.broadcast %cst_23 : f32 to vector<8x128xf32>
    %45 = arith.addf %43, %44 : vector<8x128xf32>
    %46 = vector.extract_strided_slice %25 {offsets = [0, 256], sizes = [8, 128], strides = [1, 1]} : vector<8x384xf32> to vector<8x128xf32>
    %47 = vector.extract_strided_slice %24 {offsets = [0, 256], sizes = [8, 128], strides = [1, 1]} : vector<8x384xf32> to vector<8x128xf32>
    %48 = arith.addf %47, %20 : vector<8x128xf32>
    %49 = arith.mulf %35, %48 : vector<8x128xf32>
    %50 = arith.addf %46, %49 : vector<8x128xf32>
    %51 = math.tanh %50 : vector<8x128xf32>
    %52 = arith.subf %21, %51 : vector<8x128xf32>
    %53 = arith.mulf %45, %52 : vector<8x128xf32>
    %54 = arith.addf %51, %53 : vector<8x128xf32>
    %c0_i32 = arith.constant 0 : i32
    %55 = vector.broadcast %c0_i32 : i32 to vector<8x128xi32>
    %56 = arith.cmpi sgt, %15, %55 : vector<8x128xi32>
    %57 = arith.select %56, %54, %21 : vector<8x128xi1>, vector<8x128xf32>
    %cst_24 = arith.constant 0.000000e+00 : f32
    %58 = vector.broadcast %cst_24 : f32 to vector<8x128xf32>
    %59 = arith.select %56, %54, %58 : vector<8x128xi1>, vector<8x128xf32>
    %60 = arith.addf %22, %59 : vector<8x128xf32>
    %61 = arith.maximumf %23, %54 : vector<8x128xf32>
    %62 = arith.select %56, %61, %23 : vector<8x128xi1>, vector<8x128xf32>
    %cst_25 = arith.constant dense<0.000000e+00> : vector<8x384xf32>
    %63 = tpu.matmul %57, %16, %cst_25 {dimension_numbers = #tpu.dot_dimension_numbers<[1], [0], [0], [1], [0, 0, 1, 1], [], []>} : vector<8x128xf32>, vector<128x384xf32>, vector<8x384xf32> -> vector<8x384xf32>
    %64 = vector.extract_strided_slice %14 {offsets = [8, 0], sizes = [8, 384], strides = [1, 1]} : vector<96x384xf32> to vector<8x384xf32>
    %65 = vector.extract_strided_slice %64 {offsets = [0, 0], sizes = [8, 128], strides = [1, 1]} : vector<8x384xf32> to vector<8x128xf32>
    %66 = vector.extract_strided_slice %63 {offsets = [0, 0], sizes = [8, 128], strides = [1, 1]} : vector<8x384xf32> to vector<8x128xf32>
    %67 = arith.addf %65, %66 : vector<8x128xf32>
    %cst_26 = arith.constant 5.000000e-01 : f32
    %68 = vector.broadcast %cst_26 : f32 to vector<8x128xf32>
    %69 = arith.mulf %68, %67 : vector<8x128xf32>
    %70 = math.tanh %69 : vector<8x128xf32>
    %cst_27 = arith.constant 5.000000e-01 : f32
    %71 = vector.broadcast %cst_27 : f32 to vector<8x128xf32>
    %72 = arith.mulf %71, %70 : vector<8x128xf32>
    %cst_28 = arith.constant 5.000000e-01 : f32
    %73 = vector.broadcast %cst_28 : f32 to vector<8x128xf32>
    %74 = arith.addf %72, %73 : vector<8x128xf32>
    %75 = vector.extract_strided_slice %64 {offsets = [0, 128], sizes = [8, 128], strides = [1, 1]} : vector<8x384xf32> to vector<8x128xf32>
    %76 = vector.extract_strided_slice %63 {offsets = [0, 128], sizes = [8, 128], strides = [1, 1]} : vector<8x384xf32> to vector<8x128xf32>
    %77 = arith.addf %75, %76 : vector<8x128xf32>
    %cst_29 = arith.constant 5.000000e-01 : f32
    %78 = vector.broadcast %cst_29 : f32 to vector<8x128xf32>
    %79 = arith.mulf %78, %77 : vector<8x128xf32>
    %80 = math.tanh %79 : vector<8x128xf32>
    %cst_30 = arith.constant 5.000000e-01 : f32
    %81 = vector.broadcast %cst_30 : f32 to vector<8x128xf32>
    %82 = arith.mulf %81, %80 : vector<8x128xf32>
    %cst_31 = arith.constant 5.000000e-01 : f32
    %83 = vector.broadcast %cst_31 : f32 to vector<8x128xf32>
    %84 = arith.addf %82, %83 : vector<8x128xf32>
    %85 = vector.extract_strided_slice %64 {offsets = [0, 256], sizes = [8, 128], strides = [1, 1]} : vector<8x384xf32> to vector<8x128xf32>
    %86 = vector.extract_strided_slice %63 {offsets = [0, 256], sizes = [8, 128], strides = [1, 1]} : vector<8x384xf32> to vector<8x128xf32>
    %87 = arith.addf %86, %20 : vector<8x128xf32>
    %88 = arith.mulf %74, %87 : vector<8x128xf32>
    %89 = arith.addf %85, %88 : vector<8x128xf32>
    %90 = math.tanh %89 : vector<8x128xf32>
    %91 = arith.subf %57, %90 : vector<8x128xf32>
    %92 = arith.mulf %84, %91 : vector<8x128xf32>
    %93 = arith.addf %90, %92 : vector<8x128xf32>
    %c1_i32 = arith.constant 1 : i32
    %94 = vector.broadcast %c1_i32 : i32 to vector<8x128xi32>
    %95 = arith.cmpi sgt, %15, %94 : vector<8x128xi32>
    %96 = arith.select %95, %93, %57 : vector<8x128xi1>, vector<8x128xf32>
    %cst_32 = arith.constant 0.000000e+00 : f32
    %97 = vector.broadcast %cst_32 : f32 to vector<8x128xf32>
    %98 = arith.select %95, %93, %97 : vector<8x128xi1>, vector<8x128xf32>
    %99 = arith.addf %60, %98 : vector<8x128xf32>
    %100 = arith.maximumf %62, %93 : vector<8x128xf32>
    %101 = arith.select %95, %100, %62 : vector<8x128xi1>, vector<8x128xf32>
    %cst_33 = arith.constant dense<0.000000e+00> : vector<8x384xf32>
    %102 = tpu.matmul %96, %16, %cst_33 {dimension_numbers = #tpu.dot_dimension_numbers<[1], [0], [0], [1], [0, 0, 1, 1], [], []>} : vector<8x128xf32>, vector<128x384xf32>, vector<8x384xf32> -> vector<8x384xf32>
    %103 = vector.extract_strided_slice %14 {offsets = [16, 0], sizes = [8, 384], strides = [1, 1]} : vector<96x384xf32> to vector<8x384xf32>
    %104 = vector.extract_strided_slice %103 {offsets = [0, 0], sizes = [8, 128], strides = [1, 1]} : vector<8x384xf32> to vector<8x128xf32>
    %105 = vector.extract_strided_slice %102 {offsets = [0, 0], sizes = [8, 128], strides = [1, 1]} : vector<8x384xf32> to vector<8x128xf32>
    %106 = arith.addf %104, %105 : vector<8x128xf32>
    %cst_34 = arith.constant 5.000000e-01 : f32
    %107 = vector.broadcast %cst_34 : f32 to vector<8x128xf32>
    %108 = arith.mulf %107, %106 : vector<8x128xf32>
    %109 = math.tanh %108 : vector<8x128xf32>
    %cst_35 = arith.constant 5.000000e-01 : f32
    %110 = vector.broadcast %cst_35 : f32 to vector<8x128xf32>
    %111 = arith.mulf %110, %109 : vector<8x128xf32>
    %cst_36 = arith.constant 5.000000e-01 : f32
    %112 = vector.broadcast %cst_36 : f32 to vector<8x128xf32>
    %113 = arith.addf %111, %112 : vector<8x128xf32>
    %114 = vector.extract_strided_slice %103 {offsets = [0, 128], sizes = [8, 128], strides = [1, 1]} : vector<8x384xf32> to vector<8x128xf32>
    %115 = vector.extract_strided_slice %102 {offsets = [0, 128], sizes = [8, 128], strides = [1, 1]} : vector<8x384xf32> to vector<8x128xf32>
    %116 = arith.addf %114, %115 : vector<8x128xf32>
    %cst_37 = arith.constant 5.000000e-01 : f32
    %117 = vector.broadcast %cst_37 : f32 to vector<8x128xf32>
    %118 = arith.mulf %117, %116 : vector<8x128xf32>
    %119 = math.tanh %118 : vector<8x128xf32>
    %cst_38 = arith.constant 5.000000e-01 : f32
    %120 = vector.broadcast %cst_38 : f32 to vector<8x128xf32>
    %121 = arith.mulf %120, %119 : vector<8x128xf32>
    %cst_39 = arith.constant 5.000000e-01 : f32
    %122 = vector.broadcast %cst_39 : f32 to vector<8x128xf32>
    %123 = arith.addf %121, %122 : vector<8x128xf32>
    %124 = vector.extract_strided_slice %103 {offsets = [0, 256], sizes = [8, 128], strides = [1, 1]} : vector<8x384xf32> to vector<8x128xf32>
    %125 = vector.extract_strided_slice %102 {offsets = [0, 256], sizes = [8, 128], strides = [1, 1]} : vector<8x384xf32> to vector<8x128xf32>
    %126 = arith.addf %125, %20 : vector<8x128xf32>
    %127 = arith.mulf %113, %126 : vector<8x128xf32>
    %128 = arith.addf %124, %127 : vector<8x128xf32>
    %129 = math.tanh %128 : vector<8x128xf32>
    %130 = arith.subf %96, %129 : vector<8x128xf32>
    %131 = arith.mulf %123, %130 : vector<8x128xf32>
    %132 = arith.addf %129, %131 : vector<8x128xf32>
    %c2_i32 = arith.constant 2 : i32
    %133 = vector.broadcast %c2_i32 : i32 to vector<8x128xi32>
    %134 = arith.cmpi sgt, %15, %133 : vector<8x128xi32>
    %135 = arith.select %134, %132, %96 : vector<8x128xi1>, vector<8x128xf32>
    %cst_40 = arith.constant 0.000000e+00 : f32
    %136 = vector.broadcast %cst_40 : f32 to vector<8x128xf32>
    %137 = arith.select %134, %132, %136 : vector<8x128xi1>, vector<8x128xf32>
    %138 = arith.addf %99, %137 : vector<8x128xf32>
    %139 = arith.maximumf %101, %132 : vector<8x128xf32>
    %140 = arith.select %134, %139, %101 : vector<8x128xi1>, vector<8x128xf32>
    %cst_41 = arith.constant dense<0.000000e+00> : vector<8x384xf32>
    %141 = tpu.matmul %135, %16, %cst_41 {dimension_numbers = #tpu.dot_dimension_numbers<[1], [0], [0], [1], [0, 0, 1, 1], [], []>} : vector<8x128xf32>, vector<128x384xf32>, vector<8x384xf32> -> vector<8x384xf32>
    %142 = vector.extract_strided_slice %14 {offsets = [24, 0], sizes = [8, 384], strides = [1, 1]} : vector<96x384xf32> to vector<8x384xf32>
    %143 = vector.extract_strided_slice %142 {offsets = [0, 0], sizes = [8, 128], strides = [1, 1]} : vector<8x384xf32> to vector<8x128xf32>
    %144 = vector.extract_strided_slice %141 {offsets = [0, 0], sizes = [8, 128], strides = [1, 1]} : vector<8x384xf32> to vector<8x128xf32>
    %145 = arith.addf %143, %144 : vector<8x128xf32>
    %cst_42 = arith.constant 5.000000e-01 : f32
    %146 = vector.broadcast %cst_42 : f32 to vector<8x128xf32>
    %147 = arith.mulf %146, %145 : vector<8x128xf32>
    %148 = math.tanh %147 : vector<8x128xf32>
    %cst_43 = arith.constant 5.000000e-01 : f32
    %149 = vector.broadcast %cst_43 : f32 to vector<8x128xf32>
    %150 = arith.mulf %149, %148 : vector<8x128xf32>
    %cst_44 = arith.constant 5.000000e-01 : f32
    %151 = vector.broadcast %cst_44 : f32 to vector<8x128xf32>
    %152 = arith.addf %150, %151 : vector<8x128xf32>
    %153 = vector.extract_strided_slice %142 {offsets = [0, 128], sizes = [8, 128], strides = [1, 1]} : vector<8x384xf32> to vector<8x128xf32>
    %154 = vector.extract_strided_slice %141 {offsets = [0, 128], sizes = [8, 128], strides = [1, 1]} : vector<8x384xf32> to vector<8x128xf32>
    %155 = arith.addf %153, %154 : vector<8x128xf32>
    %cst_45 = arith.constant 5.000000e-01 : f32
    %156 = vector.broadcast %cst_45 : f32 to vector<8x128xf32>
    %157 = arith.mulf %156, %155 : vector<8x128xf32>
    %158 = math.tanh %157 : vector<8x128xf32>
    %cst_46 = arith.constant 5.000000e-01 : f32
    %159 = vector.broadcast %cst_46 : f32 to vector<8x128xf32>
    %160 = arith.mulf %159, %158 : vector<8x128xf32>
    %cst_47 = arith.constant 5.000000e-01 : f32
    %161 = vector.broadcast %cst_47 : f32 to vector<8x128xf32>
    %162 = arith.addf %160, %161 : vector<8x128xf32>
    %163 = vector.extract_strided_slice %142 {offsets = [0, 256], sizes = [8, 128], strides = [1, 1]} : vector<8x384xf32> to vector<8x128xf32>
    %164 = vector.extract_strided_slice %141 {offsets = [0, 256], sizes = [8, 128], strides = [1, 1]} : vector<8x384xf32> to vector<8x128xf32>
    %165 = arith.addf %164, %20 : vector<8x128xf32>
    %166 = arith.mulf %152, %165 : vector<8x128xf32>
    %167 = arith.addf %163, %166 : vector<8x128xf32>
    %168 = math.tanh %167 : vector<8x128xf32>
    %169 = arith.subf %135, %168 : vector<8x128xf32>
    %170 = arith.mulf %162, %169 : vector<8x128xf32>
    %171 = arith.addf %168, %170 : vector<8x128xf32>
    %c3_i32 = arith.constant 3 : i32
    %172 = vector.broadcast %c3_i32 : i32 to vector<8x128xi32>
    %173 = arith.cmpi sgt, %15, %172 : vector<8x128xi32>
    %174 = arith.select %173, %171, %135 : vector<8x128xi1>, vector<8x128xf32>
    %cst_48 = arith.constant 0.000000e+00 : f32
    %175 = vector.broadcast %cst_48 : f32 to vector<8x128xf32>
    %176 = arith.select %173, %171, %175 : vector<8x128xi1>, vector<8x128xf32>
    %177 = arith.addf %138, %176 : vector<8x128xf32>
    %178 = arith.maximumf %140, %171 : vector<8x128xf32>
    %179 = arith.select %173, %178, %140 : vector<8x128xi1>, vector<8x128xf32>
    %cst_49 = arith.constant dense<0.000000e+00> : vector<8x384xf32>
    %180 = tpu.matmul %174, %16, %cst_49 {dimension_numbers = #tpu.dot_dimension_numbers<[1], [0], [0], [1], [0, 0, 1, 1], [], []>} : vector<8x128xf32>, vector<128x384xf32>, vector<8x384xf32> -> vector<8x384xf32>
    %181 = vector.extract_strided_slice %14 {offsets = [32, 0], sizes = [8, 384], strides = [1, 1]} : vector<96x384xf32> to vector<8x384xf32>
    %182 = vector.extract_strided_slice %181 {offsets = [0, 0], sizes = [8, 128], strides = [1, 1]} : vector<8x384xf32> to vector<8x128xf32>
    %183 = vector.extract_strided_slice %180 {offsets = [0, 0], sizes = [8, 128], strides = [1, 1]} : vector<8x384xf32> to vector<8x128xf32>
    %184 = arith.addf %182, %183 : vector<8x128xf32>
    %cst_50 = arith.constant 5.000000e-01 : f32
    %185 = vector.broadcast %cst_50 : f32 to vector<8x128xf32>
    %186 = arith.mulf %185, %184 : vector<8x128xf32>
    %187 = math.tanh %186 : vector<8x128xf32>
    %cst_51 = arith.constant 5.000000e-01 : f32
    %188 = vector.broadcast %cst_51 : f32 to vector<8x128xf32>
    %189 = arith.mulf %188, %187 : vector<8x128xf32>
    %cst_52 = arith.constant 5.000000e-01 : f32
    %190 = vector.broadcast %cst_52 : f32 to vector<8x128xf32>
    %191 = arith.addf %189, %190 : vector<8x128xf32>
    %192 = vector.extract_strided_slice %181 {offsets = [0, 128], sizes = [8, 128], strides = [1, 1]} : vector<8x384xf32> to vector<8x128xf32>
    %193 = vector.extract_strided_slice %180 {offsets = [0, 128], sizes = [8, 128], strides = [1, 1]} : vector<8x384xf32> to vector<8x128xf32>
    %194 = arith.addf %192, %193 : vector<8x128xf32>
    %cst_53 = arith.constant 5.000000e-01 : f32
    %195 = vector.broadcast %cst_53 : f32 to vector<8x128xf32>
    %196 = arith.mulf %195, %194 : vector<8x128xf32>
    %197 = math.tanh %196 : vector<8x128xf32>
    %cst_54 = arith.constant 5.000000e-01 : f32
    %198 = vector.broadcast %cst_54 : f32 to vector<8x128xf32>
    %199 = arith.mulf %198, %197 : vector<8x128xf32>
    %cst_55 = arith.constant 5.000000e-01 : f32
    %200 = vector.broadcast %cst_55 : f32 to vector<8x128xf32>
    %201 = arith.addf %199, %200 : vector<8x128xf32>
    %202 = vector.extract_strided_slice %181 {offsets = [0, 256], sizes = [8, 128], strides = [1, 1]} : vector<8x384xf32> to vector<8x128xf32>
    %203 = vector.extract_strided_slice %180 {offsets = [0, 256], sizes = [8, 128], strides = [1, 1]} : vector<8x384xf32> to vector<8x128xf32>
    %204 = arith.addf %203, %20 : vector<8x128xf32>
    %205 = arith.mulf %191, %204 : vector<8x128xf32>
    %206 = arith.addf %202, %205 : vector<8x128xf32>
    %207 = math.tanh %206 : vector<8x128xf32>
    %208 = arith.subf %174, %207 : vector<8x128xf32>
    %209 = arith.mulf %201, %208 : vector<8x128xf32>
    %210 = arith.addf %207, %209 : vector<8x128xf32>
    %c4_i32 = arith.constant 4 : i32
    %211 = vector.broadcast %c4_i32 : i32 to vector<8x128xi32>
    %212 = arith.cmpi sgt, %15, %211 : vector<8x128xi32>
    %213 = arith.select %212, %210, %174 : vector<8x128xi1>, vector<8x128xf32>
    %cst_56 = arith.constant 0.000000e+00 : f32
    %214 = vector.broadcast %cst_56 : f32 to vector<8x128xf32>
    %215 = arith.select %212, %210, %214 : vector<8x128xi1>, vector<8x128xf32>
    %216 = arith.addf %177, %215 : vector<8x128xf32>
    %217 = arith.maximumf %179, %210 : vector<8x128xf32>
    %218 = arith.select %212, %217, %179 : vector<8x128xi1>, vector<8x128xf32>
    %cst_57 = arith.constant dense<0.000000e+00> : vector<8x384xf32>
    %219 = tpu.matmul %213, %16, %cst_57 {dimension_numbers = #tpu.dot_dimension_numbers<[1], [0], [0], [1], [0, 0, 1, 1], [], []>} : vector<8x128xf32>, vector<128x384xf32>, vector<8x384xf32> -> vector<8x384xf32>
    %220 = vector.extract_strided_slice %14 {offsets = [40, 0], sizes = [8, 384], strides = [1, 1]} : vector<96x384xf32> to vector<8x384xf32>
    %221 = vector.extract_strided_slice %220 {offsets = [0, 0], sizes = [8, 128], strides = [1, 1]} : vector<8x384xf32> to vector<8x128xf32>
    %222 = vector.extract_strided_slice %219 {offsets = [0, 0], sizes = [8, 128], strides = [1, 1]} : vector<8x384xf32> to vector<8x128xf32>
    %223 = arith.addf %221, %222 : vector<8x128xf32>
    %cst_58 = arith.constant 5.000000e-01 : f32
    %224 = vector.broadcast %cst_58 : f32 to vector<8x128xf32>
    %225 = arith.mulf %224, %223 : vector<8x128xf32>
    %226 = math.tanh %225 : vector<8x128xf32>
    %cst_59 = arith.constant 5.000000e-01 : f32
    %227 = vector.broadcast %cst_59 : f32 to vector<8x128xf32>
    %228 = arith.mulf %227, %226 : vector<8x128xf32>
    %cst_60 = arith.constant 5.000000e-01 : f32
    %229 = vector.broadcast %cst_60 : f32 to vector<8x128xf32>
    %230 = arith.addf %228, %229 : vector<8x128xf32>
    %231 = vector.extract_strided_slice %220 {offsets = [0, 128], sizes = [8, 128], strides = [1, 1]} : vector<8x384xf32> to vector<8x128xf32>
    %232 = vector.extract_strided_slice %219 {offsets = [0, 128], sizes = [8, 128], strides = [1, 1]} : vector<8x384xf32> to vector<8x128xf32>
    %233 = arith.addf %231, %232 : vector<8x128xf32>
    %cst_61 = arith.constant 5.000000e-01 : f32
    %234 = vector.broadcast %cst_61 : f32 to vector<8x128xf32>
    %235 = arith.mulf %234, %233 : vector<8x128xf32>
    %236 = math.tanh %235 : vector<8x128xf32>
    %cst_62 = arith.constant 5.000000e-01 : f32
    %237 = vector.broadcast %cst_62 : f32 to vector<8x128xf32>
    %238 = arith.mulf %237, %236 : vector<8x128xf32>
    %cst_63 = arith.constant 5.000000e-01 : f32
    %239 = vector.broadcast %cst_63 : f32 to vector<8x128xf32>
    %240 = arith.addf %238, %239 : vector<8x128xf32>
    %241 = vector.extract_strided_slice %220 {offsets = [0, 256], sizes = [8, 128], strides = [1, 1]} : vector<8x384xf32> to vector<8x128xf32>
    %242 = vector.extract_strided_slice %219 {offsets = [0, 256], sizes = [8, 128], strides = [1, 1]} : vector<8x384xf32> to vector<8x128xf32>
    %243 = arith.addf %242, %20 : vector<8x128xf32>
    %244 = arith.mulf %230, %243 : vector<8x128xf32>
    %245 = arith.addf %241, %244 : vector<8x128xf32>
    %246 = math.tanh %245 : vector<8x128xf32>
    %247 = arith.subf %213, %246 : vector<8x128xf32>
    %248 = arith.mulf %240, %247 : vector<8x128xf32>
    %249 = arith.addf %246, %248 : vector<8x128xf32>
    %c5_i32 = arith.constant 5 : i32
    %250 = vector.broadcast %c5_i32 : i32 to vector<8x128xi32>
    %251 = arith.cmpi sgt, %15, %250 : vector<8x128xi32>
    %252 = arith.select %251, %249, %213 : vector<8x128xi1>, vector<8x128xf32>
    %cst_64 = arith.constant 0.000000e+00 : f32
    %253 = vector.broadcast %cst_64 : f32 to vector<8x128xf32>
    %254 = arith.select %251, %249, %253 : vector<8x128xi1>, vector<8x128xf32>
    %255 = arith.addf %216, %254 : vector<8x128xf32>
    %256 = arith.maximumf %218, %249 : vector<8x128xf32>
    %257 = arith.select %251, %256, %218 : vector<8x128xi1>, vector<8x128xf32>
    %cst_65 = arith.constant dense<0.000000e+00> : vector<8x384xf32>
    %258 = tpu.matmul %252, %16, %cst_65 {dimension_numbers = #tpu.dot_dimension_numbers<[1], [0], [0], [1], [0, 0, 1, 1], [], []>} : vector<8x128xf32>, vector<128x384xf32>, vector<8x384xf32> -> vector<8x384xf32>
    %259 = vector.extract_strided_slice %14 {offsets = [48, 0], sizes = [8, 384], strides = [1, 1]} : vector<96x384xf32> to vector<8x384xf32>
    %260 = vector.extract_strided_slice %259 {offsets = [0, 0], sizes = [8, 128], strides = [1, 1]} : vector<8x384xf32> to vector<8x128xf32>
    %261 = vector.extract_strided_slice %258 {offsets = [0, 0], sizes = [8, 128], strides = [1, 1]} : vector<8x384xf32> to vector<8x128xf32>
    %262 = arith.addf %260, %261 : vector<8x128xf32>
    %cst_66 = arith.constant 5.000000e-01 : f32
    %263 = vector.broadcast %cst_66 : f32 to vector<8x128xf32>
    %264 = arith.mulf %263, %262 : vector<8x128xf32>
    %265 = math.tanh %264 : vector<8x128xf32>
    %cst_67 = arith.constant 5.000000e-01 : f32
    %266 = vector.broadcast %cst_67 : f32 to vector<8x128xf32>
    %267 = arith.mulf %266, %265 : vector<8x128xf32>
    %cst_68 = arith.constant 5.000000e-01 : f32
    %268 = vector.broadcast %cst_68 : f32 to vector<8x128xf32>
    %269 = arith.addf %267, %268 : vector<8x128xf32>
    %270 = vector.extract_strided_slice %259 {offsets = [0, 128], sizes = [8, 128], strides = [1, 1]} : vector<8x384xf32> to vector<8x128xf32>
    %271 = vector.extract_strided_slice %258 {offsets = [0, 128], sizes = [8, 128], strides = [1, 1]} : vector<8x384xf32> to vector<8x128xf32>
    %272 = arith.addf %270, %271 : vector<8x128xf32>
    %cst_69 = arith.constant 5.000000e-01 : f32
    %273 = vector.broadcast %cst_69 : f32 to vector<8x128xf32>
    %274 = arith.mulf %273, %272 : vector<8x128xf32>
    %275 = math.tanh %274 : vector<8x128xf32>
    %cst_70 = arith.constant 5.000000e-01 : f32
    %276 = vector.broadcast %cst_70 : f32 to vector<8x128xf32>
    %277 = arith.mulf %276, %275 : vector<8x128xf32>
    %cst_71 = arith.constant 5.000000e-01 : f32
    %278 = vector.broadcast %cst_71 : f32 to vector<8x128xf32>
    %279 = arith.addf %277, %278 : vector<8x128xf32>
    %280 = vector.extract_strided_slice %259 {offsets = [0, 256], sizes = [8, 128], strides = [1, 1]} : vector<8x384xf32> to vector<8x128xf32>
    %281 = vector.extract_strided_slice %258 {offsets = [0, 256], sizes = [8, 128], strides = [1, 1]} : vector<8x384xf32> to vector<8x128xf32>
    %282 = arith.addf %281, %20 : vector<8x128xf32>
    %283 = arith.mulf %269, %282 : vector<8x128xf32>
    %284 = arith.addf %280, %283 : vector<8x128xf32>
    %285 = math.tanh %284 : vector<8x128xf32>
    %286 = arith.subf %252, %285 : vector<8x128xf32>
    %287 = arith.mulf %279, %286 : vector<8x128xf32>
    %288 = arith.addf %285, %287 : vector<8x128xf32>
    %c6_i32 = arith.constant 6 : i32
    %289 = vector.broadcast %c6_i32 : i32 to vector<8x128xi32>
    %290 = arith.cmpi sgt, %15, %289 : vector<8x128xi32>
    %291 = arith.select %290, %288, %252 : vector<8x128xi1>, vector<8x128xf32>
    %cst_72 = arith.constant 0.000000e+00 : f32
    %292 = vector.broadcast %cst_72 : f32 to vector<8x128xf32>
    %293 = arith.select %290, %288, %292 : vector<8x128xi1>, vector<8x128xf32>
    %294 = arith.addf %255, %293 : vector<8x128xf32>
    %295 = arith.maximumf %257, %288 : vector<8x128xf32>
    %296 = arith.select %290, %295, %257 : vector<8x128xi1>, vector<8x128xf32>
    %cst_73 = arith.constant dense<0.000000e+00> : vector<8x384xf32>
    %297 = tpu.matmul %291, %16, %cst_73 {dimension_numbers = #tpu.dot_dimension_numbers<[1], [0], [0], [1], [0, 0, 1, 1], [], []>} : vector<8x128xf32>, vector<128x384xf32>, vector<8x384xf32> -> vector<8x384xf32>
    %298 = vector.extract_strided_slice %14 {offsets = [56, 0], sizes = [8, 384], strides = [1, 1]} : vector<96x384xf32> to vector<8x384xf32>
    %299 = vector.extract_strided_slice %298 {offsets = [0, 0], sizes = [8, 128], strides = [1, 1]} : vector<8x384xf32> to vector<8x128xf32>
    %300 = vector.extract_strided_slice %297 {offsets = [0, 0], sizes = [8, 128], strides = [1, 1]} : vector<8x384xf32> to vector<8x128xf32>
    %301 = arith.addf %299, %300 : vector<8x128xf32>
    %cst_74 = arith.constant 5.000000e-01 : f32
    %302 = vector.broadcast %cst_74 : f32 to vector<8x128xf32>
    %303 = arith.mulf %302, %301 : vector<8x128xf32>
    %304 = math.tanh %303 : vector<8x128xf32>
    %cst_75 = arith.constant 5.000000e-01 : f32
    %305 = vector.broadcast %cst_75 : f32 to vector<8x128xf32>
    %306 = arith.mulf %305, %304 : vector<8x128xf32>
    %cst_76 = arith.constant 5.000000e-01 : f32
    %307 = vector.broadcast %cst_76 : f32 to vector<8x128xf32>
    %308 = arith.addf %306, %307 : vector<8x128xf32>
    %309 = vector.extract_strided_slice %298 {offsets = [0, 128], sizes = [8, 128], strides = [1, 1]} : vector<8x384xf32> to vector<8x128xf32>
    %310 = vector.extract_strided_slice %297 {offsets = [0, 128], sizes = [8, 128], strides = [1, 1]} : vector<8x384xf32> to vector<8x128xf32>
    %311 = arith.addf %309, %310 : vector<8x128xf32>
    %cst_77 = arith.constant 5.000000e-01 : f32
    %312 = vector.broadcast %cst_77 : f32 to vector<8x128xf32>
    %313 = arith.mulf %312, %311 : vector<8x128xf32>
    %314 = math.tanh %313 : vector<8x128xf32>
    %cst_78 = arith.constant 5.000000e-01 : f32
    %315 = vector.broadcast %cst_78 : f32 to vector<8x128xf32>
    %316 = arith.mulf %315, %314 : vector<8x128xf32>
    %cst_79 = arith.constant 5.000000e-01 : f32
    %317 = vector.broadcast %cst_79 : f32 to vector<8x128xf32>
    %318 = arith.addf %316, %317 : vector<8x128xf32>
    %319 = vector.extract_strided_slice %298 {offsets = [0, 256], sizes = [8, 128], strides = [1, 1]} : vector<8x384xf32> to vector<8x128xf32>
    %320 = vector.extract_strided_slice %297 {offsets = [0, 256], sizes = [8, 128], strides = [1, 1]} : vector<8x384xf32> to vector<8x128xf32>
    %321 = arith.addf %320, %20 : vector<8x128xf32>
    %322 = arith.mulf %308, %321 : vector<8x128xf32>
    %323 = arith.addf %319, %322 : vector<8x128xf32>
    %324 = math.tanh %323 : vector<8x128xf32>
    %325 = arith.subf %291, %324 : vector<8x128xf32>
    %326 = arith.mulf %318, %325 : vector<8x128xf32>
    %327 = arith.addf %324, %326 : vector<8x128xf32>
    %c7_i32 = arith.constant 7 : i32
    %328 = vector.broadcast %c7_i32 : i32 to vector<8x128xi32>
    %329 = arith.cmpi sgt, %15, %328 : vector<8x128xi32>
    %330 = arith.select %329, %327, %291 : vector<8x128xi1>, vector<8x128xf32>
    %cst_80 = arith.constant 0.000000e+00 : f32
    %331 = vector.broadcast %cst_80 : f32 to vector<8x128xf32>
    %332 = arith.select %329, %327, %331 : vector<8x128xi1>, vector<8x128xf32>
    %333 = arith.addf %294, %332 : vector<8x128xf32>
    %334 = arith.maximumf %296, %327 : vector<8x128xf32>
    %335 = arith.select %329, %334, %296 : vector<8x128xi1>, vector<8x128xf32>
    %cst_81 = arith.constant dense<0.000000e+00> : vector<8x384xf32>
    %336 = tpu.matmul %330, %16, %cst_81 {dimension_numbers = #tpu.dot_dimension_numbers<[1], [0], [0], [1], [0, 0, 1, 1], [], []>} : vector<8x128xf32>, vector<128x384xf32>, vector<8x384xf32> -> vector<8x384xf32>
    %337 = vector.extract_strided_slice %14 {offsets = [64, 0], sizes = [8, 384], strides = [1, 1]} : vector<96x384xf32> to vector<8x384xf32>
    %338 = vector.extract_strided_slice %337 {offsets = [0, 0], sizes = [8, 128], strides = [1, 1]} : vector<8x384xf32> to vector<8x128xf32>
    %339 = vector.extract_strided_slice %336 {offsets = [0, 0], sizes = [8, 128], strides = [1, 1]} : vector<8x384xf32> to vector<8x128xf32>
    %340 = arith.addf %338, %339 : vector<8x128xf32>
    %cst_82 = arith.constant 5.000000e-01 : f32
    %341 = vector.broadcast %cst_82 : f32 to vector<8x128xf32>
    %342 = arith.mulf %341, %340 : vector<8x128xf32>
    %343 = math.tanh %342 : vector<8x128xf32>
    %cst_83 = arith.constant 5.000000e-01 : f32
    %344 = vector.broadcast %cst_83 : f32 to vector<8x128xf32>
    %345 = arith.mulf %344, %343 : vector<8x128xf32>
    %cst_84 = arith.constant 5.000000e-01 : f32
    %346 = vector.broadcast %cst_84 : f32 to vector<8x128xf32>
    %347 = arith.addf %345, %346 : vector<8x128xf32>
    %348 = vector.extract_strided_slice %337 {offsets = [0, 128], sizes = [8, 128], strides = [1, 1]} : vector<8x384xf32> to vector<8x128xf32>
    %349 = vector.extract_strided_slice %336 {offsets = [0, 128], sizes = [8, 128], strides = [1, 1]} : vector<8x384xf32> to vector<8x128xf32>
    %350 = arith.addf %348, %349 : vector<8x128xf32>
    %cst_85 = arith.constant 5.000000e-01 : f32
    %351 = vector.broadcast %cst_85 : f32 to vector<8x128xf32>
    %352 = arith.mulf %351, %350 : vector<8x128xf32>
    %353 = math.tanh %352 : vector<8x128xf32>
    %cst_86 = arith.constant 5.000000e-01 : f32
    %354 = vector.broadcast %cst_86 : f32 to vector<8x128xf32>
    %355 = arith.mulf %354, %353 : vector<8x128xf32>
    %cst_87 = arith.constant 5.000000e-01 : f32
    %356 = vector.broadcast %cst_87 : f32 to vector<8x128xf32>
    %357 = arith.addf %355, %356 : vector<8x128xf32>
    %358 = vector.extract_strided_slice %337 {offsets = [0, 256], sizes = [8, 128], strides = [1, 1]} : vector<8x384xf32> to vector<8x128xf32>
    %359 = vector.extract_strided_slice %336 {offsets = [0, 256], sizes = [8, 128], strides = [1, 1]} : vector<8x384xf32> to vector<8x128xf32>
    %360 = arith.addf %359, %20 : vector<8x128xf32>
    %361 = arith.mulf %347, %360 : vector<8x128xf32>
    %362 = arith.addf %358, %361 : vector<8x128xf32>
    %363 = math.tanh %362 : vector<8x128xf32>
    %364 = arith.subf %330, %363 : vector<8x128xf32>
    %365 = arith.mulf %357, %364 : vector<8x128xf32>
    %366 = arith.addf %363, %365 : vector<8x128xf32>
    %c8_i32 = arith.constant 8 : i32
    %367 = vector.broadcast %c8_i32 : i32 to vector<8x128xi32>
    %368 = arith.cmpi sgt, %15, %367 : vector<8x128xi32>
    %369 = arith.select %368, %366, %330 : vector<8x128xi1>, vector<8x128xf32>
    %cst_88 = arith.constant 0.000000e+00 : f32
    %370 = vector.broadcast %cst_88 : f32 to vector<8x128xf32>
    %371 = arith.select %368, %366, %370 : vector<8x128xi1>, vector<8x128xf32>
    %372 = arith.addf %333, %371 : vector<8x128xf32>
    %373 = arith.maximumf %335, %366 : vector<8x128xf32>
    %374 = arith.select %368, %373, %335 : vector<8x128xi1>, vector<8x128xf32>
    %cst_89 = arith.constant dense<0.000000e+00> : vector<8x384xf32>
    %375 = tpu.matmul %369, %16, %cst_89 {dimension_numbers = #tpu.dot_dimension_numbers<[1], [0], [0], [1], [0, 0, 1, 1], [], []>} : vector<8x128xf32>, vector<128x384xf32>, vector<8x384xf32> -> vector<8x384xf32>
    %376 = vector.extract_strided_slice %14 {offsets = [72, 0], sizes = [8, 384], strides = [1, 1]} : vector<96x384xf32> to vector<8x384xf32>
    %377 = vector.extract_strided_slice %376 {offsets = [0, 0], sizes = [8, 128], strides = [1, 1]} : vector<8x384xf32> to vector<8x128xf32>
    %378 = vector.extract_strided_slice %375 {offsets = [0, 0], sizes = [8, 128], strides = [1, 1]} : vector<8x384xf32> to vector<8x128xf32>
    %379 = arith.addf %377, %378 : vector<8x128xf32>
    %cst_90 = arith.constant 5.000000e-01 : f32
    %380 = vector.broadcast %cst_90 : f32 to vector<8x128xf32>
    %381 = arith.mulf %380, %379 : vector<8x128xf32>
    %382 = math.tanh %381 : vector<8x128xf32>
    %cst_91 = arith.constant 5.000000e-01 : f32
    %383 = vector.broadcast %cst_91 : f32 to vector<8x128xf32>
    %384 = arith.mulf %383, %382 : vector<8x128xf32>
    %cst_92 = arith.constant 5.000000e-01 : f32
    %385 = vector.broadcast %cst_92 : f32 to vector<8x128xf32>
    %386 = arith.addf %384, %385 : vector<8x128xf32>
    %387 = vector.extract_strided_slice %376 {offsets = [0, 128], sizes = [8, 128], strides = [1, 1]} : vector<8x384xf32> to vector<8x128xf32>
    %388 = vector.extract_strided_slice %375 {offsets = [0, 128], sizes = [8, 128], strides = [1, 1]} : vector<8x384xf32> to vector<8x128xf32>
    %389 = arith.addf %387, %388 : vector<8x128xf32>
    %cst_93 = arith.constant 5.000000e-01 : f32
    %390 = vector.broadcast %cst_93 : f32 to vector<8x128xf32>
    %391 = arith.mulf %390, %389 : vector<8x128xf32>
    %392 = math.tanh %391 : vector<8x128xf32>
    %cst_94 = arith.constant 5.000000e-01 : f32
    %393 = vector.broadcast %cst_94 : f32 to vector<8x128xf32>
    %394 = arith.mulf %393, %392 : vector<8x128xf32>
    %cst_95 = arith.constant 5.000000e-01 : f32
    %395 = vector.broadcast %cst_95 : f32 to vector<8x128xf32>
    %396 = arith.addf %394, %395 : vector<8x128xf32>
    %397 = vector.extract_strided_slice %376 {offsets = [0, 256], sizes = [8, 128], strides = [1, 1]} : vector<8x384xf32> to vector<8x128xf32>
    %398 = vector.extract_strided_slice %375 {offsets = [0, 256], sizes = [8, 128], strides = [1, 1]} : vector<8x384xf32> to vector<8x128xf32>
    %399 = arith.addf %398, %20 : vector<8x128xf32>
    %400 = arith.mulf %386, %399 : vector<8x128xf32>
    %401 = arith.addf %397, %400 : vector<8x128xf32>
    %402 = math.tanh %401 : vector<8x128xf32>
    %403 = arith.subf %369, %402 : vector<8x128xf32>
    %404 = arith.mulf %396, %403 : vector<8x128xf32>
    %405 = arith.addf %402, %404 : vector<8x128xf32>
    %c9_i32 = arith.constant 9 : i32
    %406 = vector.broadcast %c9_i32 : i32 to vector<8x128xi32>
    %407 = arith.cmpi sgt, %15, %406 : vector<8x128xi32>
    %408 = arith.select %407, %405, %369 : vector<8x128xi1>, vector<8x128xf32>
    %cst_96 = arith.constant 0.000000e+00 : f32
    %409 = vector.broadcast %cst_96 : f32 to vector<8x128xf32>
    %410 = arith.select %407, %405, %409 : vector<8x128xi1>, vector<8x128xf32>
    %411 = arith.addf %372, %410 : vector<8x128xf32>
    %412 = arith.maximumf %374, %405 : vector<8x128xf32>
    %413 = arith.select %407, %412, %374 : vector<8x128xi1>, vector<8x128xf32>
    %cst_97 = arith.constant dense<0.000000e+00> : vector<8x384xf32>
    %414 = tpu.matmul %408, %16, %cst_97 {dimension_numbers = #tpu.dot_dimension_numbers<[1], [0], [0], [1], [0, 0, 1, 1], [], []>} : vector<8x128xf32>, vector<128x384xf32>, vector<8x384xf32> -> vector<8x384xf32>
    %415 = vector.extract_strided_slice %14 {offsets = [80, 0], sizes = [8, 384], strides = [1, 1]} : vector<96x384xf32> to vector<8x384xf32>
    %416 = vector.extract_strided_slice %415 {offsets = [0, 0], sizes = [8, 128], strides = [1, 1]} : vector<8x384xf32> to vector<8x128xf32>
    %417 = vector.extract_strided_slice %414 {offsets = [0, 0], sizes = [8, 128], strides = [1, 1]} : vector<8x384xf32> to vector<8x128xf32>
    %418 = arith.addf %416, %417 : vector<8x128xf32>
    %cst_98 = arith.constant 5.000000e-01 : f32
    %419 = vector.broadcast %cst_98 : f32 to vector<8x128xf32>
    %420 = arith.mulf %419, %418 : vector<8x128xf32>
    %421 = math.tanh %420 : vector<8x128xf32>
    %cst_99 = arith.constant 5.000000e-01 : f32
    %422 = vector.broadcast %cst_99 : f32 to vector<8x128xf32>
    %423 = arith.mulf %422, %421 : vector<8x128xf32>
    %cst_100 = arith.constant 5.000000e-01 : f32
    %424 = vector.broadcast %cst_100 : f32 to vector<8x128xf32>
    %425 = arith.addf %423, %424 : vector<8x128xf32>
    %426 = vector.extract_strided_slice %415 {offsets = [0, 128], sizes = [8, 128], strides = [1, 1]} : vector<8x384xf32> to vector<8x128xf32>
    %427 = vector.extract_strided_slice %414 {offsets = [0, 128], sizes = [8, 128], strides = [1, 1]} : vector<8x384xf32> to vector<8x128xf32>
    %428 = arith.addf %426, %427 : vector<8x128xf32>
    %cst_101 = arith.constant 5.000000e-01 : f32
    %429 = vector.broadcast %cst_101 : f32 to vector<8x128xf32>
    %430 = arith.mulf %429, %428 : vector<8x128xf32>
    %431 = math.tanh %430 : vector<8x128xf32>
    %cst_102 = arith.constant 5.000000e-01 : f32
    %432 = vector.broadcast %cst_102 : f32 to vector<8x128xf32>
    %433 = arith.mulf %432, %431 : vector<8x128xf32>
    %cst_103 = arith.constant 5.000000e-01 : f32
    %434 = vector.broadcast %cst_103 : f32 to vector<8x128xf32>
    %435 = arith.addf %433, %434 : vector<8x128xf32>
    %436 = vector.extract_strided_slice %415 {offsets = [0, 256], sizes = [8, 128], strides = [1, 1]} : vector<8x384xf32> to vector<8x128xf32>
    %437 = vector.extract_strided_slice %414 {offsets = [0, 256], sizes = [8, 128], strides = [1, 1]} : vector<8x384xf32> to vector<8x128xf32>
    %438 = arith.addf %437, %20 : vector<8x128xf32>
    %439 = arith.mulf %425, %438 : vector<8x128xf32>
    %440 = arith.addf %436, %439 : vector<8x128xf32>
    %441 = math.tanh %440 : vector<8x128xf32>
    %442 = arith.subf %408, %441 : vector<8x128xf32>
    %443 = arith.mulf %435, %442 : vector<8x128xf32>
    %444 = arith.addf %441, %443 : vector<8x128xf32>
    %c10_i32 = arith.constant 10 : i32
    %445 = vector.broadcast %c10_i32 : i32 to vector<8x128xi32>
    %446 = arith.cmpi sgt, %15, %445 : vector<8x128xi32>
    %447 = arith.select %446, %444, %408 : vector<8x128xi1>, vector<8x128xf32>
    %cst_104 = arith.constant 0.000000e+00 : f32
    %448 = vector.broadcast %cst_104 : f32 to vector<8x128xf32>
    %449 = arith.select %446, %444, %448 : vector<8x128xi1>, vector<8x128xf32>
    %450 = arith.addf %411, %449 : vector<8x128xf32>
    %451 = arith.maximumf %413, %444 : vector<8x128xf32>
    %452 = arith.select %446, %451, %413 : vector<8x128xi1>, vector<8x128xf32>
    %cst_105 = arith.constant dense<0.000000e+00> : vector<8x384xf32>
    %453 = tpu.matmul %447, %16, %cst_105 {dimension_numbers = #tpu.dot_dimension_numbers<[1], [0], [0], [1], [0, 0, 1, 1], [], []>} : vector<8x128xf32>, vector<128x384xf32>, vector<8x384xf32> -> vector<8x384xf32>
    %454 = vector.extract_strided_slice %14 {offsets = [88, 0], sizes = [8, 384], strides = [1, 1]} : vector<96x384xf32> to vector<8x384xf32>
    %455 = vector.extract_strided_slice %454 {offsets = [0, 0], sizes = [8, 128], strides = [1, 1]} : vector<8x384xf32> to vector<8x128xf32>
    %456 = vector.extract_strided_slice %453 {offsets = [0, 0], sizes = [8, 128], strides = [1, 1]} : vector<8x384xf32> to vector<8x128xf32>
    %457 = arith.addf %455, %456 : vector<8x128xf32>
    %cst_106 = arith.constant 5.000000e-01 : f32
    %458 = vector.broadcast %cst_106 : f32 to vector<8x128xf32>
    %459 = arith.mulf %458, %457 : vector<8x128xf32>
    %460 = math.tanh %459 : vector<8x128xf32>
    %cst_107 = arith.constant 5.000000e-01 : f32
    %461 = vector.broadcast %cst_107 : f32 to vector<8x128xf32>
    %462 = arith.mulf %461, %460 : vector<8x128xf32>
    %cst_108 = arith.constant 5.000000e-01 : f32
    %463 = vector.broadcast %cst_108 : f32 to vector<8x128xf32>
    %464 = arith.addf %462, %463 : vector<8x128xf32>
    %465 = vector.extract_strided_slice %454 {offsets = [0, 128], sizes = [8, 128], strides = [1, 1]} : vector<8x384xf32> to vector<8x128xf32>
    %466 = vector.extract_strided_slice %453 {offsets = [0, 128], sizes = [8, 128], strides = [1, 1]} : vector<8x384xf32> to vector<8x128xf32>
    %467 = arith.addf %465, %466 : vector<8x128xf32>
    %cst_109 = arith.constant 5.000000e-01 : f32
    %468 = vector.broadcast %cst_109 : f32 to vector<8x128xf32>
    %469 = arith.mulf %468, %467 : vector<8x128xf32>
    %470 = math.tanh %469 : vector<8x128xf32>
    %cst_110 = arith.constant 5.000000e-01 : f32
    %471 = vector.broadcast %cst_110 : f32 to vector<8x128xf32>
    %472 = arith.mulf %471, %470 : vector<8x128xf32>
    %cst_111 = arith.constant 5.000000e-01 : f32
    %473 = vector.broadcast %cst_111 : f32 to vector<8x128xf32>
    %474 = arith.addf %472, %473 : vector<8x128xf32>
    %475 = vector.extract_strided_slice %454 {offsets = [0, 256], sizes = [8, 128], strides = [1, 1]} : vector<8x384xf32> to vector<8x128xf32>
    %476 = vector.extract_strided_slice %453 {offsets = [0, 256], sizes = [8, 128], strides = [1, 1]} : vector<8x384xf32> to vector<8x128xf32>
    %477 = arith.addf %476, %20 : vector<8x128xf32>
    %478 = arith.mulf %464, %477 : vector<8x128xf32>
    %479 = arith.addf %475, %478 : vector<8x128xf32>
    %480 = math.tanh %479 : vector<8x128xf32>
    %481 = arith.subf %447, %480 : vector<8x128xf32>
    %482 = arith.mulf %474, %481 : vector<8x128xf32>
    %483 = arith.addf %480, %482 : vector<8x128xf32>
    %c11_i32 = arith.constant 11 : i32
    %484 = vector.broadcast %c11_i32 : i32 to vector<8x128xi32>
    %485 = arith.cmpi sgt, %15, %484 : vector<8x128xi32>
    %486 = arith.select %485, %483, %447 : vector<8x128xi1>, vector<8x128xf32>
    %cst_112 = arith.constant 0.000000e+00 : f32
    %487 = vector.broadcast %cst_112 : f32 to vector<8x128xf32>
    %488 = arith.select %485, %483, %487 : vector<8x128xi1>, vector<8x128xf32>
    %489 = arith.addf %450, %488 : vector<8x128xf32>
    %490 = arith.maximumf %452, %483 : vector<8x128xf32>
    %491 = arith.select %485, %490, %452 : vector<8x128xi1>, vector<8x128xf32>
    %492 = arith.sitofp %15 : vector<8x128xi32> to vector<8x128xf32>
    %493 = arith.divf %489, %492 : vector<8x128xf32>
    %c0_113 = arith.constant 0 : index
    %c0_114 = arith.constant 0 : index
    %c0_115 = arith.constant 0 : index
    %494 = vector.load %arg5[%c0_113, %c0_114, %c0_115] : memref<8x128x128xf32, #tpu.memory_space<vmem>>, vector<1x128x128xf32>
    %495 = vector.shape_cast %494 : vector<1x128x128xf32> to vector<128x128xf32>
    %cst_116 = arith.constant dense<0.000000e+00> : vector<8x128xf32>
    %496 = tpu.matmul %486, %495, %cst_116 {dimension_numbers = #tpu.dot_dimension_numbers<[1], [0], [0], [1], [0, 0, 1, 1], [], []>} : vector<8x128xf32>, vector<128x128xf32>, vector<8x128xf32> -> vector<8x128xf32>
    %c1_117 = arith.constant 1 : index
    %c0_118 = arith.constant 0 : index
    %c0_119 = arith.constant 0 : index
    %497 = vector.load %arg5[%c1_117, %c0_118, %c0_119] : memref<8x128x128xf32, #tpu.memory_space<vmem>>, vector<1x128x128xf32>
    %498 = vector.shape_cast %497 : vector<1x128x128xf32> to vector<128x128xf32>
    %cst_120 = arith.constant dense<0.000000e+00> : vector<8x128xf32>
    %499 = tpu.matmul %493, %498, %cst_120 {dimension_numbers = #tpu.dot_dimension_numbers<[1], [0], [0], [1], [0, 0, 1, 1], [], []>} : vector<8x128xf32>, vector<128x128xf32>, vector<8x128xf32> -> vector<8x128xf32>
    %500 = arith.addf %496, %499 : vector<8x128xf32>
    %c2 = arith.constant 2 : index
    %c0_121 = arith.constant 0 : index
    %c0_122 = arith.constant 0 : index
    %501 = vector.load %arg5[%c2, %c0_121, %c0_122] : memref<8x128x128xf32, #tpu.memory_space<vmem>>, vector<1x128x128xf32>
    %502 = vector.shape_cast %501 : vector<1x128x128xf32> to vector<128x128xf32>
    %cst_123 = arith.constant dense<0.000000e+00> : vector<8x128xf32>
    %503 = tpu.matmul %491, %502, %cst_123 {dimension_numbers = #tpu.dot_dimension_numbers<[1], [0], [0], [1], [0, 0, 1, 1], [], []>} : vector<8x128xf32>, vector<128x128xf32>, vector<8x128xf32> -> vector<8x128xf32>
    %504 = arith.addf %500, %503 : vector<8x128xf32>
    %c0_124 = arith.constant 0 : index
    %c0_125 = arith.constant 0 : index
    %c0_126 = arith.constant 0 : index
    %505 = vector.load %arg6[%c0_124, %c0_125, %c0_126] : memref<6x1x128xf32, #tpu.memory_space<vmem>>, vector<1x1x128xf32>
    %506 = vector.shape_cast %505 : vector<1x1x128xf32> to vector<1x128xf32>
    %507 = vector.broadcast %506 : vector<1x128xf32> to vector<8x128xf32>
    %508 = arith.addf %504, %507 : vector<8x128xf32>
    %cst_127 = arith.constant 0.000000e+00 : f32
    %509 = vector.broadcast %cst_127 : f32 to vector<8x128xf32>
    %510 = arith.cmpf oge, %508, %509 : vector<8x128xf32>
    %cst_128 = arith.constant 0.00999999977 : f32
    %511 = vector.broadcast %cst_128 : f32 to vector<8x128xf32>
    %512 = arith.mulf %511, %508 : vector<8x128xf32>
    %513 = arith.select %510, %508, %512 : vector<8x128xi1>, vector<8x128xf32>
    %c0_129 = arith.constant 0 : index
    %c0_130 = arith.constant 0 : index
    %514 = vector.load %arg2[%c0_129, %c0_130] : memref<8x128xf32, #tpu.memory_space<vmem>>, vector<8x128xf32>
    %c3 = arith.constant 3 : index
    %c0_131 = arith.constant 0 : index
    %c0_132 = arith.constant 0 : index
    %515 = vector.load %arg5[%c3, %c0_131, %c0_132] : memref<8x128x128xf32, #tpu.memory_space<vmem>>, vector<1x128x128xf32>
    %516 = vector.shape_cast %515 : vector<1x128x128xf32> to vector<128x128xf32>
    %cst_133 = arith.constant dense<0.000000e+00> : vector<8x128xf32>
    %517 = tpu.matmul %514, %516, %cst_133 {dimension_numbers = #tpu.dot_dimension_numbers<[1], [0], [0], [1], [0, 0, 1, 1], [], []>} : vector<8x128xf32>, vector<128x128xf32>, vector<8x128xf32> -> vector<8x128xf32>
    %c1_134 = arith.constant 1 : index
    %c0_135 = arith.constant 0 : index
    %c0_136 = arith.constant 0 : index
    %518 = vector.load %arg6[%c1_134, %c0_135, %c0_136] : memref<6x1x128xf32, #tpu.memory_space<vmem>>, vector<1x1x128xf32>
    %519 = vector.shape_cast %518 : vector<1x1x128xf32> to vector<1x128xf32>
    %520 = vector.broadcast %519 : vector<1x128xf32> to vector<8x128xf32>
    %521 = arith.addf %517, %520 : vector<8x128xf32>
    %cst_137 = arith.constant 0.000000e+00 : f32
    %522 = vector.broadcast %cst_137 : f32 to vector<8x128xf32>
    %523 = arith.maximumf %521, %522 : vector<8x128xf32>
    %c4 = arith.constant 4 : index
    %c0_138 = arith.constant 0 : index
    %c0_139 = arith.constant 0 : index
    %524 = vector.load %arg5[%c4, %c0_138, %c0_139] : memref<8x128x128xf32, #tpu.memory_space<vmem>>, vector<1x128x128xf32>
    %525 = vector.shape_cast %524 : vector<1x128x128xf32> to vector<128x128xf32>
    %cst_140 = arith.constant dense<0.000000e+00> : vector<8x128xf32>
    %526 = tpu.matmul %523, %525, %cst_140 {dimension_numbers = #tpu.dot_dimension_numbers<[1], [0], [0], [1], [0, 0, 1, 1], [], []>} : vector<8x128xf32>, vector<128x128xf32>, vector<8x128xf32> -> vector<8x128xf32>
    %c2_141 = arith.constant 2 : index
    %c0_142 = arith.constant 0 : index
    %c0_143 = arith.constant 0 : index
    %527 = vector.load %arg6[%c2_141, %c0_142, %c0_143] : memref<6x1x128xf32, #tpu.memory_space<vmem>>, vector<1x1x128xf32>
    %528 = vector.shape_cast %527 : vector<1x1x128xf32> to vector<1x128xf32>
    %529 = vector.broadcast %528 : vector<1x128xf32> to vector<8x128xf32>
    %530 = arith.addf %526, %529 : vector<8x128xf32>
    %cst_144 = arith.constant 0.000000e+00 : f32
    %531 = vector.broadcast %cst_144 : f32 to vector<8x128xf32>
    %532 = arith.cmpf oge, %530, %531 : vector<8x128xf32>
    %cst_145 = arith.constant 0.00999999977 : f32
    %533 = vector.broadcast %cst_145 : f32 to vector<8x128xf32>
    %534 = arith.mulf %533, %530 : vector<8x128xf32>
    %535 = arith.select %532, %530, %534 : vector<8x128xi1>, vector<8x128xf32>
    %c5_146 = arith.constant 5 : index
    %c0_147 = arith.constant 0 : index
    %c0_148 = arith.constant 0 : index
    %536 = vector.load %arg5[%c5_146, %c0_147, %c0_148] : memref<8x128x128xf32, #tpu.memory_space<vmem>>, vector<1x128x128xf32>
    %537 = vector.shape_cast %536 : vector<1x128x128xf32> to vector<128x128xf32>
    %cst_149 = arith.constant dense<0.000000e+00> : vector<8x128xf32>
    %538 = tpu.matmul %513, %537, %cst_149 {dimension_numbers = #tpu.dot_dimension_numbers<[1], [0], [0], [1], [0, 0, 1, 1], [], []>} : vector<8x128xf32>, vector<128x128xf32>, vector<8x128xf32> -> vector<8x128xf32>
    %c6 = arith.constant 6 : index
    %c0_150 = arith.constant 0 : index
    %c0_151 = arith.constant 0 : index
    %539 = vector.load %arg5[%c6, %c0_150, %c0_151] : memref<8x128x128xf32, #tpu.memory_space<vmem>>, vector<1x128x128xf32>
    %540 = vector.shape_cast %539 : vector<1x128x128xf32> to vector<128x128xf32>
    %cst_152 = arith.constant dense<0.000000e+00> : vector<8x128xf32>
    %541 = tpu.matmul %535, %540, %cst_152 {dimension_numbers = #tpu.dot_dimension_numbers<[1], [0], [0], [1], [0, 0, 1, 1], [], []>} : vector<8x128xf32>, vector<128x128xf32>, vector<8x128xf32> -> vector<8x128xf32>
    %542 = arith.addf %538, %541 : vector<8x128xf32>
    %c3_153 = arith.constant 3 : index
    %c0_154 = arith.constant 0 : index
    %c0_155 = arith.constant 0 : index
    %543 = vector.load %arg6[%c3_153, %c0_154, %c0_155] : memref<6x1x128xf32, #tpu.memory_space<vmem>>, vector<1x1x128xf32>
    %544 = vector.shape_cast %543 : vector<1x1x128xf32> to vector<1x128xf32>
    %545 = vector.broadcast %544 : vector<1x128xf32> to vector<8x128xf32>
    %546 = arith.addf %542, %545 : vector<8x128xf32>
    %cst_156 = arith.constant 0.000000e+00 : f32
    %547 = vector.broadcast %cst_156 : f32 to vector<8x128xf32>
    %548 = arith.maximumf %546, %547 : vector<8x128xf32>
    %c7 = arith.constant 7 : index
    %c0_157 = arith.constant 0 : index
    %c0_158 = arith.constant 0 : index
    %549 = vector.load %arg5[%c7, %c0_157, %c0_158] : memref<8x128x128xf32, #tpu.memory_space<vmem>>, vector<1x128x128xf32>
    %550 = vector.shape_cast %549 : vector<1x128x128xf32> to vector<128x128xf32>
    %cst_159 = arith.constant dense<0.000000e+00> : vector<8x128xf32>
    %551 = tpu.matmul %548, %550, %cst_159 {dimension_numbers = #tpu.dot_dimension_numbers<[1], [0], [0], [1], [0, 0, 1, 1], [], []>} : vector<8x128xf32>, vector<128x128xf32>, vector<8x128xf32> -> vector<8x128xf32>
    %c4_160 = arith.constant 4 : index
    %c0_161 = arith.constant 0 : index
    %c0_162 = arith.constant 0 : index
    %552 = vector.load %arg6[%c4_160, %c0_161, %c0_162] : memref<6x1x128xf32, #tpu.memory_space<vmem>>, vector<1x1x128xf32>
    %553 = vector.shape_cast %552 : vector<1x1x128xf32> to vector<1x128xf32>
    %554 = vector.broadcast %553 : vector<1x128xf32> to vector<8x128xf32>
    %555 = arith.addf %551, %554 : vector<8x128xf32>
    %c0_163 = arith.constant 0 : index
    %c0_164 = arith.constant 0 : index
    %556 = vector.load %arg7[%c0_163, %c0_164] : memref<8x128xf32, #tpu.memory_space<vmem>>, vector<8x128xf32>
    tpu.vector_store %arg7[%c0_163, %c0_164], %555 {strides = array<i32>} : memref<8x128xf32, #tpu.memory_space<vmem>>, vector<8x128xf32>,
    return
  }
}

</mosaic_0001>

<llo_original>
// kernel: model_forward.1
$region0: #{model_forward.1}
  #allocation0 [shape = 'u32[]', space=smem, size = 0x4, offset = 0x4, fixed_abs, tag = 'smem constant byte address 0x4 - core index']
  #allocation1 [shape = 'u32[144,128]{1,0:T(1,128)}', space=vmem, size = 0x12000, scoped, tag = 'internal scratch']
  %s0 = inlined_call_operand.vmem [shape: s32[2,96,1], index: 0, kind: input, shape index: {}]
  %s1 = inlined_call_operand.vmem [shape: s32[8,128], index: 1, kind: input, shape index: {}]
  %s2 = inlined_call_operand.vmem [shape: f32[8,128], index: 2, kind: input, shape index: {}]
  %s3 = inlined_call_operand.vmem [shape: f32[128,384], index: 3, kind: input, shape index: {}]
  %s4 = inlined_call_operand.hbm [shape: f32[128,384], index: 4, kind: input, shape index: {}]
  %s5 = inlined_call_operand.hbm [shape: f32[8,128,128], index: 5, kind: input, shape index: {}]
  %s6 = inlined_call_operand.vmem [shape: f32[6,1,128], index: 6, kind: input, shape index: {}]
  %s7 = inlined_call_operand.vmem [shape: f32[8,128], index: 7, kind: output, shape index: {}]
  %s8 = sld [smem:[#allocation0]]
  $region46: #{model_forward.1} parent=0
    _
  %s10 = ssub.s32 1, %s8
  %s11 = scalar_select 0, %s10, %s8
  $region1: #{model_forward.1} parent=0
    #allocation2 [shape = 'u8[196608]{0}', space=vmem, size = 0x30000, scoped, tag = 'input window, operand 4, single buffered']
    #allocation3 [shape = 's32[1]{0}', space=sflag, size = 0x4, scoped, tag = 'scoped memory for model_forward.1']
    #allocation4 [shape = 'u8[524288]{0}', space=vmem, size = 0x80000, scoped, tag = 'input window, operand 5, single buffered']
    #allocation5 [shape = 's32[1]{0}', space=sflag, size = 0x4, scoped, tag = 'scoped memory for model_forward.1']
    %12 = vsyncpa [#allocation3], 0
    %13 = vsyncpa [#allocation5], 0
    // Predicated region
    $region2: #{model_forward.1} parent=1 // pred_check
      _
    $region3: #{model_forward.1} parent=1 // pred_check_branch
      %15 = sbr.rel (0) target = $region5
    $region4: #{model_forward.1} parent=1 // pred_region
      _
    $region5: #{model_forward.1} parent=1 // pred_fallthru
      _
    // Predicated region
    $region6: #{model_forward.1} parent=1 // pred_check
      _
    $region7: #{model_forward.1} parent=1 // pred_check_branch
      %17 = sbr.rel (0) target = $region9
    $region8: #{model_forward.1} parent=1 // pred_region
      _
    $region9: #{model_forward.1} parent=1 // pred_fallthru
      _
    // Predicated region
    $region10: #{model_forward.1} parent=1 // pred_check
      _
    $region11: #{model_forward.1} parent=1 // pred_check_branch
      %19 = sbr.rel (0) target = $region13
    $region12: #{model_forward.1} parent=1 // pred_region
      _
    $region13: #{model_forward.1} parent=1 // pred_fallthru
      _
    // Predicated region
    $region14: #{model_forward.1} parent=1 // pred_check
      _
    $region15: #{model_forward.1} parent=1 // pred_check_branch
      %21 = sbr.rel (0) target = $region17
    $region16: #{model_forward.1} parent=1 // pred_region
      _
    $region17: #{model_forward.1} parent=1 // pred_fallthru
      _
    // Predicated region
    $region18: #{model_forward.1} parent=1 // pred_check
      _
    $region19: #{model_forward.1} parent=1 // pred_check_branch
      %23 = sbr.rel (0) target = $region21
    $region20: #{model_forward.1} parent=1 // pred_region
      %s25 = ssub.s32 6144, 6144
      %26 = vsyncadd [#allocation3], %s25
      %s27 = sshll.u32 [#allocation2], 4
      %s28 = int_to_ptr.vmem [resolvable:$true] %s27
      %33 = dma.hbm_to_vmem [thread:$0]  %s4, 6144, %s28, [#allocation3], 384, 384, 24
    $region21: #{model_forward.1} parent=1 // pred_fallthru
      _
    // Predicated region
    $region22: #{model_forward.1} parent=1 // pred_check
      _
    $region23: #{model_forward.1} parent=1 // pred_check_branch
      %35 = sbr.rel (0) target = $region25
    $region24: #{model_forward.1} parent=1 // pred_region
      %s37 = ssub.s32 16384, 16384
      %38 = vsyncadd [#allocation5], %s37
      %s39 = sshll.u32 [#allocation4], 4
      %s40 = int_to_ptr.vmem [resolvable:$true] %s39
      %45 = dma.hbm_to_vmem [thread:$0]  %s5, 16384, %s40, [#allocation5], 128, 128, 8
    $region25: #{model_forward.1} parent=1 // pred_fallthru
      _
    // Predicated region
    $region26: #{model_forward.1} parent=1 // pred_check
      _
    $region27: #{model_forward.1} parent=1 // pred_check_branch
      %47 = sbr.rel (0) target = $region29
    $region28: #{model_forward.1} parent=1 // pred_region
      _
    $region29: #{model_forward.1} parent=1 // pred_fallthru
      _
    // Predicated region
    $region30: #{model_forward.1} parent=1 // pred_check
      _
    $region31: #{model_forward.1} parent=1 // pred_check_branch
      %49 = sbr.rel (0) target = $region33
    $region32: #{model_forward.1} parent=1 // pred_region
      %50 = dma.done [#allocation3], 6144
    $region33: #{model_forward.1} parent=1 // pred_fallthru
      _
    // Predicated region
    $region34: #{model_forward.1} parent=1 // pred_check
      _
    $region35: #{model_forward.1} parent=1 // pred_check_branch
      %52 = sbr.rel (0) target = $region37
    $region36: #{model_forward.1} parent=1 // pred_region
      %53 = dma.done [#allocation5], 16384
    $region37: #{model_forward.1} parent=1 // pred_fallthru
      _
    %v54 = vlaneseq
    %v55 = vand.u32 %v54, 127
    %v56 = vld [vmem:[%s0] sm:$0xff]
    %v57 = vld [vmem:[%s0 + $0x8] sm:$0xff]
    %v58 = vld [vmem:[%s0 + $0x10] sm:$0xff]
    %v59 = vld [vmem:[%s0 + $0x18] sm:$0xff]
    %v60 = vld [vmem:[%s0 + $0x20] sm:$0xff]
    %v61 = vld [vmem:[%s0 + $0x28] sm:$0xff]
    %v62 = vld [vmem:[%s0 + $0x30] sm:$0xff]
    %v63 = vld [vmem:[%s0 + $0x38] sm:$0xff]
    %v64 = vld [vmem:[%s0 + $0x40] sm:$0xff]
    %v65 = vld [vmem:[%s0 + $0x48] sm:$0xff]
    %v66 = vld [vmem:[%s0 + $0x50] sm:$0xff]
    %v67 = vld [vmem:[%s0 + $0x58] sm:$0xff]
    %68 = vset.pattern.permute.xlu0 0
    %69 = vperm.xlu0 %68, %v56
    %v70 = vpop.permute.xlu0 %69
    %71 = vset.pattern.permute.xlu0 0
    %72 = vperm.xlu0 %71, %v57
    %v73 = vpop.permute.xlu0 %72
    %74 = vset.pattern.permute.xlu0 0
    %75 = vperm.xlu0 %74, %v58
    %v76 = vpop.permute.xlu0 %75
    %77 = vset.pattern.permute.xlu0 0
    %78 = vperm.xlu0 %77, %v59
    %v79 = vpop.permute.xlu0 %78
    %80 = vset.pattern.permute.xlu0 0
    %81 = vperm.xlu0 %80, %v60
    %v82 = vpop.permute.xlu0 %81
    %83 = vset.pattern.permute.xlu0 0
    %84 = vperm.xlu0 %83, %v61
    %v85 = vpop.permute.xlu0 %84
    %86 = vset.pattern.permute.xlu0 0
    %87 = vperm.xlu0 %86, %v62
    %v88 = vpop.permute.xlu0 %87
    %89 = vset.pattern.permute.xlu0 0
    %90 = vperm.xlu0 %89, %v63
    %v91 = vpop.permute.xlu0 %90
    %92 = vset.pattern.permute.xlu0 0
    %93 = vperm.xlu0 %92, %v64
    %v94 = vpop.permute.xlu0 %93
    %95 = vset.pattern.permute.xlu0 0
    %96 = vperm.xlu0 %95, %v65
    %v97 = vpop.permute.xlu0 %96
    %98 = vset.pattern.permute.xlu0 0
    %99 = vperm.xlu0 %98, %v66
    %v100 = vpop.permute.xlu0 %99
    %101 = vset.pattern.permute.xlu0 0
    %102 = vperm.xlu0 %101, %v67
    %v103 = vpop.permute.xlu0 %102
    %vm104 = vcmp.eq.s32.totalorder %v55, %v70
    %vm105 = vcmp.eq.s32.totalorder %v55, %v73
    %vm106 = vcmp.eq.s32.totalorder %v55, %v76
    %vm107 = vcmp.eq.s32.totalorder %v55, %v79
    %vm108 = vcmp.eq.s32.totalorder %v55, %v82
    %vm109 = vcmp.eq.s32.totalorder %v55, %v85
    %vm110 = vcmp.eq.s32.totalorder %v55, %v88
    %vm111 = vcmp.eq.s32.totalorder %v55, %v91
    %vm112 = vcmp.eq.s32.totalorder %v55, %v94
    %vm113 = vcmp.eq.s32.totalorder %v55, %v97
    %vm114 = vcmp.eq.s32.totalorder %v55, %v100
    %vm115 = vcmp.eq.s32.totalorder %v55, %v103
    %s116 = scalar_lea.vmem %s0, 96
    %v117 = vld [vmem:[%s116] sm:$0xff]
    %v118 = vld [vmem:[%s116 + $0x8] sm:$0xff]
    %v119 = vld [vmem:[%s116 + $0x10] sm:$0xff]
    %v120 = vld [vmem:[%s116 + $0x18] sm:$0xff]
    %v121 = vld [vmem:[%s116 + $0x20] sm:$0xff]
    %v122 = vld [vmem:[%s116 + $0x28] sm:$0xff]
    %v123 = vld [vmem:[%s116 + $0x30] sm:$0xff]
    %v124 = vld [vmem:[%s116 + $0x38] sm:$0xff]
    %v125 = vld [vmem:[%s116 + $0x40] sm:$0xff]
    %v126 = vld [vmem:[%s116 + $0x48] sm:$0xff]
    %v127 = vld [vmem:[%s116 + $0x50] sm:$0xff]
    %v128 = vld [vmem:[%s116 + $0x58] sm:$0xff]
    %129 = vset.pattern.permute.xlu0 0
    %130 = vperm.xlu0 %129, %v117
    %v131 = vpop.permute.xlu0 %130
    %132 = vset.pattern.permute.xlu0 0
    %133 = vperm.xlu0 %132, %v118
    %v134 = vpop.permute.xlu0 %133
    %135 = vset.pattern.permute.xlu0 0
    %136 = vperm.xlu0 %135, %v119
    %v137 = vpop.permute.xlu0 %136
    %138 = vset.pattern.permute.xlu0 0
    %139 = vperm.xlu0 %138, %v120
    %v140 = vpop.permute.xlu0 %139
    %141 = vset.pattern.permute.xlu0 0
    %142 = vperm.xlu0 %141, %v121
    %v143 = vpop.permute.xlu0 %142
    %144 = vset.pattern.permute.xlu0 0
    %145 = vperm.xlu0 %144, %v122
    %v146 = vpop.permute.xlu0 %145
    %147 = vset.pattern.permute.xlu0 0
    %148 = vperm.xlu0 %147, %v123
    %v149 = vpop.permute.xlu0 %148
    %150 = vset.pattern.permute.xlu0 0
    %151 = vperm.xlu0 %150, %v124
    %v152 = vpop.permute.xlu0 %151
    %153 = vset.pattern.permute.xlu0 0
    %154 = vperm.xlu0 %153, %v125
    %v155 = vpop.permute.xlu0 %154
    %156 = vset.pattern.permute.xlu0 0
    %157 = vperm.xlu0 %156, %v126
    %v158 = vpop.permute.xlu0 %157
    %159 = vset.pattern.permute.xlu0 0
    %160 = vperm.xlu0 %159, %v127
    %v161 = vpop.permute.xlu0 %160
    %162 = vset.pattern.permute.xlu0 0
    %163 = vperm.xlu0 %162, %v128
    %v164 = vpop.permute.xlu0 %163
    %vm165 = vcmp.eq.s32.totalorder %v55, %v131
    %vm166 = vcmp.eq.s32.totalorder %v55, %v134
    %vm167 = vcmp.eq.s32.totalorder %v55, %v137
    %vm168 = vcmp.eq.s32.totalorder %v55, %v140
    %vm169 = vcmp.eq.s32.totalorder %v55, %v143
    %vm170 = vcmp.eq.s32.totalorder %v55, %v146
    %vm171 = vcmp.eq.s32.totalorder %v55, %v149
    %vm172 = vcmp.eq.s32.totalorder %v55, %v152
    %vm173 = vcmp.eq.s32.totalorder %v55, %v155
    %vm174 = vcmp.eq.s32.totalorder %v55, %v158
    %vm175 = vcmp.eq.s32.totalorder %v55, %v161
    %vm176 = vcmp.eq.s32.totalorder %v55, %v164
    %vm177 = vmor %vm104, %vm165
    %vm178 = vmor %vm105, %vm166
    %vm179 = vmor %vm106, %vm167
    %vm180 = vmor %vm107, %vm168
    %vm181 = vmor %vm108, %vm169
    %vm182 = vmor %vm109, %vm170
    %vm183 = vmor %vm110, %vm171
    %vm184 = vmor %vm111, %vm172
    %vm185 = vmor %vm112, %vm173
    %vm186 = vmor %vm113, %vm174
    %vm187 = vmor %vm114, %vm175
    %vm188 = vmor %vm115, %vm176
    %v189 = vsel %vm177, 1.0, 0.0
    %v190 = vsel %vm178, 1.0, 0.0
    %v191 = vsel %vm179, 1.0, 0.0
    %v192 = vsel %vm180, 1.0, 0.0
    %v193 = vsel %vm181, 1.0, 0.0
    %v194 = vsel %vm182, 1.0, 0.0
    %v195 = vsel %vm183, 1.0, 0.0
    %v196 = vsel %vm184, 1.0, 0.0
    %v197 = vsel %vm185, 1.0, 0.0
    %v198 = vsel %vm186, 1.0, 0.0
    %v199 = vsel %vm187, 1.0, 0.0
    %v200 = vsel %vm188, 1.0, 0.0
    %v201 = vld [vmem:[%s3] sm:$0xff]
    %v202 = vld [vmem:[%s3 + $0x8] sm:$0xff]
    %v203 = vld [vmem:[%s3 + $0x10] sm:$0xff]
    %v204 = vld [vmem:[%s3 + $0x18] sm:$0xff]
    %v205 = vld [vmem:[%s3 + $0x20] sm:$0xff]
    %v206 = vld [vmem:[%s3 + $0x28] sm:$0xff]
    %v207 = vld [vmem:[%s3 + $0x30] sm:$0xff]
    %v208 = vld [vmem:[%s3 + $0x38] sm:$0xff]
    %v209 = vld [vmem:[%s3 + $0x40] sm:$0xff]
    %v210 = vld [vmem:[%s3 + $0x48] sm:$0xff]
    %v211 = vld [vmem:[%s3 + $0x50] sm:$0xff]
    %v212 = vld [vmem:[%s3 + $0x58] sm:$0xff]
    %v213 = vld [vmem:[%s3 + $0x60] sm:$0xff]
    %v214 = vld [vmem:[%s3 + $0x68] sm:$0xff]
    %v215 = vld [vmem:[%s3 + $0x70] sm:$0xff]
    %v216 = vld [vmem:[%s3 + $0x78] sm:$0xff]
    %v217 = vld [vmem:[%s3 + $0x80] sm:$0xff]
    %v218 = vld [vmem:[%s3 + $0x88] sm:$0xff]
    %v219 = vld [vmem:[%s3 + $0x90] sm:$0xff]
    %v220 = vld [vmem:[%s3 + $0x98] sm:$0xff]
    %v221 = vld [vmem:[%s3 + $0xa0] sm:$0xff]
    %v222 = vld [vmem:[%s3 + $0xa8] sm:$0xff]
    %v223 = vld [vmem:[%s3 + $0xb0] sm:$0xff]
    %v224 = vld [vmem:[%s3 + $0xb8] sm:$0xff]
    %v225 = vld [vmem:[%s3 + $0xc0] sm:$0xff]
    %v226 = vld [vmem:[%s3 + $0xc8] sm:$0xff]
    %v227 = vld [vmem:[%s3 + $0xd0] sm:$0xff]
    %v228 = vld [vmem:[%s3 + $0xd8] sm:$0xff]
    %v229 = vld [vmem:[%s3 + $0xe0] sm:$0xff]
    %v230 = vld [vmem:[%s3 + $0xe8] sm:$0xff]
    %v231 = vld [vmem:[%s3 + $0xf0] sm:$0xff]
    %v232 = vld [vmem:[%s3 + $0xf8] sm:$0xff]
    %v233 = vld [vmem:[%s3 + $0x100] sm:$0xff]
    %v234 = vld [vmem:[%s3 + $0x108] sm:$0xff]
    %v235 = vld [vmem:[%s3 + $0x110] sm:$0xff]
    %v236 = vld [vmem:[%s3 + $0x118] sm:$0xff]
    %v237 = vld [vmem:[%s3 + $0x120] sm:$0xff]
    %v238 = vld [vmem:[%s3 + $0x128] sm:$0xff]
    %v239 = vld [vmem:[%s3 + $0x130] sm:$0xff]
    %v240 = vld [vmem:[%s3 + $0x138] sm:$0xff]
    %v241 = vld [vmem:[%s3 + $0x140] sm:$0xff]
    %v242 = vld [vmem:[%s3 + $0x148] sm:$0xff]
    %v243 = vld [vmem:[%s3 + $0x150] sm:$0xff]
    %v244 = vld [vmem:[%s3 + $0x158] sm:$0xff]
    %v245 = vld [vmem:[%s3 + $0x160] sm:$0xff]
    %v246 = vld [vmem:[%s3 + $0x168] sm:$0xff]
    %v247 = vld [vmem:[%s3 + $0x170] sm:$0xff]
    %v248 = vld [vmem:[%s3 + $0x178] sm:$0xff]
    %249 = vmatprep.subr.mxu0 %v202
    %250 = vmatpush1.msra.mxu0 %v201
    %251 = vmatprep.subr.mxu0 %v205
    %252 = vmatpush1.msra.mxu0 %v204
    %253 = vmatprep.subr.mxu0 %v208
    %254 = vmatpush1.msra.mxu0 %v207
    %255 = vmatprep.subr.mxu0 %v211
    %256 = vmatpush1.msra.mxu0 %v210
    %257 = vmatprep.subr.mxu0 %v214
    %258 = vmatpush1.msra.mxu0 %v213
    %259 = vmatprep.subr.mxu0 %v217
    %260 = vmatpush1.msra.mxu0 %v216
    %261 = vmatprep.subr.mxu0 %v220
    %262 = vmatpush1.msra.mxu0 %v219
    %263 = vmatprep.subr.mxu0 %v223
    %264 = vmatpush1.msra.mxu0 %v222
    %265 = vmatprep.subr.mxu0 %v226
    %266 = vmatpush1.msra.mxu0 %v225
    %267 = vmatprep.subr.mxu0 %v229
    %268 = vmatpush1.msra.mxu0 %v228
    %269 = vmatprep.subr.mxu0 %v232
    %270 = vmatpush1.msra.mxu0 %v231
    %271 = vmatprep.subr.mxu0 %v235
    %272 = vmatpush1.msra.mxu0 %v234
    %273 = vmatprep.subr.mxu0 %v238
    %274 = vmatpush1.msra.mxu0 %v237
    %275 = vmatprep.subr.mxu0 %v241
    %276 = vmatpush1.msra.mxu0 %v240
    %277 = vmatprep.subr.mxu0 %v244
    %278 = vmatpush1.msra.mxu0 %v243
    %279 = vmatprep.subr.mxu0 %v247
    %280 = vmatpush1.msra.mxu0 %v246
    %281 = vmatprep.subr.mxu0 0.0
    %282 = vmatpush1.msra.mxu0 0.0
    %283 = vmatprep.subr.mxu0 0.0
    %284 = vmatpush1.msra.mxu0 0.0
    %285 = vmatprep.subr.mxu0 0.0
    %286 = vmatpush1.msra.mxu0 0.0
    %287 = vmatprep.subr.mxu0 0.0
    %288 = vmatpush1.msra.mxu0 0.0
    %289 = vmatprep.subr.mxu0 0.0
    %290 = vmatpush1.msra.mxu0 0.0
    %291 = vmatprep.subr.mxu0 0.0
    %292 = vmatpush1.msra.mxu0 0.0
    %293 = vmatprep.subr.mxu0 0.0
    %294 = vmatpush1.msra.mxu0 0.0
    %295 = vmatprep.subr.mxu0 0.0
    %296 = vmatpush1.msra.mxu0 0.0
    %297 = vmatprep.subr.mxu0 0.0
    %298 = vmatpush1.msra.mxu0 0.0
    %299 = vmatprep.subr.mxu0 0.0
    %300 = vmatpush1.msra.mxu0 0.0
    %301 = vmatprep.subr.mxu0 0.0
    %302 = vmatpush1.msra.mxu0 0.0
    %303 = vmatprep.subr.mxu0 0.0
    %304 = vmatpush1.msra.mxu0 0.0
    %305 = vmatprep.subr.mxu0 0.0
    %306 = vmatpush1.msra.mxu0 0.0
    %307 = vmatprep.subr.mxu0 0.0
    %308 = vmatpush1.msra.mxu0 0.0
    %309 = vmatprep.subr.mxu0 0.0
    %310 = vmatpush1.msra.mxu0 0.0
    %311 = vmatprep.subr.mxu0 0.0
    %312 = vmatpush1.msra.mxu0 0.0
    %313 = vmatprep.mubr.f32.mxu0 0.0
    %314 = vmatmul.mubr.f32.gmra.mrb[0].mxu0 %v189
    %v315 = vpop.f32.mrb[0].mxu0
    %v316 = vadd.f32 0.0, %v315
    %v317 = vpop.f32.mrb[0].mxu0
    %v318 = vadd.f32 0.0, %v317
    %319 = vmatprep.mubr.f32.mxu0 0.0
    %320 = vmatmul.mubr.f32.gmra.mrb[0].mxu0 %v190
    %v321 = vpop.f32.mrb[0].mxu0
    %v322 = vadd.f32 0.0, %v321
    %v323 = vpop.f32.mrb[0].mxu0
    %v324 = vadd.f32 0.0, %v323
    %325 = vmatprep.mubr.f32.mxu0 0.0
    %326 = vmatmul.mubr.f32.gmra.mrb[0].mxu0 %v191
    %v327 = vpop.f32.mrb[0].mxu0
    %v328 = vadd.f32 0.0, %v327
    %v329 = vpop.f32.mrb[0].mxu0
    %v330 = vadd.f32 0.0, %v329
    %331 = vmatprep.mubr.f32.mxu0 0.0
    %332 = vmatmul.mubr.f32.gmra.mrb[0].mxu0 %v192
    %v333 = vpop.f32.mrb[0].mxu0
    %v334 = vadd.f32 0.0, %v333
    %v335 = vpop.f32.mrb[0].mxu0
    %v336 = vadd.f32 0.0, %v335
    %337 = vmatprep.mubr.f32.mxu0 0.0
    %338 = vmatmul.mubr.f32.gmra.mrb[0].mxu0 %v193
    %v339 = vpop.f32.mrb[0].mxu0
    %v340 = vadd.f32 0.0, %v339
    %v341 = vpop.f32.mrb[0].mxu0
    %v342 = vadd.f32 0.0, %v341
    %343 = vmatprep.mubr.f32.mxu0 0.0
    %344 = vmatmul.mubr.f32.gmra.mrb[0].mxu0 %v194
    %v345 = vpop.f32.mrb[0].mxu0
    %v346 = vadd.f32 0.0, %v345
    %v347 = vpop.f32.mrb[0].mxu0
    %v348 = vadd.f32 0.0, %v347
    %349 = vmatprep.mubr.f32.mxu0 0.0
    %350 = vmatmul.mubr.f32.gmra.mrb[0].mxu0 %v195
    %v351 = vpop.f32.mrb[0].mxu0
    %v352 = vadd.f32 0.0, %v351
    %v353 = vpop.f32.mrb[0].mxu0
    %v354 = vadd.f32 0.0, %v353
    %355 = vmatprep.mubr.f32.mxu0 0.0
    %356 = vmatmul.mubr.f32.gmra.mrb[0].mxu0 %v196
    %v357 = vpop.f32.mrb[0].mxu0
    %v358 = vadd.f32 0.0, %v357
    %v359 = vpop.f32.mrb[0].mxu0
    %v360 = vadd.f32 0.0, %v359
    %361 = vmatprep.mubr.f32.mxu0 0.0
    %362 = vmatmul.mubr.f32.gmra.mrb[0].mxu0 %v197
    %v363 = vpop.f32.mrb[0].mxu0
    %v364 = vadd.f32 0.0, %v363
    %v365 = vpop.f32.mrb[0].mxu0
    %v366 = vadd.f32 0.0, %v365
    %367 = vmatprep.mubr.f32.mxu0 0.0
    %368 = vmatmul.mubr.f32.gmra.mrb[0].mxu0 %v198
    %v369 = vpop.f32.mrb[0].mxu0
    %v370 = vadd.f32 0.0, %v369
    %v371 = vpop.f32.mrb[0].mxu0
    %v372 = vadd.f32 0.0, %v371
    %373 = vmatprep.mubr.f32.mxu0 0.0
    %374 = vmatmul.mubr.f32.gmra.mrb[0].mxu0 %v199
    %v375 = vpop.f32.mrb[0].mxu0
    %v376 = vadd.f32 0.0, %v375
    %v377 = vpop.f32.mrb[0].mxu0
    %v378 = vadd.f32 0.0, %v377
    %379 = vmatprep.mubr.f32.mxu0 0.0
    %380 = vmatmul.mubr.f32.gmra.mrb[0].mxu0 %v200
    %v381 = vpop.f32.mrb[0].mxu0
    %v382 = vadd.f32 0.0, %v381
    %v383 = vpop.f32.mrb[0].mxu0
    %v384 = vadd.f32 0.0, %v383
    %385 = vdwg.mxu0
    %386 = vmatprep.subr.mxu0 0.0
    %387 = vmatpush1.msra.mxu0 %v203
    %388 = vmatprep.subr.mxu0 0.0
    %389 = vmatpush1.msra.mxu0 %v206
    %390 = vmatprep.subr.mxu0 0.0
    %391 = vmatpush1.msra.mxu0 %v209
    %392 = vmatprep.subr.mxu0 0.0
    %393 = vmatpush1.msra.mxu0 %v212
    %394 = vmatprep.subr.mxu0 0.0
    %395 = vmatpush1.msra.mxu0 %v215
    %396 = vmatprep.subr.mxu0 0.0
    %397 = vmatpush1.msra.mxu0 %v218
    %398 = vmatprep.subr.mxu0 0.0
    %399 = vmatpush1.msra.mxu0 %v221
    %400 = vmatprep.subr.mxu0 0.0
    %401 = vmatpush1.msra.mxu0 %v224
    %402 = vmatprep.subr.mxu0 0.0
    %403 = vmatpush1.msra.mxu0 %v227
    %404 = vmatprep.subr.mxu0 0.0
    %405 = vmatpush1.msra.mxu0 %v230
    %406 = vmatprep.subr.mxu0 0.0
    %407 = vmatpush1.msra.mxu0 %v233
    %408 = vmatprep.subr.mxu0 0.0
    %409 = vmatpush1.msra.mxu0 %v236
    %410 = vmatprep.subr.mxu0 0.0
    %411 = vmatpush1.msra.mxu0 %v239
    %412 = vmatprep.subr.mxu0 0.0
    %413 = vmatpush1.msra.mxu0 %v242
    %414 = vmatprep.subr.mxu0 0.0
    %415 = vmatpush1.msra.mxu0 %v245
    %416 = vmatprep.subr.mxu0 0.0
    %417 = vmatpush1.msra.mxu0 %v248
    %418 = vmatprep.subr.mxu0 0.0
    %419 = vmatpush1.msra.mxu0 0.0
    %420 = vmatprep.subr.mxu0 0.0
    %421 = vmatpush1.msra.mxu0 0.0
    %422 = vmatprep.subr.mxu0 0.0
    %423 = vmatpush1.msra.mxu0 0.0
    %424 = vmatprep.subr.mxu0 0.0
    %425 = vmatpush1.msra.mxu0 0.0
    %426 = vmatprep.subr.mxu0 0.0
    %427 = vmatpush1.msra.mxu0 0.0
    %428 = vmatprep.subr.mxu0 0.0
    %429 = vmatpush1.msra.mxu0 0.0
    %430 = vmatprep.subr.mxu0 0.0
    %431 = vmatpush1.msra.mxu0 0.0
    %432 = vmatprep.subr.mxu0 0.0
    %433 = vmatpush1.msra.mxu0 0.0
    %434 = vmatprep.subr.mxu0 0.0
    %435 = vmatpush1.msra.mxu0 0.0
    %436 = vmatprep.subr.mxu0 0.0
    %437 = vmatpush1.msra.mxu0 0.0
    %438 = vmatprep.subr.mxu0 0.0
    %439 = vmatpush1.msra.mxu0 0.0
    %440 = vmatprep.subr.mxu0 0.0
    %441 = vmatpush1.msra.mxu0 0.0
    %442 = vmatprep.subr.mxu0 0.0
    %443 = vmatpush1.msra.mxu0 0.0
    %444 = vmatprep.subr.mxu0 0.0
    %445 = vmatpush1.msra.mxu0 0.0
    %446 = vmatprep.subr.mxu0 0.0
    %447 = vmatpush1.msra.mxu0 0.0
    %448 = vmatprep.subr.mxu0 0.0
    %449 = vmatpush1.msra.mxu0 0.0
    %450 = vmatprep.mubr.f32.mxu0 0.0
    %451 = vmatmul.mubr.f32.gmra.mrb[0].mxu0 %v189
    %v452 = vpop.f32.mrb[0].mxu0
    %v453 = vadd.f32 0.0, %v452
    %v454 = vpop.f32.mrb[0].mxu0
    %455 = vmatprep.mubr.f32.mxu0 0.0
    %456 = vmatmul.mubr.f32.gmra.mrb[0].mxu0 %v190
    %v457 = vpop.f32.mrb[0].mxu0
    %v458 = vadd.f32 0.0, %v457
    %v459 = vpop.f32.mrb[0].mxu0
    %460 = vmatprep.mubr.f32.mxu0 0.0
    %461 = vmatmul.mubr.f32.gmra.mrb[0].mxu0 %v191
    %v462 = vpop.f32.mrb[0].mxu0
    %v463 = vadd.f32 0.0, %v462
    %v464 = vpop.f32.mrb[0].mxu0
    %465 = vmatprep.mubr.f32.mxu0 0.0
    %466 = vmatmul.mubr.f32.gmra.mrb[0].mxu0 %v192
    %v467 = vpop.f32.mrb[0].mxu0
    %v468 = vadd.f32 0.0, %v467
    %v469 = vpop.f32.mrb[0].mxu0
    %470 = vmatprep.mubr.f32.mxu0 0.0
    %471 = vmatmul.mubr.f32.gmra.mrb[0].mxu0 %v193
    %v472 = vpop.f32.mrb[0].mxu0
    %v473 = vadd.f32 0.0, %v472
    %v474 = vpop.f32.mrb[0].mxu0
    %475 = vmatprep.mubr.f32.mxu0 0.0
    %476 = vmatmul.mubr.f32.gmra.mrb[0].mxu0 %v194
    %v477 = vpop.f32.mrb[0].mxu0
    %v478 = vadd.f32 0.0, %v477
    %v479 = vpop.f32.mrb[0].mxu0
    %480 = vmatprep.mubr.f32.mxu0 0.0
    %481 = vmatmul.mubr.f32.gmra.mrb[0].mxu0 %v195
    %v482 = vpop.f32.mrb[0].mxu0
    %v483 = vadd.f32 0.0, %v482
    %v484 = vpop.f32.mrb[0].mxu0
    %485 = vmatprep.mubr.f32.mxu0 0.0
    %486 = vmatmul.mubr.f32.gmra.mrb[0].mxu0 %v196
    %v487 = vpop.f32.mrb[0].mxu0
    %v488 = vadd.f32 0.0, %v487
    %v489 = vpop.f32.mrb[0].mxu0
    %490 = vmatprep.mubr.f32.mxu0 0.0
    %491 = vmatmul.mubr.f32.gmra.mrb[0].mxu0 %v197
    %v492 = vpop.f32.mrb[0].mxu0
    %v493 = vadd.f32 0.0, %v492
    %v494 = vpop.f32.mrb[0].mxu0
    %495 = vmatprep.mubr.f32.mxu0 0.0
    %496 = vmatmul.mubr.f32.gmra.mrb[0].mxu0 %v198
    %v497 = vpop.f32.mrb[0].mxu0
    %v498 = vadd.f32 0.0, %v497
    %v499 = vpop.f32.mrb[0].mxu0
    %500 = vmatprep.mubr.f32.mxu0 0.0
    %501 = vmatmul.mubr.f32.gmra.mrb[0].mxu0 %v199
    %v502 = vpop.f32.mrb[0].mxu0
    %v503 = vadd.f32 0.0, %v502
    %v504 = vpop.f32.mrb[0].mxu0
    %505 = vmatprep.mubr.f32.mxu0 0.0
    %506 = vmatmul.mubr.f32.gmra.mrb[0].mxu0 %v200
    %v507 = vpop.f32.mrb[0].mxu0
    %v508 = vadd.f32 0.0, %v507
    %v509 = vpop.f32.mrb[0].mxu0
    %510 = vdwg.mxu0
    %v511 = vld [vmem:[%s1] sm:$0xff]
    %v512 = vld [vmem:[#allocation2] sm:$0xff]
    %v513 = vld [vmem:[#allocation2 + $0x8] sm:$0xff]
    %v514 = vld [vmem:[#allocation2 + $0x10] sm:$0xff]
    %v515 = vld [vmem:[#allocation2 + $0x18] sm:$0xff]
    %v516 = vld [vmem:[#allocation2 + $0x20] sm:$0xff]
    %v517 = vld [vmem:[#allocation2 + $0x28] sm:$0xff]
    %v518 = vld [vmem:[#allocation2 + $0x30] sm:$0xff]
    %v519 = vld [vmem:[#allocation2 + $0x38] sm:$0xff]
    %v520 = vld [vmem:[#allocation2 + $0x40] sm:$0xff]
    %v521 = vld [vmem:[#allocation2 + $0x48] sm:$0xff]
    %v522 = vld [vmem:[#allocation2 + $0x50] sm:$0xff]
    %v523 = vld [vmem:[#allocation2 + $0x58] sm:$0xff]
    %v524 = vld [vmem:[#allocation2 + $0x60] sm:$0xff]
    %v525 = vld [vmem:[#allocation2 + $0x68] sm:$0xff]
    %v526 = vld [vmem:[#allocation2 + $0x70] sm:$0xff]
    %v527 = vld [vmem:[#allocation2 + $0x78] sm:$0xff]
    %v528 = vld [vmem:[#allocation2 + $0x80] sm:$0xff]
    %v529 = vld [vmem:[#allocation2 + $0x88] sm:$0xff]
    %v530 = vld [vmem:[#allocation2 + $0x90] sm:$0xff]
    %v531 = vld [vmem:[#allocation2 + $0x98] sm:$0xff]
    %v532 = vld [vmem:[#allocation2 + $0xa0] sm:$0xff]
    %v533 = vld [vmem:[#allocation2 + $0xa8] sm:$0xff]
    %v534 = vld [vmem:[#allocation2 + $0xb0] sm:$0xff]
    %v535 = vld [vmem:[#allocation2 + $0xb8] sm:$0xff]
    %v536 = vld [vmem:[#allocation2 + $0xc0] sm:$0xff]
    %v537 = vld [vmem:[#allocation2 + $0xc8] sm:$0xff]
    %v538 = vld [vmem:[#allocation2 + $0xd0] sm:$0xff]
    %v539 = vld [vmem:[#allocation2 + $0xd8] sm:$0xff]
    %v540 = vld [vmem:[#allocation2 + $0xe0] sm:$0xff]
    %v541 = vld [vmem:[#allocation2 + $0xe8] sm:$0xff]
    %v542 = vld [vmem:[#allocation2 + $0xf0] sm:$0xff]
    %v543 = vld [vmem:[#allocation2 + $0xf8] sm:$0xff]
    %v544 = vld [vmem:[#allocation2 + $0x100] sm:$0xff]
    %v545 = vld [vmem:[#allocation2 + $0x108] sm:$0xff]
    %v546 = vld [vmem:[#allocation2 + $0x110] sm:$0xff]
    %v547 = vld [vmem:[#allocation2 + $0x118] sm:$0xff]
    %v548 = vld [vmem:[#allocation2 + $0x120] sm:$0xff]
    %v549 = vld [vmem:[#allocation2 + $0x128] sm:$0xff]
    %v550 = vld [vmem:[#allocation2 + $0x130] sm:$0xff]
    %v551 = vld [vmem:[#allocation2 + $0x138] sm:$0xff]
    %v552 = vld [vmem:[#allocation2 + $0x140] sm:$0xff]
    %v553 = vld [vmem:[#allocation2 + $0x148] sm:$0xff]
    %v554 = vld [vmem:[#allocation2 + $0x150] sm:$0xff]
    %v555 = vld [vmem:[#allocation2 + $0x158] sm:$0xff]
    %v556 = vld [vmem:[#allocation2 + $0x160] sm:$0xff]
    %v557 = vld [vmem:[#allocation2 + $0x168] sm:$0xff]
    %v558 = vld [vmem:[#allocation2 + $0x170] sm:$0xff]
    %v559 = vld [vmem:[#allocation2 + $0x178] sm:$0xff]
    %s560 = scalar_lea.vmem %s6, 5
    %v561 = vld [vmem:[%s560] sm:$0x1]
    %v563 = vlaneseq
    %v564 = vshrl.u32 %v563, 7
    %v565 = vsub.s32 0, %v564
    %v566 = vrot.slane %v561, %v565
    %568 = vmatprep.subr.mxu0 %v513
    %569 = vmatpush1.msra.mxu0 %v512
    %570 = vmatprep.subr.mxu0 %v516
    %571 = vmatpush1.msra.mxu0 %v515
    %572 = vmatprep.subr.mxu0 %v519
    %573 = vmatpush1.msra.mxu0 %v518
    %574 = vmatprep.subr.mxu0 %v522
    %575 = vmatpush1.msra.mxu0 %v521
    %576 = vmatprep.subr.mxu0 %v525
    %577 = vmatpush1.msra.mxu0 %v524
    %578 = vmatprep.subr.mxu0 %v528
    %579 = vmatpush1.msra.mxu0 %v527
    %580 = vmatprep.subr.mxu0 %v531
    %581 = vmatpush1.msra.mxu0 %v530
    %582 = vmatprep.subr.mxu0 %v534
    %583 = vmatpush1.msra.mxu0 %v533
    %584 = vmatprep.subr.mxu0 %v537
    %585 = vmatpush1.msra.mxu0 %v536
    %586 = vmatprep.subr.mxu0 %v540
    %587 = vmatpush1.msra.mxu0 %v539
    %588 = vmatprep.subr.mxu0 %v543
    %589 = vmatpush1.msra.mxu0 %v542
    %590 = vmatprep.subr.mxu0 %v546
    %591 = vmatpush1.msra.mxu0 %v545
    %592 = vmatprep.subr.mxu0 %v549
    %593 = vmatpush1.msra.mxu0 %v548
    %594 = vmatprep.subr.mxu0 %v552
    %595 = vmatpush1.msra.mxu0 %v551
    %596 = vmatprep.subr.mxu0 %v555
    %597 = vmatpush1.msra.mxu0 %v554
    %598 = vmatprep.subr.mxu0 %v558
    %599 = vmatpush1.msra.mxu0 %v557
    %600 = vmatprep.subr.mxu0 0.0
    %601 = vmatpush1.msra.mxu0 0.0
    %602 = vmatprep.subr.mxu0 0.0
    %603 = vmatpush1.msra.mxu0 0.0
    %604 = vmatprep.subr.mxu0 0.0
    %605 = vmatpush1.msra.mxu0 0.0
    %606 = vmatprep.subr.mxu0 0.0
    %607 = vmatpush1.msra.mxu0 0.0
    %608 = vmatprep.subr.mxu0 0.0
    %609 = vmatpush1.msra.mxu0 0.0
    %610 = vmatprep.subr.mxu0 0.0
    %611 = vmatpush1.msra.mxu0 0.0
    %612 = vmatprep.subr.mxu0 0.0
    %613 = vmatpush1.msra.mxu0 0.0
    %614 = vmatprep.subr.mxu0 0.0
    %615 = vmatpush1.msra.mxu0 0.0
    %616 = vmatprep.subr.mxu0 0.0
    %617 = vmatpush1.msra.mxu0 0.0
    %618 = vmatprep.subr.mxu0 0.0
    %619 = vmatpush1.msra.mxu0 0.0
    %620 = vmatprep.subr.mxu0 0.0
    %621 = vmatpush1.msra.mxu0 0.0
    %622 = vmatprep.subr.mxu0 0.0
    %623 = vmatpush1.msra.mxu0 0.0
    %624 = vmatprep.subr.mxu0 0.0
    %625 = vmatpush1.msra.mxu0 0.0
    %626 = vmatprep.subr.mxu0 0.0
    %627 = vmatpush1.msra.mxu0 0.0
    %628 = vmatprep.subr.mxu0 0.0
    %629 = vmatpush1.msra.mxu0 0.0
    %630 = vmatprep.subr.mxu0 0.0
    %631 = vmatpush1.msra.mxu0 0.0
    %632 = vmatprep.mubr.f32.mxu0 0.0
    %633 = vmatmul.mubr.f32.gmra.mrb[0].mxu0 0.0
    %v634 = vpop.f32.mrb[0].mxu0
    %v635 = vadd.f32 0.0, %v634
    %v636 = vpop.f32.mrb[0].mxu0
    %v637 = vadd.f32 0.0, %v636
    %638 = vdwg.mxu0
    %639 = vmatprep.subr.mxu0 0.0
    %640 = vmatpush1.msra.mxu0 %v514
    %641 = vmatprep.subr.mxu0 0.0
    %642 = vmatpush1.msra.mxu0 %v517
    %643 = vmatprep.subr.mxu0 0.0
    %644 = vmatpush1.msra.mxu0 %v520
    %645 = vmatprep.subr.mxu0 0.0
    %646 = vmatpush1.msra.mxu0 %v523
    %647 = vmatprep.subr.mxu0 0.0
    %648 = vmatpush1.msra.mxu0 %v526
    %649 = vmatprep.subr.mxu0 0.0
    %650 = vmatpush1.msra.mxu0 %v529
    %651 = vmatprep.subr.mxu0 0.0
    %652 = vmatpush1.msra.mxu0 %v532
    %653 = vmatprep.subr.mxu0 0.0
    %654 = vmatpush1.msra.mxu0 %v535
    %655 = vmatprep.subr.mxu0 0.0
    %656 = vmatpush1.msra.mxu0 %v538
    %657 = vmatprep.subr.mxu0 0.0
    %658 = vmatpush1.msra.mxu0 %v541
    %659 = vmatprep.subr.mxu0 0.0
    %660 = vmatpush1.msra.mxu0 %v544
    %661 = vmatprep.subr.mxu0 0.0
    %662 = vmatpush1.msra.mxu0 %v547
    %663 = vmatprep.subr.mxu0 0.0
    %664 = vmatpush1.msra.mxu0 %v550
    %665 = vmatprep.subr.mxu0 0.0
    %666 = vmatpush1.msra.mxu0 %v553
    %667 = vmatprep.subr.mxu0 0.0
    %668 = vmatpush1.msra.mxu0 %v556
    %669 = vmatprep.subr.mxu0 0.0
    %670 = vmatpush1.msra.mxu0 %v559
    %671 = vmatprep.subr.mxu0 0.0
    %672 = vmatpush1.msra.mxu0 0.0
    %673 = vmatprep.subr.mxu0 0.0
    %674 = vmatpush1.msra.mxu0 0.0
    %675 = vmatprep.subr.mxu0 0.0
    %676 = vmatpush1.msra.mxu0 0.0
    %677 = vmatprep.subr.mxu0 0.0
    %678 = vmatpush1.msra.mxu0 0.0
    %679 = vmatprep.subr.mxu0 0.0
    %680 = vmatpush1.msra.mxu0 0.0
    %681 = vmatprep.subr.mxu0 0.0
    %682 = vmatpush1.msra.mxu0 0.0
    %683 = vmatprep.subr.mxu0 0.0
    %684 = vmatpush1.msra.mxu0 0.0
    %685 = vmatprep.subr.mxu0 0.0
    %686 = vmatpush1.msra.mxu0 0.0
    %687 = vmatprep.subr.mxu0 0.0
    %688 = vmatpush1.msra.mxu0 0.0
    %689 = vmatprep.subr.mxu0 0.0
    %690 = vmatpush1.msra.mxu0 0.0
    %691 = vmatprep.subr.mxu0 0.0
    %692 = vmatpush1.msra.mxu0 0.0
    %693 = vmatprep.subr.mxu0 0.0
    %694 = vmatpush1.msra.mxu0 0.0
    %695 = vmatprep.subr.mxu0 0.0
    %696 = vmatpush1.msra.mxu0 0.0
    %697 = vmatprep.subr.mxu0 0.0
    %698 = vmatpush1.msra.mxu0 0.0
    %699 = vmatprep.subr.mxu0 0.0
    %700 = vmatpush1.msra.mxu0 0.0
    %701 = vmatprep.subr.mxu0 0.0
    %702 = vmatpush1.msra.mxu0 0.0
    %703 = vmatprep.mubr.f32.mxu0 0.0
    %704 = vmatmul.mubr.f32.gmra.mrb[0].mxu0 0.0
    %v705 = vpop.f32.mrb[0].mxu0
    %v706 = vadd.f32 0.0, %v705
    %v707 = vpop.f32.mrb[0].mxu0
    %708 = vdwg.mxu0
    %v709 = vadd.f32 %v316, %v635
    %v710 = vmul.f32 %v709, 0.5
    %v711 = vtanh.pop %v710
    %v712 = vmul.f32 %v711, 0.5
    %v713 = vadd.f32 %v712, 0.5
    %v714 = vadd.f32 %v318, %v637
    %v715 = vmul.f32 %v714, 0.5
    %v716 = vtanh.pop %v715
    %v717 = vmul.f32 %v716, 0.5
    %v718 = vadd.f32 %v717, 0.5
    %v719 = vadd.f32 %v706, %v566
    %v720 = vmul.f32 %v713, %v719
    %v721 = vadd.f32 %v453, %v720
    %v722 = vtanh.pop %v721
    %v723 = vsub.f32 0.0, %v722
    %v724 = vmul.f32 %v718, %v723
    %v725 = vadd.f32 %v722, %v724
    %vm726 = vcmp.gt.s32.totalorder %v511, 0
    %v727 = vsel %vm726, %v725, 0.0
    %v728 = vadd.f32 %v727, 0.0
    %v729 = vsel %vm726, %v725, -inf
    %730 = vmatprep.subr.mxu0 %v513
    %731 = vmatpush1.msra.mxu0 %v512
    %732 = vmatprep.subr.mxu0 %v516
    %733 = vmatpush1.msra.mxu0 %v515
    %734 = vmatprep.subr.mxu0 %v519
    %735 = vmatpush1.msra.mxu0 %v518
    %736 = vmatprep.subr.mxu0 %v522
    %737 = vmatpush1.msra.mxu0 %v521
    %738 = vmatprep.subr.mxu0 %v525
    %739 = vmatpush1.msra.mxu0 %v524
    %740 = vmatprep.subr.mxu0 %v528
    %741 = vmatpush1.msra.mxu0 %v527
    %742 = vmatprep.subr.mxu0 %v531
    %743 = vmatpush1.msra.mxu0 %v530
    %744 = vmatprep.subr.mxu0 %v534
    %745 = vmatpush1.msra.mxu0 %v533
    %746 = vmatprep.subr.mxu0 %v537
    %747 = vmatpush1.msra.mxu0 %v536
    %748 = vmatprep.subr.mxu0 %v540
    %749 = vmatpush1.msra.mxu0 %v539
    %750 = vmatprep.subr.mxu0 %v543
    %751 = vmatpush1.msra.mxu0 %v542
    %752 = vmatprep.subr.mxu0 %v546
    %753 = vmatpush1.msra.mxu0 %v545
    %754 = vmatprep.subr.mxu0 %v549
    %755 = vmatpush1.msra.mxu0 %v548
    %756 = vmatprep.subr.mxu0 %v552
    %757 = vmatpush1.msra.mxu0 %v551
    %758 = vmatprep.subr.mxu0 %v555
    %759 = vmatpush1.msra.mxu0 %v554
    %760 = vmatprep.subr.mxu0 %v558
    %761 = vmatpush1.msra.mxu0 %v557
    %762 = vmatprep.subr.mxu0 0.0
    %763 = vmatpush1.msra.mxu0 0.0
    %764 = vmatprep.subr.mxu0 0.0
    %765 = vmatpush1.msra.mxu0 0.0
    %766 = vmatprep.subr.mxu0 0.0
    %767 = vmatpush1.msra.mxu0 0.0
    %768 = vmatprep.subr.mxu0 0.0
    %769 = vmatpush1.msra.mxu0 0.0
    %770 = vmatprep.subr.mxu0 0.0
    %771 = vmatpush1.msra.mxu0 0.0
    %772 = vmatprep.subr.mxu0 0.0
    %773 = vmatpush1.msra.mxu0 0.0
    %774 = vmatprep.subr.mxu0 0.0
    %775 = vmatpush1.msra.mxu0 0.0
    %776 = vmatprep.subr.mxu0 0.0
    %777 = vmatpush1.msra.mxu0 0.0
    %778 = vmatprep.subr.mxu0 0.0
    %779 = vmatpush1.msra.mxu0 0.0
    %780 = vmatprep.subr.mxu0 0.0
    %781 = vmatpush1.msra.mxu0 0.0
    %782 = vmatprep.subr.mxu0 0.0
    %783 = vmatpush1.msra.mxu0 0.0
    %784 = vmatprep.subr.mxu0 0.0
    %785 = vmatpush1.msra.mxu0 0.0
    %786 = vmatprep.subr.mxu0 0.0
    %787 = vmatpush1.msra.mxu0 0.0
    %788 = vmatprep.subr.mxu0 0.0
    %789 = vmatpush1.msra.mxu0 0.0
    %790 = vmatprep.subr.mxu0 0.0
    %791 = vmatpush1.msra.mxu0 0.0
    %792 = vmatprep.subr.mxu0 0.0
    %793 = vmatpush1.msra.mxu0 0.0
    %794 = vmatprep.mubr.f32.mxu0 0.0
    %795 = vmatmul.mubr.f32.gmra.mrb[0].mxu0 %v727
    %v796 = vpop.f32.mrb[0].mxu0
    %v797 = vadd.f32 0.0, %v796
    %v798 = vpop.f32.mrb[0].mxu0
    %v799 = vadd.f32 0.0, %v798
    %800 = vdwg.mxu0
    %801 = vmatprep.subr.mxu0 0.0
    %802 = vmatpush1.msra.mxu0 %v514
    %803 = vmatprep.subr.mxu0 0.0
    %804 = vmatpush1.msra.mxu0 %v517
    %805 = vmatprep.subr.mxu0 0.0
    %806 = vmatpush1.msra.mxu0 %v520
    %807 = vmatprep.subr.mxu0 0.0
    %808 = vmatpush1.msra.mxu0 %v523
    %809 = vmatprep.subr.mxu0 0.0
    %810 = vmatpush1.msra.mxu0 %v526
    %811 = vmatprep.subr.mxu0 0.0
    %812 = vmatpush1.msra.mxu0 %v529
    %813 = vmatprep.subr.mxu0 0.0
    %814 = vmatpush1.msra.mxu0 %v532
    %815 = vmatprep.subr.mxu0 0.0
    %816 = vmatpush1.msra.mxu0 %v535
    %817 = vmatprep.subr.mxu0 0.0
    %818 = vmatpush1.msra.mxu0 %v538
    %819 = vmatprep.subr.mxu0 0.0
    %820 = vmatpush1.msra.mxu0 %v541
    %821 = vmatprep.subr.mxu0 0.0
    %822 = vmatpush1.msra.mxu0 %v544
    %823 = vmatprep.subr.mxu0 0.0
    %824 = vmatpush1.msra.mxu0 %v547
    %825 = vmatprep.subr.mxu0 0.0
    %826 = vmatpush1.msra.mxu0 %v550
    %827 = vmatprep.subr.mxu0 0.0
    %828 = vmatpush1.msra.mxu0 %v553
    %829 = vmatprep.subr.mxu0 0.0
    %830 = vmatpush1.msra.mxu0 %v556
    %831 = vmatprep.subr.mxu0 0.0
    %832 = vmatpush1.msra.mxu0 %v559
    %833 = vmatprep.subr.mxu0 0.0
    %834 = vmatpush1.msra.mxu0 0.0
    %835 = vmatprep.subr.mxu0 0.0
    %836 = vmatpush1.msra.mxu0 0.0
    %837 = vmatprep.subr.mxu0 0.0
    %838 = vmatpush1.msra.mxu0 0.0
    %839 = vmatprep.subr.mxu0 0.0
    %840 = vmatpush1.msra.mxu0 0.0
    %841 = vmatprep.subr.mxu0 0.0
    %842 = vmatpush1.msra.mxu0 0.0
    %843 = vmatprep.subr.mxu0 0.0
    %844 = vmatpush1.msra.mxu0 0.0
    %845 = vmatprep.subr.mxu0 0.0
    %846 = vmatpush1.msra.mxu0 0.0
    %847 = vmatprep.subr.mxu0 0.0
    %848 = vmatpush1.msra.mxu0 0.0
    %849 = vmatprep.subr.mxu0 0.0
    %850 = vmatpush1.msra.mxu0 0.0
    %851 = vmatprep.subr.mxu0 0.0
    %852 = vmatpush1.msra.mxu0 0.0
    %853 = vmatprep.subr.mxu0 0.0
    %854 = vmatpush1.msra.mxu0 0.0
    %855 = vmatprep.subr.mxu0 0.0
    %856 = vmatpush1.msra.mxu0 0.0
    %857 = vmatprep.subr.mxu0 0.0
    %858 = vmatpush1.msra.mxu0 0.0
    %859 = vmatprep.subr.mxu0 0.0
    %860 = vmatpush1.msra.mxu0 0.0
    %861 = vmatprep.subr.mxu0 0.0
    %862 = vmatpush1.msra.mxu0 0.0
    %863 = vmatprep.subr.mxu0 0.0
    %864 = vmatpush1.msra.mxu0 0.0
    %865 = vmatprep.mubr.f32.mxu0 0.0
    %866 = vmatmul.mubr.f32.gmra.mrb[0].mxu0 %v727
    %v867 = vpop.f32.mrb[0].mxu0
    %v868 = vadd.f32 0.0, %v867
    %v869 = vpop.f32.mrb[0].mxu0
    %870 = vdwg.mxu0
    %v871 = vadd.f32 %v322, %v797
    %v872 = vmul.f32 %v871, 0.5
    %v873 = vtanh.pop %v872
    %v874 = vmul.f32 %v873, 0.5
    %v875 = vadd.f32 %v874, 0.5
    %v876 = vadd.f32 %v324, %v799
    %v877 = vmul.f32 %v876, 0.5
    %v878 = vtanh.pop %v877
    %v879 = vmul.f32 %v878, 0.5
    %v880 = vadd.f32 %v879, 0.5
    %v881 = vadd.f32 %v868, %v566
    %v882 = vmul.f32 %v875, %v881
    %v883 = vadd.f32 %v458, %v882
    %v884 = vtanh.pop %v883
    %v885 = vsub.f32 %v727, %v884
    %v886 = vmul.f32 %v880, %v885
    %v887 = vadd.f32 %v884, %v886
    %vm888 = vcmp.gt.s32.totalorder %v511, 1
    %v889 = vsel %vm888, %v887, %v727
    %v890 = vsel %vm888, %v887, 0.0
    %v891 = vadd.f32 %v728, %v890
    %v892 = vmax.f32 %v729, %v887
    %v893 = vsel %vm888, %v892, %v729
    %894 = vmatprep.subr.mxu0 %v513
    %895 = vmatpush1.msra.mxu0 %v512
    %896 = vmatprep.subr.mxu0 %v516
    %897 = vmatpush1.msra.mxu0 %v515
    %898 = vmatprep.subr.mxu0 %v519
    %899 = vmatpush1.msra.mxu0 %v518
    %900 = vmatprep.subr.mxu0 %v522
    %901 = vmatpush1.msra.mxu0 %v521
    %902 = vmatprep.subr.mxu0 %v525
    %903 = vmatpush1.msra.mxu0 %v524
    %904 = vmatprep.subr.mxu0 %v528
    %905 = vmatpush1.msra.mxu0 %v527
    %906 = vmatprep.subr.mxu0 %v531
    %907 = vmatpush1.msra.mxu0 %v530
    %908 = vmatprep.subr.mxu0 %v534
    %909 = vmatpush1.msra.mxu0 %v533
    %910 = vmatprep.subr.mxu0 %v537
    %911 = vmatpush1.msra.mxu0 %v536
    %912 = vmatprep.subr.mxu0 %v540
    %913 = vmatpush1.msra.mxu0 %v539
    %914 = vmatprep.subr.mxu0 %v543
    %915 = vmatpush1.msra.mxu0 %v542
    %916 = vmatprep.subr.mxu0 %v546
    %917 = vmatpush1.msra.mxu0 %v545
    %918 = vmatprep.subr.mxu0 %v549
    %919 = vmatpush1.msra.mxu0 %v548
    %920 = vmatprep.subr.mxu0 %v552
    %921 = vmatpush1.msra.mxu0 %v551
    %922 = vmatprep.subr.mxu0 %v555
    %923 = vmatpush1.msra.mxu0 %v554
    %924 = vmatprep.subr.mxu0 %v558
    %925 = vmatpush1.msra.mxu0 %v557
    %926 = vmatprep.subr.mxu0 0.0
    %927 = vmatpush1.msra.mxu0 0.0
    %928 = vmatprep.subr.mxu0 0.0
    %929 = vmatpush1.msra.mxu0 0.0
    %930 = vmatprep.subr.mxu0 0.0
    %931 = vmatpush1.msra.mxu0 0.0
    %932 = vmatprep.subr.mxu0 0.0
    %933 = vmatpush1.msra.mxu0 0.0
    %934 = vmatprep.subr.mxu0 0.0
    %935 = vmatpush1.msra.mxu0 0.0
    %936 = vmatprep.subr.mxu0 0.0
    %937 = vmatpush1.msra.mxu0 0.0
    %938 = vmatprep.subr.mxu0 0.0
    %939 = vmatpush1.msra.mxu0 0.0
    %940 = vmatprep.subr.mxu0 0.0
    %941 = vmatpush1.msra.mxu0 0.0
    %942 = vmatprep.subr.mxu0 0.0
    %943 = vmatpush1.msra.mxu0 0.0
    %944 = vmatprep.subr.mxu0 0.0
    %945 = vmatpush1.msra.mxu0 0.0
    %946 = vmatprep.subr.mxu0 0.0
    %947 = vmatpush1.msra.mxu0 0.0
    %948 = vmatprep.subr.mxu0 0.0
    %949 = vmatpush1.msra.mxu0 0.0
    %950 = vmatprep.subr.mxu0 0.0
    %951 = vmatpush1.msra.mxu0 0.0
    %952 = vmatprep.subr.mxu0 0.0
    %953 = vmatpush1.msra.mxu0 0.0
    %954 = vmatprep.subr.mxu0 0.0
    %955 = vmatpush1.msra.mxu0 0.0
    %956 = vmatprep.subr.mxu0 0.0
    %957 = vmatpush1.msra.mxu0 0.0
    %958 = vmatprep.mubr.f32.mxu0 0.0
    %959 = vmatmul.mubr.f32.gmra.mrb[0].mxu0 %v889
    %v960 = vpop.f32.mrb[0].mxu0
    %v961 = vadd.f32 0.0, %v960
    %v962 = vpop.f32.mrb[0].mxu0
    %v963 = vadd.f32 0.0, %v962
    %964 = vdwg.mxu0
    %965 = vmatprep.subr.mxu0 0.0
    %966 = vmatpush1.msra.mxu0 %v514
    %967 = vmatprep.subr.mxu0 0.0
    %968 = vmatpush1.msra.mxu0 %v517
    %969 = vmatprep.subr.mxu0 0.0
    %970 = vmatpush1.msra.mxu0 %v520
    %971 = vmatprep.subr.mxu0 0.0
    %972 = vmatpush1.msra.mxu0 %v523
    %973 = vmatprep.subr.mxu0 0.0
    %974 = vmatpush1.msra.mxu0 %v526
    %975 = vmatprep.subr.mxu0 0.0
    %976 = vmatpush1.msra.mxu0 %v529
    %977 = vmatprep.subr.mxu0 0.0
    %978 = vmatpush1.msra.mxu0 %v532
    %979 = vmatprep.subr.mxu0 0.0
    %980 = vmatpush1.msra.mxu0 %v535
    %981 = vmatprep.subr.mxu0 0.0
    %982 = vmatpush1.msra.mxu0 %v538
    %983 = vmatprep.subr.mxu0 0.0
    %984 = vmatpush1.msra.mxu0 %v541
    %985 = vmatprep.subr.mxu0 0.0
    %986 = vmatpush1.msra.mxu0 %v544
    %987 = vmatprep.subr.mxu0 0.0
    %988 = vmatpush1.msra.mxu0 %v547
    %989 = vmatprep.subr.mxu0 0.0
    %990 = vmatpush1.msra.mxu0 %v550
    %991 = vmatprep.subr.mxu0 0.0
    %992 = vmatpush1.msra.mxu0 %v553
    %993 = vmatprep.subr.mxu0 0.0
    %994 = vmatpush1.msra.mxu0 %v556
    %995 = vmatprep.subr.mxu0 0.0
    %996 = vmatpush1.msra.mxu0 %v559
    %997 = vmatprep.subr.mxu0 0.0
    %998 = vmatpush1.msra.mxu0 0.0
    %999 = vmatprep.subr.mxu0 0.0
    %1000 = vmatpush1.msra.mxu0 0.0
    %1001 = vmatprep.subr.mxu0 0.0
    %1002 = vmatpush1.msra.mxu0 0.0
    %1003 = vmatprep.subr.mxu0 0.0
    %1004 = vmatpush1.msra.mxu0 0.0
    %1005 = vmatprep.subr.mxu0 0.0
    %1006 = vmatpush1.msra.mxu0 0.0
    %1007 = vmatprep.subr.mxu0 0.0
    %1008 = vmatpush1.msra.mxu0 0.0
    %1009 = vmatprep.subr.mxu0 0.0
    %1010 = vmatpush1.msra.mxu0 0.0
    %1011 = vmatprep.subr.mxu0 0.0
    %1012 = vmatpush1.msra.mxu0 0.0
    %1013 = vmatprep.subr.mxu0 0.0
    %1014 = vmatpush1.msra.mxu0 0.0
    %1015 = vmatprep.subr.mxu0 0.0
    %1016 = vmatpush1.msra.mxu0 0.0
    %1017 = vmatprep.subr.mxu0 0.0
    %1018 = vmatpush1.msra.mxu0 0.0
    %1019 = vmatprep.subr.mxu0 0.0
    %1020 = vmatpush1.msra.mxu0 0.0
    %1021 = vmatprep.subr.mxu0 0.0
    %1022 = vmatpush1.msra.mxu0 0.0
    %1023 = vmatprep.subr.mxu0 0.0
    %1024 = vmatpush1.msra.mxu0 0.0
    %1025 = vmatprep.subr.mxu0 0.0
    %1026 = vmatpush1.msra.mxu0 0.0
    %1027 = vmatprep.subr.mxu0 0.0
    %1028 = vmatpush1.msra.mxu0 0.0
    %1029 = vmatprep.mubr.f32.mxu0 0.0
    %1030 = vmatmul.mubr.f32.gmra.mrb[0].mxu0 %v889
    %v1031 = vpop.f32.mrb[0].mxu0
    %v1032 = vadd.f32 0.0, %v1031
    %v1033 = vpop.f32.mrb[0].mxu0
    %1034 = vdwg.mxu0
    %v1035 = vadd.f32 %v328, %v961
    %v1036 = vmul.f32 %v1035, 0.5
    %v1037 = vtanh.pop %v1036
    %v1038 = vmul.f32 %v1037, 0.5
    %v1039 = vadd.f32 %v1038, 0.5
    %v1040 = vadd.f32 %v330, %v963
    %v1041 = vmul.f32 %v1040, 0.5
    %v1042 = vtanh.pop %v1041
    %v1043 = vmul.f32 %v1042, 0.5
    %v1044 = vadd.f32 %v1043, 0.5
    %v1045 = vadd.f32 %v1032, %v566
    %v1046 = vmul.f32 %v1039, %v1045
    %v1047 = vadd.f32 %v463, %v1046
    %v1048 = vtanh.pop %v1047
    %v1049 = vsub.f32 %v889, %v1048
    %v1050 = vmul.f32 %v1044, %v1049
    %v1051 = vadd.f32 %v1048, %v1050
    %vm1052 = vcmp.gt.s32.totalorder %v511, 2
    %v1053 = vsel %vm1052, %v1051, %v889
    %v1054 = vsel %vm1052, %v1051, 0.0
    %v1055 = vadd.f32 %v891, %v1054
    %v1056 = vmax.f32 %v893, %v1051
    %v1057 = vsel %vm1052, %v1056, %v893
    %1058 = vmatprep.subr.mxu0 %v513
    %1059 = vmatpush1.msra.mxu0 %v512
    %1060 = vmatprep.subr.mxu0 %v516
    %1061 = vmatpush1.msra.mxu0 %v515
    %1062 = vmatprep.subr.mxu0 %v519
    %1063 = vmatpush1.msra.mxu0 %v518
    %1064 = vmatprep.subr.mxu0 %v522
    %1065 = vmatpush1.msra.mxu0 %v521
    %1066 = vmatprep.subr.mxu0 %v525
    %1067 = vmatpush1.msra.mxu0 %v524
    %1068 = vmatprep.subr.mxu0 %v528
    %1069 = vmatpush1.msra.mxu0 %v527
    %1070 = vmatprep.subr.mxu0 %v531
    %1071 = vmatpush1.msra.mxu0 %v530
    %1072 = vmatprep.subr.mxu0 %v534
    %1073 = vmatpush1.msra.mxu0 %v533
    %1074 = vmatprep.subr.mxu0 %v537
    %1075 = vmatpush1.msra.mxu0 %v536
    %1076 = vmatprep.subr.mxu0 %v540
    %1077 = vmatpush1.msra.mxu0 %v539
    %1078 = vmatprep.subr.mxu0 %v543
    %1079 = vmatpush1.msra.mxu0 %v542
    %1080 = vmatprep.subr.mxu0 %v546
    %1081 = vmatpush1.msra.mxu0 %v545
    %1082 = vmatprep.subr.mxu0 %v549
    %1083 = vmatpush1.msra.mxu0 %v548
    %1084 = vmatprep.subr.mxu0 %v552
    %1085 = vmatpush1.msra.mxu0 %v551
    %1086 = vmatprep.subr.mxu0 %v555
    %1087 = vmatpush1.msra.mxu0 %v554
    %1088 = vmatprep.subr.mxu0 %v558
    %1089 = vmatpush1.msra.mxu0 %v557
    %1090 = vmatprep.subr.mxu0 0.0
    %1091 = vmatpush1.msra.mxu0 0.0
    %1092 = vmatprep.subr.mxu0 0.0
    %1093 = vmatpush1.msra.mxu0 0.0
    %1094 = vmatprep.subr.mxu0 0.0
    %1095 = vmatpush1.msra.mxu0 0.0
    %1096 = vmatprep.subr.mxu0 0.0
    %1097 = vmatpush1.msra.mxu0 0.0
    %1098 = vmatprep.subr.mxu0 0.0
    %1099 = vmatpush1.msra.mxu0 0.0
    %1100 = vmatprep.subr.mxu0 0.0
    %1101 = vmatpush1.msra.mxu0 0.0
    %1102 = vmatprep.subr.mxu0 0.0
    %1103 = vmatpush1.msra.mxu0 0.0
    %1104 = vmatprep.subr.mxu0 0.0
    %1105 = vmatpush1.msra.mxu0 0.0
    %1106 = vmatprep.subr.mxu0 0.0
    %1107 = vmatpush1.msra.mxu0 0.0
    %1108 = vmatprep.subr.mxu0 0.0
    %1109 = vmatpush1.msra.mxu0 0.0
    %1110 = vmatprep.subr.mxu0 0.0
    %1111 = vmatpush1.msra.mxu0 0.0
    %1112 = vmatprep.subr.mxu0 0.0
    %1113 = vmatpush1.msra.mxu0 0.0
    %1114 = vmatprep.subr.mxu0 0.0
    %1115 = vmatpush1.msra.mxu0 0.0
    %1116 = vmatprep.subr.mxu0 0.0
    %1117 = vmatpush1.msra.mxu0 0.0
    %1118 = vmatprep.subr.mxu0 0.0
    %1119 = vmatpush1.msra.mxu0 0.0
    %1120 = vmatprep.subr.mxu0 0.0
    %1121 = vmatpush1.msra.mxu0 0.0
    %1122 = vmatprep.mubr.f32.mxu0 0.0
    %1123 = vmatmul.mubr.f32.gmra.mrb[0].mxu0 %v1053
    %v1124 = vpop.f32.mrb[0].mxu0
    %v1125 = vadd.f32 0.0, %v1124
    %v1126 = vpop.f32.mrb[0].mxu0
    %v1127 = vadd.f32 0.0, %v1126
    %1128 = vdwg.mxu0
    %1129 = vmatprep.subr.mxu0 0.0
    %1130 = vmatpush1.msra.mxu0 %v514
    %1131 = vmatprep.subr.mxu0 0.0
    %1132 = vmatpush1.msra.mxu0 %v517
    %1133 = vmatprep.subr.mxu0 0.0
    %1134 = vmatpush1.msra.mxu0 %v520
    %1135 = vmatprep.subr.mxu0 0.0
    %1136 = vmatpush1.msra.mxu0 %v523
    %1137 = vmatprep.subr.mxu0 0.0
    %1138 = vmatpush1.msra.mxu0 %v526
    %1139 = vmatprep.subr.mxu0 0.0
    %1140 = vmatpush1.msra.mxu0 %v529
    %1141 = vmatprep.subr.mxu0 0.0
    %1142 = vmatpush1.msra.mxu0 %v532
    %1143 = vmatprep.subr.mxu0 0.0
    %1144 = vmatpush1.msra.mxu0 %v535
    %1145 = vmatprep.subr.mxu0 0.0
    %1146 = vmatpush1.msra.mxu0 %v538
    %1147 = vmatprep.subr.mxu0 0.0
    %1148 = vmatpush1.msra.mxu0 %v541
    %1149 = vmatprep.subr.mxu0 0.0
    %1150 = vmatpush1.msra.mxu0 %v544
    %1151 = vmatprep.subr.mxu0 0.0
    %1152 = vmatpush1.msra.mxu0 %v547
    %1153 = vmatprep.subr.mxu0 0.0
    %1154 = vmatpush1.msra.mxu0 %v550
    %1155 = vmatprep.subr.mxu0 0.0
    %1156 = vmatpush1.msra.mxu0 %v553
    %1157 = vmatprep.subr.mxu0 0.0
    %1158 = vmatpush1.msra.mxu0 %v556
    %1159 = vmatprep.subr.mxu0 0.0
    %1160 = vmatpush1.msra.mxu0 %v559
    %1161 = vmatprep.subr.mxu0 0.0
    %1162 = vmatpush1.msra.mxu0 0.0
    %1163 = vmatprep.subr.mxu0 0.0
    %1164 = vmatpush1.msra.mxu0 0.0
    %1165 = vmatprep.subr.mxu0 0.0
    %1166 = vmatpush1.msra.mxu0 0.0
    %1167 = vmatprep.subr.mxu0 0.0
    %1168 = vmatpush1.msra.mxu0 0.0
    %1169 = vmatprep.subr.mxu0 0.0
    %1170 = vmatpush1.msra.mxu0 0.0
    %1171 = vmatprep.subr.mxu0 0.0
    %1172 = vmatpush1.msra.mxu0 0.0
    %1173 = vmatprep.subr.mxu0 0.0
    %1174 = vmatpush1.msra.mxu0 0.0
    %1175 = vmatprep.subr.mxu0 0.0
    %1176 = vmatpush1.msra.mxu0 0.0
    %1177 = vmatprep.subr.mxu0 0.0
    %1178 = vmatpush1.msra.mxu0 0.0
    %1179 = vmatprep.subr.mxu0 0.0
    %1180 = vmatpush1.msra.mxu0 0.0
    %1181 = vmatprep.subr.mxu0 0.0
    %1182 = vmatpush1.msra.mxu0 0.0
    %1183 = vmatprep.subr.mxu0 0.0
    %1184 = vmatpush1.msra.mxu0 0.0
    %1185 = vmatprep.subr.mxu0 0.0
    %1186 = vmatpush1.msra.mxu0 0.0
    %1187 = vmatprep.subr.mxu0 0.0
    %1188 = vmatpush1.msra.mxu0 0.0
    %1189 = vmatprep.subr.mxu0 0.0
    %1190 = vmatpush1.msra.mxu0 0.0
    %1191 = vmatprep.subr.mxu0 0.0
    %1192 = vmatpush1.msra.mxu0 0.0
    %1193 = vmatprep.mubr.f32.mxu0 0.0
    %1194 = vmatmul.mubr.f32.gmra.mrb[0].mxu0 %v1053
    %v1195 = vpop.f32.mrb[0].mxu0
    %v1196 = vadd.f32 0.0, %v1195
    %v1197 = vpop.f32.mrb[0].mxu0
    %1198 = vdwg.mxu0
    %v1199 = vadd.f32 %v334, %v1125
    %v1200 = vmul.f32 %v1199, 0.5
    %v1201 = vtanh.pop %v1200
    %v1202 = vmul.f32 %v1201, 0.5
    %v1203 = vadd.f32 %v1202, 0.5
    %v1204 = vadd.f32 %v336, %v1127
    %v1205 = vmul.f32 %v1204, 0.5
    %v1206 = vtanh.pop %v1205
    %v1207 = vmul.f32 %v1206, 0.5
    %v1208 = vadd.f32 %v1207, 0.5
    %v1209 = vadd.f32 %v1196, %v566
    %v1210 = vmul.f32 %v1203, %v1209
    %v1211 = vadd.f32 %v468, %v1210
    %v1212 = vtanh.pop %v1211
    %v1213 = vsub.f32 %v1053, %v1212
    %v1214 = vmul.f32 %v1208, %v1213
    %v1215 = vadd.f32 %v1212, %v1214
    %vm1216 = vcmp.gt.s32.totalorder %v511, 3
    %v1217 = vsel %vm1216, %v1215, %v1053
    %v1218 = vsel %vm1216, %v1215, 0.0
    %v1219 = vadd.f32 %v1055, %v1218
    %v1220 = vmax.f32 %v1057, %v1215
    %v1221 = vsel %vm1216, %v1220, %v1057
    %1222 = vmatprep.subr.mxu0 %v513
    %1223 = vmatpush1.msra.mxu0 %v512
    %1224 = vmatprep.subr.mxu0 %v516
    %1225 = vmatpush1.msra.mxu0 %v515
    %1226 = vmatprep.subr.mxu0 %v519
    %1227 = vmatpush1.msra.mxu0 %v518
    %1228 = vmatprep.subr.mxu0 %v522
    %1229 = vmatpush1.msra.mxu0 %v521
    %1230 = vmatprep.subr.mxu0 %v525
    %1231 = vmatpush1.msra.mxu0 %v524
    %1232 = vmatprep.subr.mxu0 %v528
    %1233 = vmatpush1.msra.mxu0 %v527
    %1234 = vmatprep.subr.mxu0 %v531
    %1235 = vmatpush1.msra.mxu0 %v530
    %1236 = vmatprep.subr.mxu0 %v534
    %1237 = vmatpush1.msra.mxu0 %v533
    %1238 = vmatprep.subr.mxu0 %v537
    %1239 = vmatpush1.msra.mxu0 %v536
    %1240 = vmatprep.subr.mxu0 %v540
    %1241 = vmatpush1.msra.mxu0 %v539
    %1242 = vmatprep.subr.mxu0 %v543
    %1243 = vmatpush1.msra.mxu0 %v542
    %1244 = vmatprep.subr.mxu0 %v546
    %1245 = vmatpush1.msra.mxu0 %v545
    %1246 = vmatprep.subr.mxu0 %v549
    %1247 = vmatpush1.msra.mxu0 %v548
    %1248 = vmatprep.subr.mxu0 %v552
    %1249 = vmatpush1.msra.mxu0 %v551
    %1250 = vmatprep.subr.mxu0 %v555
    %1251 = vmatpush1.msra.mxu0 %v554
    %1252 = vmatprep.subr.mxu0 %v558
    %1253 = vmatpush1.msra.mxu0 %v557
    %1254 = vmatprep.subr.mxu0 0.0
    %1255 = vmatpush1.msra.mxu0 0.0
    %1256 = vmatprep.subr.mxu0 0.0
    %1257 = vmatpush1.msra.mxu0 0.0
    %1258 = vmatprep.subr.mxu0 0.0
    %1259 = vmatpush1.msra.mxu0 0.0
    %1260 = vmatprep.subr.mxu0 0.0
    %1261 = vmatpush1.msra.mxu0 0.0
    %1262 = vmatprep.subr.mxu0 0.0
    %1263 = vmatpush1.msra.mxu0 0.0
    %1264 = vmatprep.subr.mxu0 0.0
    %1265 = vmatpush1.msra.mxu0 0.0
    %1266 = vmatprep.subr.mxu0 0.0
    %1267 = vmatpush1.msra.mxu0 0.0
    %1268 = vmatprep.subr.mxu0 0.0
    %1269 = vmatpush1.msra.mxu0 0.0
    %1270 = vmatprep.subr.mxu0 0.0
    %1271 = vmatpush1.msra.mxu0 0.0
    %1272 = vmatprep.subr.mxu0 0.0
    %1273 = vmatpush1.msra.mxu0 0.0
    %1274 = vmatprep.subr.mxu0 0.0
    %1275 = vmatpush1.msra.mxu0 0.0
    %1276 = vmatprep.subr.mxu0 0.0
    %1277 = vmatpush1.msra.mxu0 0.0
    %1278 = vmatprep.subr.mxu0 0.0
    %1279 = vmatpush1.msra.mxu0 0.0
    %1280 = vmatprep.subr.mxu0 0.0
    %1281 = vmatpush1.msra.mxu0 0.0
    %1282 = vmatprep.subr.mxu0 0.0
    %1283 = vmatpush1.msra.mxu0 0.0
    %1284 = vmatprep.subr.mxu0 0.0
    %1285 = vmatpush1.msra.mxu0 0.0
    %1286 = vmatprep.mubr.f32.mxu0 0.0
    %1287 = vmatmul.mubr.f32.gmra.mrb[0].mxu0 %v1217
    %v1288 = vpop.f32.mrb[0].mxu0
    %v1289 = vadd.f32 0.0, %v1288
    %v1290 = vpop.f32.mrb[0].mxu0
    %v1291 = vadd.f32 0.0, %v1290
    %1292 = vdwg.mxu0
    %1293 = vmatprep.subr.mxu0 0.0
    %1294 = vmatpush1.msra.mxu0 %v514
    %1295 = vmatprep.subr.mxu0 0.0
    %1296 = vmatpush1.msra.mxu0 %v517
    %1297 = vmatprep.subr.mxu0 0.0
    %1298 = vmatpush1.msra.mxu0 %v520
    %1299 = vmatprep.subr.mxu0 0.0
    %1300 = vmatpush1.msra.mxu0 %v523
    %1301 = vmatprep.subr.mxu0 0.0
    %1302 = vmatpush1.msra.mxu0 %v526
    %1303 = vmatprep.subr.mxu0 0.0
    %1304 = vmatpush1.msra.mxu0 %v529
    %1305 = vmatprep.subr.mxu0 0.0
    %1306 = vmatpush1.msra.mxu0 %v532
    %1307 = vmatprep.subr.mxu0 0.0
    %1308 = vmatpush1.msra.mxu0 %v535
    %1309 = vmatprep.subr.mxu0 0.0
    %1310 = vmatpush1.msra.mxu0 %v538
    %1311 = vmatprep.subr.mxu0 0.0
    %1312 = vmatpush1.msra.mxu0 %v541
    %1313 = vmatprep.subr.mxu0 0.0
    %1314 = vmatpush1.msra.mxu0 %v544
    %1315 = vmatprep.subr.mxu0 0.0
    %1316 = vmatpush1.msra.mxu0 %v547
    %1317 = vmatprep.subr.mxu0 0.0
    %1318 = vmatpush1.msra.mxu0 %v550
    %1319 = vmatprep.subr.mxu0 0.0
    %1320 = vmatpush1.msra.mxu0 %v553
    %1321 = vmatprep.subr.mxu0 0.0
    %1322 = vmatpush1.msra.mxu0 %v556
    %1323 = vmatprep.subr.mxu0 0.0
    %1324 = vmatpush1.msra.mxu0 %v559
    %1325 = vmatprep.subr.mxu0 0.0
    %1326 = vmatpush1.msra.mxu0 0.0
    %1327 = vmatprep.subr.mxu0 0.0
    %1328 = vmatpush1.msra.mxu0 0.0
    %1329 = vmatprep.subr.mxu0 0.0
    %1330 = vmatpush1.msra.mxu0 0.0
    %1331 = vmatprep.subr.mxu0 0.0
    %1332 = vmatpush1.msra.mxu0 0.0
    %1333 = vmatprep.subr.mxu0 0.0
    %1334 = vmatpush1.msra.mxu0 0.0
    %1335 = vmatprep.subr.mxu0 0.0
    %1336 = vmatpush1.msra.mxu0 0.0
    %1337 = vmatprep.subr.mxu0 0.0
    %1338 = vmatpush1.msra.mxu0 0.0
    %1339 = vmatprep.subr.mxu0 0.0
    %1340 = vmatpush1.msra.mxu0 0.0
    %1341 = vmatprep.subr.mxu0 0.0
    %1342 = vmatpush1.msra.mxu0 0.0
    %1343 = vmatprep.subr.mxu0 0.0
    %1344 = vmatpush1.msra.mxu0 0.0
    %1345 = vmatprep.subr.mxu0 0.0
    %1346 = vmatpush1.msra.mxu0 0.0
    %1347 = vmatprep.subr.mxu0 0.0
    %1348 = vmatpush1.msra.mxu0 0.0
    %1349 = vmatprep.subr.mxu0 0.0
    %1350 = vmatpush1.msra.mxu0 0.0
    %1351 = vmatprep.subr.mxu0 0.0
    %1352 = vmatpush1.msra.mxu0 0.0
    %1353 = vmatprep.subr.mxu0 0.0
    %1354 = vmatpush1.msra.mxu0 0.0
    %1355 = vmatprep.subr.mxu0 0.0
    %1356 = vmatpush1.msra.mxu0 0.0
    %1357 = vmatprep.mubr.f32.mxu0 0.0
    %1358 = vmatmul.mubr.f32.gmra.mrb[0].mxu0 %v1217
    %v1359 = vpop.f32.mrb[0].mxu0
    %v1360 = vadd.f32 0.0, %v1359
    %v1361 = vpop.f32.mrb[0].mxu0
    %1362 = vdwg.mxu0
    %v1363 = vadd.f32 %v340, %v1289
    %v1364 = vmul.f32 %v1363, 0.5
    %v1365 = vtanh.pop %v1364
    %v1366 = vmul.f32 %v1365, 0.5
    %v1367 = vadd.f32 %v1366, 0.5
    %v1368 = vadd.f32 %v342, %v1291
    %v1369 = vmul.f32 %v1368, 0.5
    %v1370 = vtanh.pop %v1369
    %v1371 = vmul.f32 %v1370, 0.5
    %v1372 = vadd.f32 %v1371, 0.5
    %v1373 = vadd.f32 %v1360, %v566
    %v1374 = vmul.f32 %v1367, %v1373
    %v1375 = vadd.f32 %v473, %v1374
    %v1376 = vtanh.pop %v1375
    %v1377 = vsub.f32 %v1217, %v1376
    %v1378 = vmul.f32 %v1372, %v1377
    %v1379 = vadd.f32 %v1376, %v1378
    %vm1380 = vcmp.gt.s32.totalorder %v511, 4
    %v1381 = vsel %vm1380, %v1379, %v1217
    %v1382 = vsel %vm1380, %v1379, 0.0
    %v1383 = vadd.f32 %v1219, %v1382
    %v1384 = vmax.f32 %v1221, %v1379
    %v1385 = vsel %vm1380, %v1384, %v1221
    %1386 = vmatprep.subr.mxu0 %v513
    %1387 = vmatpush1.msra.mxu0 %v512
    %1388 = vmatprep.subr.mxu0 %v516
    %1389 = vmatpush1.msra.mxu0 %v515
    %1390 = vmatprep.subr.mxu0 %v519
    %1391 = vmatpush1.msra.mxu0 %v518
    %1392 = vmatprep.subr.mxu0 %v522
    %1393 = vmatpush1.msra.mxu0 %v521
    %1394 = vmatprep.subr.mxu0 %v525
    %1395 = vmatpush1.msra.mxu0 %v524
    %1396 = vmatprep.subr.mxu0 %v528
    %1397 = vmatpush1.msra.mxu0 %v527
    %1398 = vmatprep.subr.mxu0 %v531
    %1399 = vmatpush1.msra.mxu0 %v530
    %1400 = vmatprep.subr.mxu0 %v534
    %1401 = vmatpush1.msra.mxu0 %v533
    %1402 = vmatprep.subr.mxu0 %v537
    %1403 = vmatpush1.msra.mxu0 %v536
    %1404 = vmatprep.subr.mxu0 %v540
    %1405 = vmatpush1.msra.mxu0 %v539
    %1406 = vmatprep.subr.mxu0 %v543
    %1407 = vmatpush1.msra.mxu0 %v542
    %1408 = vmatprep.subr.mxu0 %v546
    %1409 = vmatpush1.msra.mxu0 %v545
    %1410 = vmatprep.subr.mxu0 %v549
    %1411 = vmatpush1.msra.mxu0 %v548
    %1412 = vmatprep.subr.mxu0 %v552
    %1413 = vmatpush1.msra.mxu0 %v551
    %1414 = vmatprep.subr.mxu0 %v555
    %1415 = vmatpush1.msra.mxu0 %v554
    %1416 = vmatprep.subr.mxu0 %v558
    %1417 = vmatpush1.msra.mxu0 %v557
    %1418 = vmatprep.subr.mxu0 0.0
    %1419 = vmatpush1.msra.mxu0 0.0
    %1420 = vmatprep.subr.mxu0 0.0
    %1421 = vmatpush1.msra.mxu0 0.0
    %1422 = vmatprep.subr.mxu0 0.0
    %1423 = vmatpush1.msra.mxu0 0.0
    %1424 = vmatprep.subr.mxu0 0.0
    %1425 = vmatpush1.msra.mxu0 0.0
    %1426 = vmatprep.subr.mxu0 0.0
    %1427 = vmatpush1.msra.mxu0 0.0
    %1428 = vmatprep.subr.mxu0 0.0
    %1429 = vmatpush1.msra.mxu0 0.0
    %1430 = vmatprep.subr.mxu0 0.0
    %1431 = vmatpush1.msra.mxu0 0.0
    %1432 = vmatprep.subr.mxu0 0.0
    %1433 = vmatpush1.msra.mxu0 0.0
    %1434 = vmatprep.subr.mxu0 0.0
    %1435 = vmatpush1.msra.mxu0 0.0
    %1436 = vmatprep.subr.mxu0 0.0
    %1437 = vmatpush1.msra.mxu0 0.0
    %1438 = vmatprep.subr.mxu0 0.0
    %1439 = vmatpush1.msra.mxu0 0.0
    %1440 = vmatprep.subr.mxu0 0.0
    %1441 = vmatpush1.msra.mxu0 0.0
    %1442 = vmatprep.subr.mxu0 0.0
    %1443 = vmatpush1.msra.mxu0 0.0
    %1444 = vmatprep.subr.mxu0 0.0
    %1445 = vmatpush1.msra.mxu0 0.0
    %1446 = vmatprep.subr.mxu0 0.0
    %1447 = vmatpush1.msra.mxu0 0.0
    %1448 = vmatprep.subr.mxu0 0.0
    %1449 = vmatpush1.msra.mxu0 0.0
    %1450 = vmatprep.mubr.f32.mxu0 0.0
    %1451 = vmatmul.mubr.f32.gmra.mrb[0].mxu0 %v1381
    %v1452 = vpop.f32.mrb[0].mxu0
    %v1453 = vadd.f32 0.0, %v1452
    %v1454 = vpop.f32.mrb[0].mxu0
    %v1455 = vadd.f32 0.0, %v1454
    %1456 = vdwg.mxu0
    %1457 = vmatprep.subr.mxu0 0.0
    %1458 = vmatpush1.msra.mxu0 %v514
    %1459 = vmatprep.subr.mxu0 0.0
    %1460 = vmatpush1.msra.mxu0 %v517
    %1461 = vmatprep.subr.mxu0 0.0
    %1462 = vmatpush1.msra.mxu0 %v520
    %1463 = vmatprep.subr.mxu0 0.0
    %1464 = vmatpush1.msra.mxu0 %v523
    %1465 = vmatprep.subr.mxu0 0.0
    %1466 = vmatpush1.msra.mxu0 %v526
    %1467 = vmatprep.subr.mxu0 0.0
    %1468 = vmatpush1.msra.mxu0 %v529
    %1469 = vmatprep.subr.mxu0 0.0
    %1470 = vmatpush1.msra.mxu0 %v532
    %1471 = vmatprep.subr.mxu0 0.0
    %1472 = vmatpush1.msra.mxu0 %v535
    %1473 = vmatprep.subr.mxu0 0.0
    %1474 = vmatpush1.msra.mxu0 %v538
    %1475 = vmatprep.subr.mxu0 0.0
    %1476 = vmatpush1.msra.mxu0 %v541
    %1477 = vmatprep.subr.mxu0 0.0
    %1478 = vmatpush1.msra.mxu0 %v544
    %1479 = vmatprep.subr.mxu0 0.0
    %1480 = vmatpush1.msra.mxu0 %v547
    %1481 = vmatprep.subr.mxu0 0.0
    %1482 = vmatpush1.msra.mxu0 %v550
    %1483 = vmatprep.subr.mxu0 0.0
    %1484 = vmatpush1.msra.mxu0 %v553
    %1485 = vmatprep.subr.mxu0 0.0
    %1486 = vmatpush1.msra.mxu0 %v556
    %1487 = vmatprep.subr.mxu0 0.0
    %1488 = vmatpush1.msra.mxu0 %v559
    %1489 = vmatprep.subr.mxu0 0.0
    %1490 = vmatpush1.msra.mxu0 0.0
    %1491 = vmatprep.subr.mxu0 0.0
    %1492 = vmatpush1.msra.mxu0 0.0
    %1493 = vmatprep.subr.mxu0 0.0
    %1494 = vmatpush1.msra.mxu0 0.0
    %1495 = vmatprep.subr.mxu0 0.0
    %1496 = vmatpush1.msra.mxu0 0.0
    %1497 = vmatprep.subr.mxu0 0.0
    %1498 = vmatpush1.msra.mxu0 0.0
    %1499 = vmatprep.subr.mxu0 0.0
    %1500 = vmatpush1.msra.mxu0 0.0
    %1501 = vmatprep.subr.mxu0 0.0
    %1502 = vmatpush1.msra.mxu0 0.0
    %1503 = vmatprep.subr.mxu0 0.0
    %1504 = vmatpush1.msra.mxu0 0.0
    %1505 = vmatprep.subr.mxu0 0.0
    %1506 = vmatpush1.msra.mxu0 0.0
    %1507 = vmatprep.subr.mxu0 0.0
    %1508 = vmatpush1.msra.mxu0 0.0
    %1509 = vmatprep.subr.mxu0 0.0
    %1510 = vmatpush1.msra.mxu0 0.0
    %1511 = vmatprep.subr.mxu0 0.0
    %1512 = vmatpush1.msra.mxu0 0.0
    %1513 = vmatprep.subr.mxu0 0.0
    %1514 = vmatpush1.msra.mxu0 0.0
    %1515 = vmatprep.subr.mxu0 0.0
    %1516 = vmatpush1.msra.mxu0 0.0
    %1517 = vmatprep.subr.mxu0 0.0
    %1518 = vmatpush1.msra.mxu0 0.0
    %1519 = vmatprep.subr.mxu0 0.0
    %1520 = vmatpush1.msra.mxu0 0.0
    %1521 = vmatprep.mubr.f32.mxu0 0.0
    %1522 = vmatmul.mubr.f32.gmra.mrb[0].mxu0 %v1381
    %v1523 = vpop.f32.mrb[0].mxu0
    %v1524 = vadd.f32 0.0, %v1523
    %v1525 = vpop.f32.mrb[0].mxu0
    %1526 = vdwg.mxu0
    %v1527 = vadd.f32 %v346, %v1453
    %v1528 = vmul.f32 %v1527, 0.5
    %v1529 = vtanh.pop %v1528
    %v1530 = vmul.f32 %v1529, 0.5
    %v1531 = vadd.f32 %v1530, 0.5
    %v1532 = vadd.f32 %v348, %v1455
    %v1533 = vmul.f32 %v1532, 0.5
    %v1534 = vtanh.pop %v1533
    %v1535 = vmul.f32 %v1534, 0.5
    %v1536 = vadd.f32 %v1535, 0.5
    %v1537 = vadd.f32 %v1524, %v566
    %v1538 = vmul.f32 %v1531, %v1537
    %v1539 = vadd.f32 %v478, %v1538
    %v1540 = vtanh.pop %v1539
    %v1541 = vsub.f32 %v1381, %v1540
    %v1542 = vmul.f32 %v1536, %v1541
    %v1543 = vadd.f32 %v1540, %v1542
    %vm1544 = vcmp.gt.s32.totalorder %v511, 5
    %v1545 = vsel %vm1544, %v1543, %v1381
    %v1546 = vsel %vm1544, %v1543, 0.0
    %v1547 = vadd.f32 %v1383, %v1546
    %v1548 = vmax.f32 %v1385, %v1543
    %v1549 = vsel %vm1544, %v1548, %v1385
    %1550 = vmatprep.subr.mxu0 %v513
    %1551 = vmatpush1.msra.mxu0 %v512
    %1552 = vmatprep.subr.mxu0 %v516
    %1553 = vmatpush1.msra.mxu0 %v515
    %1554 = vmatprep.subr.mxu0 %v519
    %1555 = vmatpush1.msra.mxu0 %v518
    %1556 = vmatprep.subr.mxu0 %v522
    %1557 = vmatpush1.msra.mxu0 %v521
    %1558 = vmatprep.subr.mxu0 %v525
    %1559 = vmatpush1.msra.mxu0 %v524
    %1560 = vmatprep.subr.mxu0 %v528
    %1561 = vmatpush1.msra.mxu0 %v527
    %1562 = vmatprep.subr.mxu0 %v531
    %1563 = vmatpush1.msra.mxu0 %v530
    %1564 = vmatprep.subr.mxu0 %v534
    %1565 = vmatpush1.msra.mxu0 %v533
    %1566 = vmatprep.subr.mxu0 %v537
    %1567 = vmatpush1.msra.mxu0 %v536
    %1568 = vmatprep.subr.mxu0 %v540
    %1569 = vmatpush1.msra.mxu0 %v539
    %1570 = vmatprep.subr.mxu0 %v543
    %1571 = vmatpush1.msra.mxu0 %v542
    %1572 = vmatprep.subr.mxu0 %v546
    %1573 = vmatpush1.msra.mxu0 %v545
    %1574 = vmatprep.subr.mxu0 %v549
    %1575 = vmatpush1.msra.mxu0 %v548
    %1576 = vmatprep.subr.mxu0 %v552
    %1577 = vmatpush1.msra.mxu0 %v551
    %1578 = vmatprep.subr.mxu0 %v555
    %1579 = vmatpush1.msra.mxu0 %v554
    %1580 = vmatprep.subr.mxu0 %v558
    %1581 = vmatpush1.msra.mxu0 %v557
    %1582 = vmatprep.subr.mxu0 0.0
    %1583 = vmatpush1.msra.mxu0 0.0
    %1584 = vmatprep.subr.mxu0 0.0
    %1585 = vmatpush1.msra.mxu0 0.0
    %1586 = vmatprep.subr.mxu0 0.0
    %1587 = vmatpush1.msra.mxu0 0.0
    %1588 = vmatprep.subr.mxu0 0.0
    %1589 = vmatpush1.msra.mxu0 0.0
    %1590 = vmatprep.subr.mxu0 0.0
    %1591 = vmatpush1.msra.mxu0 0.0
    %1592 = vmatprep.subr.mxu0 0.0
    %1593 = vmatpush1.msra.mxu0 0.0
    %1594 = vmatprep.subr.mxu0 0.0
    %1595 = vmatpush1.msra.mxu0 0.0
    %1596 = vmatprep.subr.mxu0 0.0
    %1597 = vmatpush1.msra.mxu0 0.0
    %1598 = vmatprep.subr.mxu0 0.0
    %1599 = vmatpush1.msra.mxu0 0.0
    %1600 = vmatprep.subr.mxu0 0.0
    %1601 = vmatpush1.msra.mxu0 0.0
    %1602 = vmatprep.subr.mxu0 0.0
    %1603 = vmatpush1.msra.mxu0 0.0
    %1604 = vmatprep.subr.mxu0 0.0
    %1605 = vmatpush1.msra.mxu0 0.0
    %1606 = vmatprep.subr.mxu0 0.0
    %1607 = vmatpush1.msra.mxu0 0.0
    %1608 = vmatprep.subr.mxu0 0.0
    %1609 = vmatpush1.msra.mxu0 0.0
    %1610 = vmatprep.subr.mxu0 0.0
    %1611 = vmatpush1.msra.mxu0 0.0
    %1612 = vmatprep.subr.mxu0 0.0
    %1613 = vmatpush1.msra.mxu0 0.0
    %1614 = vmatprep.mubr.f32.mxu0 0.0
    %1615 = vmatmul.mubr.f32.gmra.mrb[0].mxu0 %v1545
    %v1616 = vpop.f32.mrb[0].mxu0
    %v1617 = vadd.f32 0.0, %v1616
    %v1618 = vpop.f32.mrb[0].mxu0
    %v1619 = vadd.f32 0.0, %v1618
    %1620 = vdwg.mxu0
    %1621 = vmatprep.subr.mxu0 0.0
    %1622 = vmatpush1.msra.mxu0 %v514
    %1623 = vmatprep.subr.mxu0 0.0
    %1624 = vmatpush1.msra.mxu0 %v517
    %1625 = vmatprep.subr.mxu0 0.0
    %1626 = vmatpush1.msra.mxu0 %v520
    %1627 = vmatprep.subr.mxu0 0.0
    %1628 = vmatpush1.msra.mxu0 %v523
    %1629 = vmatprep.subr.mxu0 0.0
    %1630 = vmatpush1.msra.mxu0 %v526
    %1631 = vmatprep.subr.mxu0 0.0
    %1632 = vmatpush1.msra.mxu0 %v529
    %1633 = vmatprep.subr.mxu0 0.0
    %1634 = vmatpush1.msra.mxu0 %v532
    %1635 = vmatprep.subr.mxu0 0.0
    %1636 = vmatpush1.msra.mxu0 %v535
    %1637 = vmatprep.subr.mxu0 0.0
    %1638 = vmatpush1.msra.mxu0 %v538
    %1639 = vmatprep.subr.mxu0 0.0
    %1640 = vmatpush1.msra.mxu0 %v541
    %1641 = vmatprep.subr.mxu0 0.0
    %1642 = vmatpush1.msra.mxu0 %v544
    %1643 = vmatprep.subr.mxu0 0.0
    %1644 = vmatpush1.msra.mxu0 %v547
    %1645 = vmatprep.subr.mxu0 0.0
    %1646 = vmatpush1.msra.mxu0 %v550
    %1647 = vmatprep.subr.mxu0 0.0
    %1648 = vmatpush1.msra.mxu0 %v553
    %1649 = vmatprep.subr.mxu0 0.0
    %1650 = vmatpush1.msra.mxu0 %v556
    %1651 = vmatprep.subr.mxu0 0.0
    %1652 = vmatpush1.msra.mxu0 %v559
    %1653 = vmatprep.subr.mxu0 0.0
    %1654 = vmatpush1.msra.mxu0 0.0
    %1655 = vmatprep.subr.mxu0 0.0
    %1656 = vmatpush1.msra.mxu0 0.0
    %1657 = vmatprep.subr.mxu0 0.0
    %1658 = vmatpush1.msra.mxu0 0.0
    %1659 = vmatprep.subr.mxu0 0.0
    %1660 = vmatpush1.msra.mxu0 0.0
    %1661 = vmatprep.subr.mxu0 0.0
    %1662 = vmatpush1.msra.mxu0 0.0
    %1663 = vmatprep.subr.mxu0 0.0
    %1664 = vmatpush1.msra.mxu0 0.0
    %1665 = vmatprep.subr.mxu0 0.0
    %1666 = vmatpush1.msra.mxu0 0.0
    %1667 = vmatprep.subr.mxu0 0.0
    %1668 = vmatpush1.msra.mxu0 0.0
    %1669 = vmatprep.subr.mxu0 0.0
    %1670 = vmatpush1.msra.mxu0 0.0
    %1671 = vmatprep.subr.mxu0 0.0
    %1672 = vmatpush1.msra.mxu0 0.0
    %1673 = vmatprep.subr.mxu0 0.0
    %1674 = vmatpush1.msra.mxu0 0.0
    %1675 = vmatprep.subr.mxu0 0.0
    %1676 = vmatpush1.msra.mxu0 0.0
    %1677 = vmatprep.subr.mxu0 0.0
    %1678 = vmatpush1.msra.mxu0 0.0
    %1679 = vmatprep.subr.mxu0 0.0
    %1680 = vmatpush1.msra.mxu0 0.0
    %1681 = vmatprep.subr.mxu0 0.0
    %1682 = vmatpush1.msra.mxu0 0.0
    %1683 = vmatprep.subr.mxu0 0.0
    %1684 = vmatpush1.msra.mxu0 0.0
    %1685 = vmatprep.mubr.f32.mxu0 0.0
    %1686 = vmatmul.mubr.f32.gmra.mrb[0].mxu0 %v1545
    %v1687 = vpop.f32.mrb[0].mxu0
    %v1688 = vadd.f32 0.0, %v1687
    %v1689 = vpop.f32.mrb[0].mxu0
    %1690 = vdwg.mxu0
    %v1691 = vadd.f32 %v352, %v1617
    %v1692 = vmul.f32 %v1691, 0.5
    %v1693 = vtanh.pop %v1692
    %v1694 = vmul.f32 %v1693, 0.5
    %v1695 = vadd.f32 %v1694, 0.5
    %v1696 = vadd.f32 %v354, %v1619
    %v1697 = vmul.f32 %v1696, 0.5
    %v1698 = vtanh.pop %v1697
    %v1699 = vmul.f32 %v1698, 0.5
    %v1700 = vadd.f32 %v1699, 0.5
    %v1701 = vadd.f32 %v1688, %v566
    %v1702 = vmul.f32 %v1695, %v1701
    %v1703 = vadd.f32 %v483, %v1702
    %v1704 = vtanh.pop %v1703
    %v1705 = vsub.f32 %v1545, %v1704
    %v1706 = vmul.f32 %v1700, %v1705
    %v1707 = vadd.f32 %v1704, %v1706
    %vm1708 = vcmp.gt.s32.totalorder %v511, 6
    %v1709 = vsel %vm1708, %v1707, %v1545
    %v1710 = vsel %vm1708, %v1707, 0.0
    %v1711 = vadd.f32 %v1547, %v1710
    %v1712 = vmax.f32 %v1549, %v1707
    %v1713 = vsel %vm1708, %v1712, %v1549
    %1714 = vmatprep.subr.mxu0 %v513
    %1715 = vmatpush1.msra.mxu0 %v512
    %1716 = vmatprep.subr.mxu0 %v516
    %1717 = vmatpush1.msra.mxu0 %v515
    %1718 = vmatprep.subr.mxu0 %v519
    %1719 = vmatpush1.msra.mxu0 %v518
    %1720 = vmatprep.subr.mxu0 %v522
    %1721 = vmatpush1.msra.mxu0 %v521
    %1722 = vmatprep.subr.mxu0 %v525
    %1723 = vmatpush1.msra.mxu0 %v524
    %1724 = vmatprep.subr.mxu0 %v528
    %1725 = vmatpush1.msra.mxu0 %v527
    %1726 = vmatprep.subr.mxu0 %v531
    %1727 = vmatpush1.msra.mxu0 %v530
    %1728 = vmatprep.subr.mxu0 %v534
    %1729 = vmatpush1.msra.mxu0 %v533
    %1730 = vmatprep.subr.mxu0 %v537
    %1731 = vmatpush1.msra.mxu0 %v536
    %1732 = vmatprep.subr.mxu0 %v540
    %1733 = vmatpush1.msra.mxu0 %v539
    %1734 = vmatprep.subr.mxu0 %v543
    %1735 = vmatpush1.msra.mxu0 %v542
    %1736 = vmatprep.subr.mxu0 %v546
    %1737 = vmatpush1.msra.mxu0 %v545
    %1738 = vmatprep.subr.mxu0 %v549
    %1739 = vmatpush1.msra.mxu0 %v548
    %1740 = vmatprep.subr.mxu0 %v552
    %1741 = vmatpush1.msra.mxu0 %v551
    %1742 = vmatprep.subr.mxu0 %v555
    %1743 = vmatpush1.msra.mxu0 %v554
    %1744 = vmatprep.subr.mxu0 %v558
    %1745 = vmatpush1.msra.mxu0 %v557
    %1746 = vmatprep.subr.mxu0 0.0
    %1747 = vmatpush1.msra.mxu0 0.0
    %1748 = vmatprep.subr.mxu0 0.0
    %1749 = vmatpush1.msra.mxu0 0.0
    %1750 = vmatprep.subr.mxu0 0.0
    %1751 = vmatpush1.msra.mxu0 0.0
    %1752 = vmatprep.subr.mxu0 0.0
    %1753 = vmatpush1.msra.mxu0 0.0
    %1754 = vmatprep.subr.mxu0 0.0
    %1755 = vmatpush1.msra.mxu0 0.0
    %1756 = vmatprep.subr.mxu0 0.0
    %1757 = vmatpush1.msra.mxu0 0.0
    %1758 = vmatprep.subr.mxu0 0.0
    %1759 = vmatpush1.msra.mxu0 0.0
    %1760 = vmatprep.subr.mxu0 0.0
    %1761 = vmatpush1.msra.mxu0 0.0
    %1762 = vmatprep.subr.mxu0 0.0
    %1763 = vmatpush1.msra.mxu0 0.0
    %1764 = vmatprep.subr.mxu0 0.0
    %1765 = vmatpush1.msra.mxu0 0.0
    %1766 = vmatprep.subr.mxu0 0.0
    %1767 = vmatpush1.msra.mxu0 0.0
    %1768 = vmatprep.subr.mxu0 0.0
    %1769 = vmatpush1.msra.mxu0 0.0
    %1770 = vmatprep.subr.mxu0 0.0
    %1771 = vmatpush1.msra.mxu0 0.0
    %1772 = vmatprep.subr.mxu0 0.0
    %1773 = vmatpush1.msra.mxu0 0.0
    %1774 = vmatprep.subr.mxu0 0.0
    %1775 = vmatpush1.msra.mxu0 0.0
    %1776 = vmatprep.subr.mxu0 0.0
    %1777 = vmatpush1.msra.mxu0 0.0
    %1778 = vmatprep.mubr.f32.mxu0 0.0
    %1779 = vmatmul.mubr.f32.gmra.mrb[0].mxu0 %v1709
    %v1780 = vpop.f32.mrb[0].mxu0
    %v1781 = vadd.f32 0.0, %v1780
    %v1782 = vpop.f32.mrb[0].mxu0
    %v1783 = vadd.f32 0.0, %v1782
    %1784 = vdwg.mxu0
    %1785 = vmatprep.subr.mxu0 0.0
    %1786 = vmatpush1.msra.mxu0 %v514
    %1787 = vmatprep.subr.mxu0 0.0
    %1788 = vmatpush1.msra.mxu0 %v517
    %1789 = vmatprep.subr.mxu0 0.0
    %1790 = vmatpush1.msra.mxu0 %v520
    %1791 = vmatprep.subr.mxu0 0.0
    %1792 = vmatpush1.msra.mxu0 %v523
    %1793 = vmatprep.subr.mxu0 0.0
    %1794 = vmatpush1.msra.mxu0 %v526
    %1795 = vmatprep.subr.mxu0 0.0
    %1796 = vmatpush1.msra.mxu0 %v529
    %1797 = vmatprep.subr.mxu0 0.0
    %1798 = vmatpush1.msra.mxu0 %v532
    %1799 = vmatprep.subr.mxu0 0.0
    %1800 = vmatpush1.msra.mxu0 %v535
    %1801 = vmatprep.subr.mxu0 0.0
    %1802 = vmatpush1.msra.mxu0 %v538
    %1803 = vmatprep.subr.mxu0 0.0
    %1804 = vmatpush1.msra.mxu0 %v541
    %1805 = vmatprep.subr.mxu0 0.0
    %1806 = vmatpush1.msra.mxu0 %v544
    %1807 = vmatprep.subr.mxu0 0.0
    %1808 = vmatpush1.msra.mxu0 %v547
    %1809 = vmatprep.subr.mxu0 0.0
    %1810 = vmatpush1.msra.mxu0 %v550
    %1811 = vmatprep.subr.mxu0 0.0
    %1812 = vmatpush1.msra.mxu0 %v553
    %1813 = vmatprep.subr.mxu0 0.0
    %1814 = vmatpush1.msra.mxu0 %v556
    %1815 = vmatprep.subr.mxu0 0.0
    %1816 = vmatpush1.msra.mxu0 %v559
    %1817 = vmatprep.subr.mxu0 0.0
    %1818 = vmatpush1.msra.mxu0 0.0
    %1819 = vmatprep.subr.mxu0 0.0
    %1820 = vmatpush1.msra.mxu0 0.0
    %1821 = vmatprep.subr.mxu0 0.0
    %1822 = vmatpush1.msra.mxu0 0.0
    %1823 = vmatprep.subr.mxu0 0.0
    %1824 = vmatpush1.msra.mxu0 0.0
    %1825 = vmatprep.subr.mxu0 0.0
    %1826 = vmatpush1.msra.mxu0 0.0
    %1827 = vmatprep.subr.mxu0 0.0
    %1828 = vmatpush1.msra.mxu0 0.0
    %1829 = vmatprep.subr.mxu0 0.0
    %1830 = vmatpush1.msra.mxu0 0.0
    %1831 = vmatprep.subr.mxu0 0.0
    %1832 = vmatpush1.msra.mxu0 0.0
    %1833 = vmatprep.subr.mxu0 0.0
    %1834 = vmatpush1.msra.mxu0 0.0
    %1835 = vmatprep.subr.mxu0 0.0
    %1836 = vmatpush1.msra.mxu0 0.0
    %1837 = vmatprep.subr.mxu0 0.0
    %1838 = vmatpush1.msra.mxu0 0.0
    %1839 = vmatprep.subr.mxu0 0.0
    %1840 = vmatpush1.msra.mxu0 0.0
    %1841 = vmatprep.subr.mxu0 0.0
    %1842 = vmatpush1.msra.mxu0 0.0
    %1843 = vmatprep.subr.mxu0 0.0
    %1844 = vmatpush1.msra.mxu0 0.0
    %1845 = vmatprep.subr.mxu0 0.0
    %1846 = vmatpush1.msra.mxu0 0.0
    %1847 = vmatprep.subr.mxu0 0.0
    %1848 = vmatpush1.msra.mxu0 0.0
    %1849 = vmatprep.mubr.f32.mxu0 0.0
    %1850 = vmatmul.mubr.f32.gmra.mrb[0].mxu0 %v1709
    %v1851 = vpop.f32.mrb[0].mxu0
    %v1852 = vadd.f32 0.0, %v1851
    %v1853 = vpop.f32.mrb[0].mxu0
    %1854 = vdwg.mxu0
    %v1855 = vadd.f32 %v358, %v1781
    %v1856 = vmul.f32 %v1855, 0.5
    %v1857 = vtanh.pop %v1856
    %v1858 = vmul.f32 %v1857, 0.5
    %v1859 = vadd.f32 %v1858, 0.5
    %v1860 = vadd.f32 %v360, %v1783
    %v1861 = vmul.f32 %v1860, 0.5
    %v1862 = vtanh.pop %v1861
    %v1863 = vmul.f32 %v1862, 0.5
    %v1864 = vadd.f32 %v1863, 0.5
    %v1865 = vadd.f32 %v1852, %v566
    %v1866 = vmul.f32 %v1859, %v1865
    %v1867 = vadd.f32 %v488, %v1866
    %v1868 = vtanh.pop %v1867
    %v1869 = vsub.f32 %v1709, %v1868
    %v1870 = vmul.f32 %v1864, %v1869
    %v1871 = vadd.f32 %v1868, %v1870
    %vm1872 = vcmp.gt.s32.totalorder %v511, 7
    %v1873 = vsel %vm1872, %v1871, %v1709
    %v1874 = vsel %vm1872, %v1871, 0.0
    %v1875 = vadd.f32 %v1711, %v1874
    %v1876 = vmax.f32 %v1713, %v1871
    %v1877 = vsel %vm1872, %v1876, %v1713
    %1878 = vmatprep.subr.mxu0 %v513
    %1879 = vmatpush1.msra.mxu0 %v512
    %1880 = vmatprep.subr.mxu0 %v516
    %1881 = vmatpush1.msra.mxu0 %v515
    %1882 = vmatprep.subr.mxu0 %v519
    %1883 = vmatpush1.msra.mxu0 %v518
    %1884 = vmatprep.subr.mxu0 %v522
    %1885 = vmatpush1.msra.mxu0 %v521
    %1886 = vmatprep.subr.mxu0 %v525
    %1887 = vmatpush1.msra.mxu0 %v524
    %1888 = vmatprep.subr.mxu0 %v528
    %1889 = vmatpush1.msra.mxu0 %v527
    %1890 = vmatprep.subr.mxu0 %v531
    %1891 = vmatpush1.msra.mxu0 %v530
    %1892 = vmatprep.subr.mxu0 %v534
    %1893 = vmatpush1.msra.mxu0 %v533
    %1894 = vmatprep.subr.mxu0 %v537
    %1895 = vmatpush1.msra.mxu0 %v536
    %1896 = vmatprep.subr.mxu0 %v540
    %1897 = vmatpush1.msra.mxu0 %v539
    %1898 = vmatprep.subr.mxu0 %v543
    %1899 = vmatpush1.msra.mxu0 %v542
    %1900 = vmatprep.subr.mxu0 %v546
    %1901 = vmatpush1.msra.mxu0 %v545
    %1902 = vmatprep.subr.mxu0 %v549
    %1903 = vmatpush1.msra.mxu0 %v548
    %1904 = vmatprep.subr.mxu0 %v552
    %1905 = vmatpush1.msra.mxu0 %v551
    %1906 = vmatprep.subr.mxu0 %v555
    %1907 = vmatpush1.msra.mxu0 %v554
    %1908 = vmatprep.subr.mxu0 %v558
    %1909 = vmatpush1.msra.mxu0 %v557
    %1910 = vmatprep.subr.mxu0 0.0
    %1911 = vmatpush1.msra.mxu0 0.0
    %1912 = vmatprep.subr.mxu0 0.0
    %1913 = vmatpush1.msra.mxu0 0.0
    %1914 = vmatprep.subr.mxu0 0.0
    %1915 = vmatpush1.msra.mxu0 0.0
    %1916 = vmatprep.subr.mxu0 0.0
    %1917 = vmatpush1.msra.mxu0 0.0
    %1918 = vmatprep.subr.mxu0 0.0
    %1919 = vmatpush1.msra.mxu0 0.0
    %1920 = vmatprep.subr.mxu0 0.0
    %1921 = vmatpush1.msra.mxu0 0.0
    %1922 = vmatprep.subr.mxu0 0.0
    %1923 = vmatpush1.msra.mxu0 0.0
    %1924 = vmatprep.subr.mxu0 0.0
    %1925 = vmatpush1.msra.mxu0 0.0
    %1926 = vmatprep.subr.mxu0 0.0
    %1927 = vmatpush1.msra.mxu0 0.0
    %1928 = vmatprep.subr.mxu0 0.0
    %1929 = vmatpush1.msra.mxu0 0.0
    %1930 = vmatprep.subr.mxu0 0.0
    %1931 = vmatpush1.msra.mxu0 0.0
    %1932 = vmatprep.subr.mxu0 0.0
    %1933 = vmatpush1.msra.mxu0 0.0
    %1934 = vmatprep.subr.mxu0 0.0
    %1935 = vmatpush1.msra.mxu0 0.0
    %1936 = vmatprep.subr.mxu0 0.0
    %1937 = vmatpush1.msra.mxu0 0.0
    %1938 = vmatprep.subr.mxu0 0.0
    %1939 = vmatpush1.msra.mxu0 0.0
    %1940 = vmatprep.subr.mxu0 0.0
    %1941 = vmatpush1.msra.mxu0 0.0
    %1942 = vmatprep.mubr.f32.mxu0 0.0
    %1943 = vmatmul.mubr.f32.gmra.mrb[0].mxu0 %v1873
    %v1944 = vpop.f32.mrb[0].mxu0
    %v1945 = vadd.f32 0.0, %v1944
    %v1946 = vpop.f32.mrb[0].mxu0
    %v1947 = vadd.f32 0.0, %v1946
    %1948 = vdwg.mxu0
    %1949 = vmatprep.subr.mxu0 0.0
    %1950 = vmatpush1.msra.mxu0 %v514
    %1951 = vmatprep.subr.mxu0 0.0
    %1952 = vmatpush1.msra.mxu0 %v517
    %1953 = vmatprep.subr.mxu0 0.0
    %1954 = vmatpush1.msra.mxu0 %v520
    %1955 = vmatprep.subr.mxu0 0.0
    %1956 = vmatpush1.msra.mxu0 %v523
    %1957 = vmatprep.subr.mxu0 0.0
    %1958 = vmatpush1.msra.mxu0 %v526
    %1959 = vmatprep.subr.mxu0 0.0
    %1960 = vmatpush1.msra.mxu0 %v529
    %1961 = vmatprep.subr.mxu0 0.0
    %1962 = vmatpush1.msra.mxu0 %v532
    %1963 = vmatprep.subr.mxu0 0.0
    %1964 = vmatpush1.msra.mxu0 %v535
    %1965 = vmatprep.subr.mxu0 0.0
    %1966 = vmatpush1.msra.mxu0 %v538
    %1967 = vmatprep.subr.mxu0 0.0
    %1968 = vmatpush1.msra.mxu0 %v541
    %1969 = vmatprep.subr.mxu0 0.0
    %1970 = vmatpush1.msra.mxu0 %v544
    %1971 = vmatprep.subr.mxu0 0.0
    %1972 = vmatpush1.msra.mxu0 %v547
    %1973 = vmatprep.subr.mxu0 0.0
    %1974 = vmatpush1.msra.mxu0 %v550
    %1975 = vmatprep.subr.mxu0 0.0
    %1976 = vmatpush1.msra.mxu0 %v553
    %1977 = vmatprep.subr.mxu0 0.0
    %1978 = vmatpush1.msra.mxu0 %v556
    %1979 = vmatprep.subr.mxu0 0.0
    %1980 = vmatpush1.msra.mxu0 %v559
    %1981 = vmatprep.subr.mxu0 0.0
    %1982 = vmatpush1.msra.mxu0 0.0
    %1983 = vmatprep.subr.mxu0 0.0
    %1984 = vmatpush1.msra.mxu0 0.0
    %1985 = vmatprep.subr.mxu0 0.0
    %1986 = vmatpush1.msra.mxu0 0.0
    %1987 = vmatprep.subr.mxu0 0.0
    %1988 = vmatpush1.msra.mxu0 0.0
    %1989 = vmatprep.subr.mxu0 0.0
    %1990 = vmatpush1.msra.mxu0 0.0
    %1991 = vmatprep.subr.mxu0 0.0
    %1992 = vmatpush1.msra.mxu0 0.0
    %1993 = vmatprep.subr.mxu0 0.0
    %1994 = vmatpush1.msra.mxu0 0.0
    %1995 = vmatprep.subr.mxu0 0.0
    %1996 = vmatpush1.msra.mxu0 0.0
    %1997 = vmatprep.subr.mxu0 0.0
    %1998 = vmatpush1.msra.mxu0 0.0
    %1999 = vmatprep.subr.mxu0 0.0
    %2000 = vmatpush1.msra.mxu0 0.0
    %2001 = vmatprep.subr.mxu0 0.0
    %2002 = vmatpush1.msra.mxu0 0.0
    %2003 = vmatprep.subr.mxu0 0.0
    %2004 = vmatpush1.msra.mxu0 0.0
    %2005 = vmatprep.subr.mxu0 0.0
    %2006 = vmatpush1.msra.mxu0 0.0
    %2007 = vmatprep.subr.mxu0 0.0
    %2008 = vmatpush1.msra.mxu0 0.0
    %2009 = vmatprep.subr.mxu0 0.0
    %2010 = vmatpush1.msra.mxu0 0.0
    %2011 = vmatprep.subr.mxu0 0.0
    %2012 = vmatpush1.msra.mxu0 0.0
    %2013 = vmatprep.mubr.f32.mxu0 0.0
    %2014 = vmatmul.mubr.f32.gmra.mrb[0].mxu0 %v1873
    %v2015 = vpop.f32.mrb[0].mxu0
    %v2016 = vadd.f32 0.0, %v2015
    %v2017 = vpop.f32.mrb[0].mxu0
    %2018 = vdwg.mxu0
    %v2019 = vadd.f32 %v364, %v1945
    %v2020 = vmul.f32 %v2019, 0.5
    %v2021 = vtanh.pop %v2020
    %v2022 = vmul.f32 %v2021, 0.5
    %v2023 = vadd.f32 %v2022, 0.5
    %v2024 = vadd.f32 %v366, %v1947
    %v2025 = vmul.f32 %v2024, 0.5
    %v2026 = vtanh.pop %v2025
    %v2027 = vmul.f32 %v2026, 0.5
    %v2028 = vadd.f32 %v2027, 0.5
    %v2029 = vadd.f32 %v2016, %v566
    %v2030 = vmul.f32 %v2023, %v2029
    %v2031 = vadd.f32 %v493, %v2030
    %v2032 = vtanh.pop %v2031
    %v2033 = vsub.f32 %v1873, %v2032
    %v2034 = vmul.f32 %v2028, %v2033
    %v2035 = vadd.f32 %v2032, %v2034
    %vm2036 = vcmp.gt.s32.totalorder %v511, 8
    %v2037 = vsel %vm2036, %v2035, %v1873
    %v2038 = vsel %vm2036, %v2035, 0.0
    %v2039 = vadd.f32 %v1875, %v2038
    %v2040 = vmax.f32 %v1877, %v2035
    %v2041 = vsel %vm2036, %v2040, %v1877
    %2042 = vmatprep.subr.mxu0 %v513
    %2043 = vmatpush1.msra.mxu0 %v512
    %2044 = vmatprep.subr.mxu0 %v516
    %2045 = vmatpush1.msra.mxu0 %v515
    %2046 = vmatprep.subr.mxu0 %v519
    %2047 = vmatpush1.msra.mxu0 %v518
    %2048 = vmatprep.subr.mxu0 %v522
    %2049 = vmatpush1.msra.mxu0 %v521
    %2050 = vmatprep.subr.mxu0 %v525
    %2051 = vmatpush1.msra.mxu0 %v524
    %2052 = vmatprep.subr.mxu0 %v528
    %2053 = vmatpush1.msra.mxu0 %v527
    %2054 = vmatprep.subr.mxu0 %v531
    %2055 = vmatpush1.msra.mxu0 %v530
    %2056 = vmatprep.subr.mxu0 %v534
    %2057 = vmatpush1.msra.mxu0 %v533
    %2058 = vmatprep.subr.mxu0 %v537
    %2059 = vmatpush1.msra.mxu0 %v536
    %2060 = vmatprep.subr.mxu0 %v540
    %2061 = vmatpush1.msra.mxu0 %v539
    %2062 = vmatprep.subr.mxu0 %v543
    %2063 = vmatpush1.msra.mxu0 %v542
    %2064 = vmatprep.subr.mxu0 %v546
    %2065 = vmatpush1.msra.mxu0 %v545
    %2066 = vmatprep.subr.mxu0 %v549
    %2067 = vmatpush1.msra.mxu0 %v548
    %2068 = vmatprep.subr.mxu0 %v552
    %2069 = vmatpush1.msra.mxu0 %v551
    %2070 = vmatprep.subr.mxu0 %v555
    %2071 = vmatpush1.msra.mxu0 %v554
    %2072 = vmatprep.subr.mxu0 %v558
    %2073 = vmatpush1.msra.mxu0 %v557
    %2074 = vmatprep.subr.mxu0 0.0
    %2075 = vmatpush1.msra.mxu0 0.0
    %2076 = vmatprep.subr.mxu0 0.0
    %2077 = vmatpush1.msra.mxu0 0.0
    %2078 = vmatprep.subr.mxu0 0.0
    %2079 = vmatpush1.msra.mxu0 0.0
    %2080 = vmatprep.subr.mxu0 0.0
    %2081 = vmatpush1.msra.mxu0 0.0
    %2082 = vmatprep.subr.mxu0 0.0
    %2083 = vmatpush1.msra.mxu0 0.0
    %2084 = vmatprep.subr.mxu0 0.0
    %2085 = vmatpush1.msra.mxu0 0.0
    %2086 = vmatprep.subr.mxu0 0.0
    %2087 = vmatpush1.msra.mxu0 0.0
    %2088 = vmatprep.subr.mxu0 0.0
    %2089 = vmatpush1.msra.mxu0 0.0
    %2090 = vmatprep.subr.mxu0 0.0
    %2091 = vmatpush1.msra.mxu0 0.0
    %2092 = vmatprep.subr.mxu0 0.0
    %2093 = vmatpush1.msra.mxu0 0.0
    %2094 = vmatprep.subr.mxu0 0.0
    %2095 = vmatpush1.msra.mxu0 0.0
    %2096 = vmatprep.subr.mxu0 0.0
    %2097 = vmatpush1.msra.mxu0 0.0
    %2098 = vmatprep.subr.mxu0 0.0
    %2099 = vmatpush1.msra.mxu0 0.0
    %2100 = vmatprep.subr.mxu0 0.0
    %2101 = vmatpush1.msra.mxu0 0.0
    %2102 = vmatprep.subr.mxu0 0.0
    %2103 = vmatpush1.msra.mxu0 0.0
    %2104 = vmatprep.subr.mxu0 0.0
    %2105 = vmatpush1.msra.mxu0 0.0
    %2106 = vmatprep.mubr.f32.mxu0 0.0
    %2107 = vmatmul.mubr.f32.gmra.mrb[0].mxu0 %v2037
    %v2108 = vpop.f32.mrb[0].mxu0
    %v2109 = vadd.f32 0.0, %v2108
    %v2110 = vpop.f32.mrb[0].mxu0
    %v2111 = vadd.f32 0.0, %v2110
    %2112 = vdwg.mxu0
    %2113 = vmatprep.subr.mxu0 0.0
    %2114 = vmatpush1.msra.mxu0 %v514
    %2115 = vmatprep.subr.mxu0 0.0
    %2116 = vmatpush1.msra.mxu0 %v517
    %2117 = vmatprep.subr.mxu0 0.0
    %2118 = vmatpush1.msra.mxu0 %v520
    %2119 = vmatprep.subr.mxu0 0.0
    %2120 = vmatpush1.msra.mxu0 %v523
    %2121 = vmatprep.subr.mxu0 0.0
    %2122 = vmatpush1.msra.mxu0 %v526
    %2123 = vmatprep.subr.mxu0 0.0
    %2124 = vmatpush1.msra.mxu0 %v529
    %2125 = vmatprep.subr.mxu0 0.0
    %2126 = vmatpush1.msra.mxu0 %v532
    %2127 = vmatprep.subr.mxu0 0.0
    %2128 = vmatpush1.msra.mxu0 %v535
    %2129 = vmatprep.subr.mxu0 0.0
    %2130 = vmatpush1.msra.mxu0 %v538
    %2131 = vmatprep.subr.mxu0 0.0
    %2132 = vmatpush1.msra.mxu0 %v541
    %2133 = vmatprep.subr.mxu0 0.0
    %2134 = vmatpush1.msra.mxu0 %v544
    %2135 = vmatprep.subr.mxu0 0.0
    %2136 = vmatpush1.msra.mxu0 %v547
    %2137 = vmatprep.subr.mxu0 0.0
    %2138 = vmatpush1.msra.mxu0 %v550
    %2139 = vmatprep.subr.mxu0 0.0
    %2140 = vmatpush1.msra.mxu0 %v553
    %2141 = vmatprep.subr.mxu0 0.0
    %2142 = vmatpush1.msra.mxu0 %v556
    %2143 = vmatprep.subr.mxu0 0.0
    %2144 = vmatpush1.msra.mxu0 %v559
    %2145 = vmatprep.subr.mxu0 0.0
    %2146 = vmatpush1.msra.mxu0 0.0
    %2147 = vmatprep.subr.mxu0 0.0
    %2148 = vmatpush1.msra.mxu0 0.0
    %2149 = vmatprep.subr.mxu0 0.0
    %2150 = vmatpush1.msra.mxu0 0.0
    %2151 = vmatprep.subr.mxu0 0.0
    %2152 = vmatpush1.msra.mxu0 0.0
    %2153 = vmatprep.subr.mxu0 0.0
    %2154 = vmatpush1.msra.mxu0 0.0
    %2155 = vmatprep.subr.mxu0 0.0
    %2156 = vmatpush1.msra.mxu0 0.0
    %2157 = vmatprep.subr.mxu0 0.0
    %2158 = vmatpush1.msra.mxu0 0.0
    %2159 = vmatprep.subr.mxu0 0.0
    %2160 = vmatpush1.msra.mxu0 0.0
    %2161 = vmatprep.subr.mxu0 0.0
    %2162 = vmatpush1.msra.mxu0 0.0
    %2163 = vmatprep.subr.mxu0 0.0
    %2164 = vmatpush1.msra.mxu0 0.0
    %2165 = vmatprep.subr.mxu0 0.0
    %2166 = vmatpush1.msra.mxu0 0.0
    %2167 = vmatprep.subr.mxu0 0.0
    %2168 = vmatpush1.msra.mxu0 0.0
    %2169 = vmatprep.subr.mxu0 0.0
    %2170 = vmatpush1.msra.mxu0 0.0
    %2171 = vmatprep.subr.mxu0 0.0
    %2172 = vmatpush1.msra.mxu0 0.0
    %2173 = vmatprep.subr.mxu0 0.0
    %2174 = vmatpush1.msra.mxu0 0.0
    %2175 = vmatprep.subr.mxu0 0.0
    %2176 = vmatpush1.msra.mxu0 0.0
    %2177 = vmatprep.mubr.f32.mxu0 0.0
    %2178 = vmatmul.mubr.f32.gmra.mrb[0].mxu0 %v2037
    %v2179 = vpop.f32.mrb[0].mxu0
    %v2180 = vadd.f32 0.0, %v2179
    %v2181 = vpop.f32.mrb[0].mxu0
    %2182 = vdwg.mxu0
    %v2183 = vadd.f32 %v370, %v2109
    %v2184 = vmul.f32 %v2183, 0.5
    %v2185 = vtanh.pop %v2184
    %v2186 = vmul.f32 %v2185, 0.5
    %v2187 = vadd.f32 %v2186, 0.5
    %v2188 = vadd.f32 %v372, %v2111
    %v2189 = vmul.f32 %v2188, 0.5
    %v2190 = vtanh.pop %v2189
    %v2191 = vmul.f32 %v2190, 0.5
    %v2192 = vadd.f32 %v2191, 0.5
    %v2193 = vadd.f32 %v2180, %v566
    %v2194 = vmul.f32 %v2187, %v2193
    %v2195 = vadd.f32 %v498, %v2194
    %v2196 = vtanh.pop %v2195
    %v2197 = vsub.f32 %v2037, %v2196
    %v2198 = vmul.f32 %v2192, %v2197
    %v2199 = vadd.f32 %v2196, %v2198
    %vm2200 = vcmp.gt.s32.totalorder %v511, 9
    %v2201 = vsel %vm2200, %v2199, %v2037
    %v2202 = vsel %vm2200, %v2199, 0.0
    %v2203 = vadd.f32 %v2039, %v2202
    %v2204 = vmax.f32 %v2041, %v2199
    %v2205 = vsel %vm2200, %v2204, %v2041
    %2206 = vmatprep.subr.mxu0 %v513
    %2207 = vmatpush1.msra.mxu0 %v512
    %2208 = vmatprep.subr.mxu0 %v516
    %2209 = vmatpush1.msra.mxu0 %v515
    %2210 = vmatprep.subr.mxu0 %v519
    %2211 = vmatpush1.msra.mxu0 %v518
    %2212 = vmatprep.subr.mxu0 %v522
    %2213 = vmatpush1.msra.mxu0 %v521
    %2214 = vmatprep.subr.mxu0 %v525
    %2215 = vmatpush1.msra.mxu0 %v524
    %2216 = vmatprep.subr.mxu0 %v528
    %2217 = vmatpush1.msra.mxu0 %v527
    %2218 = vmatprep.subr.mxu0 %v531
    %2219 = vmatpush1.msra.mxu0 %v530
    %2220 = vmatprep.subr.mxu0 %v534
    %2221 = vmatpush1.msra.mxu0 %v533
    %2222 = vmatprep.subr.mxu0 %v537
    %2223 = vmatpush1.msra.mxu0 %v536
    %2224 = vmatprep.subr.mxu0 %v540
    %2225 = vmatpush1.msra.mxu0 %v539
    %2226 = vmatprep.subr.mxu0 %v543
    %2227 = vmatpush1.msra.mxu0 %v542
    %2228 = vmatprep.subr.mxu0 %v546
    %2229 = vmatpush1.msra.mxu0 %v545
    %2230 = vmatprep.subr.mxu0 %v549
    %2231 = vmatpush1.msra.mxu0 %v548
    %2232 = vmatprep.subr.mxu0 %v552
    %2233 = vmatpush1.msra.mxu0 %v551
    %2234 = vmatprep.subr.mxu0 %v555
    %2235 = vmatpush1.msra.mxu0 %v554
    %2236 = vmatprep.subr.mxu0 %v558
    %2237 = vmatpush1.msra.mxu0 %v557
    %2238 = vmatprep.subr.mxu0 0.0
    %2239 = vmatpush1.msra.mxu0 0.0
    %2240 = vmatprep.subr.mxu0 0.0
    %2241 = vmatpush1.msra.mxu0 0.0
    %2242 = vmatprep.subr.mxu0 0.0
    %2243 = vmatpush1.msra.mxu0 0.0
    %2244 = vmatprep.subr.mxu0 0.0
    %2245 = vmatpush1.msra.mxu0 0.0
    %2246 = vmatprep.subr.mxu0 0.0
    %2247 = vmatpush1.msra.mxu0 0.0
    %2248 = vmatprep.subr.mxu0 0.0
    %2249 = vmatpush1.msra.mxu0 0.0
    %2250 = vmatprep.subr.mxu0 0.0
    %2251 = vmatpush1.msra.mxu0 0.0
    %2252 = vmatprep.subr.mxu0 0.0
    %2253 = vmatpush1.msra.mxu0 0.0
    %2254 = vmatprep.subr.mxu0 0.0
    %2255 = vmatpush1.msra.mxu0 0.0
    %2256 = vmatprep.subr.mxu0 0.0
    %2257 = vmatpush1.msra.mxu0 0.0
    %2258 = vmatprep.subr.mxu0 0.0
    %2259 = vmatpush1.msra.mxu0 0.0
    %2260 = vmatprep.subr.mxu0 0.0
    %2261 = vmatpush1.msra.mxu0 0.0
    %2262 = vmatprep.subr.mxu0 0.0
    %2263 = vmatpush1.msra.mxu0 0.0
    %2264 = vmatprep.subr.mxu0 0.0
    %2265 = vmatpush1.msra.mxu0 0.0
    %2266 = vmatprep.subr.mxu0 0.0
    %2267 = vmatpush1.msra.mxu0 0.0
    %2268 = vmatprep.subr.mxu0 0.0
    %2269 = vmatpush1.msra.mxu0 0.0
    %2270 = vmatprep.mubr.f32.mxu0 0.0
    %2271 = vmatmul.mubr.f32.gmra.mrb[0].mxu0 %v2201
    %v2272 = vpop.f32.mrb[0].mxu0
    %v2273 = vadd.f32 0.0, %v2272
    %v2274 = vpop.f32.mrb[0].mxu0
    %v2275 = vadd.f32 0.0, %v2274
    %2276 = vdwg.mxu0
    %2277 = vmatprep.subr.mxu0 0.0
    %2278 = vmatpush1.msra.mxu0 %v514
    %2279 = vmatprep.subr.mxu0 0.0
    %2280 = vmatpush1.msra.mxu0 %v517
    %2281 = vmatprep.subr.mxu0 0.0
    %2282 = vmatpush1.msra.mxu0 %v520
    %2283 = vmatprep.subr.mxu0 0.0
    %2284 = vmatpush1.msra.mxu0 %v523
    %2285 = vmatprep.subr.mxu0 0.0
    %2286 = vmatpush1.msra.mxu0 %v526
    %2287 = vmatprep.subr.mxu0 0.0
    %2288 = vmatpush1.msra.mxu0 %v529
    %2289 = vmatprep.subr.mxu0 0.0
    %2290 = vmatpush1.msra.mxu0 %v532
    %2291 = vmatprep.subr.mxu0 0.0
    %2292 = vmatpush1.msra.mxu0 %v535
    %2293 = vmatprep.subr.mxu0 0.0
    %2294 = vmatpush1.msra.mxu0 %v538
    %2295 = vmatprep.subr.mxu0 0.0
    %2296 = vmatpush1.msra.mxu0 %v541
    %2297 = vmatprep.subr.mxu0 0.0
    %2298 = vmatpush1.msra.mxu0 %v544
    %2299 = vmatprep.subr.mxu0 0.0
    %2300 = vmatpush1.msra.mxu0 %v547
    %2301 = vmatprep.subr.mxu0 0.0
    %2302 = vmatpush1.msra.mxu0 %v550
    %2303 = vmatprep.subr.mxu0 0.0
    %2304 = vmatpush1.msra.mxu0 %v553
    %2305 = vmatprep.subr.mxu0 0.0
    %2306 = vmatpush1.msra.mxu0 %v556
    %2307 = vmatprep.subr.mxu0 0.0
    %2308 = vmatpush1.msra.mxu0 %v559
    %2309 = vmatprep.subr.mxu0 0.0
    %2310 = vmatpush1.msra.mxu0 0.0
    %2311 = vmatprep.subr.mxu0 0.0
    %2312 = vmatpush1.msra.mxu0 0.0
    %2313 = vmatprep.subr.mxu0 0.0
    %2314 = vmatpush1.msra.mxu0 0.0
    %2315 = vmatprep.subr.mxu0 0.0
    %2316 = vmatpush1.msra.mxu0 0.0
    %2317 = vmatprep.subr.mxu0 0.0
    %2318 = vmatpush1.msra.mxu0 0.0
    %2319 = vmatprep.subr.mxu0 0.0
    %2320 = vmatpush1.msra.mxu0 0.0
    %2321 = vmatprep.subr.mxu0 0.0
    %2322 = vmatpush1.msra.mxu0 0.0
    %2323 = vmatprep.subr.mxu0 0.0
    %2324 = vmatpush1.msra.mxu0 0.0
    %2325 = vmatprep.subr.mxu0 0.0
    %2326 = vmatpush1.msra.mxu0 0.0
    %2327 = vmatprep.subr.mxu0 0.0
    %2328 = vmatpush1.msra.mxu0 0.0
    %2329 = vmatprep.subr.mxu0 0.0
    %2330 = vmatpush1.msra.mxu0 0.0
    %2331 = vmatprep.subr.mxu0 0.0
    %2332 = vmatpush1.msra.mxu0 0.0
    %2333 = vmatprep.subr.mxu0 0.0
    %2334 = vmatpush1.msra.mxu0 0.0
    %2335 = vmatprep.subr.mxu0 0.0
    %2336 = vmatpush1.msra.mxu0 0.0
    %2337 = vmatprep.subr.mxu0 0.0
    %2338 = vmatpush1.msra.mxu0 0.0
    %2339 = vmatprep.subr.mxu0 0.0
    %2340 = vmatpush1.msra.mxu0 0.0
    %2341 = vmatprep.mubr.f32.mxu0 0.0
    %2342 = vmatmul.mubr.f32.gmra.mrb[0].mxu0 %v2201
    %v2343 = vpop.f32.mrb[0].mxu0
    %v2344 = vadd.f32 0.0, %v2343
    %v2345 = vpop.f32.mrb[0].mxu0
    %2346 = vdwg.mxu0
    %v2347 = vadd.f32 %v376, %v2273
    %v2348 = vmul.f32 %v2347, 0.5
    %v2349 = vtanh.pop %v2348
    %v2350 = vmul.f32 %v2349, 0.5
    %v2351 = vadd.f32 %v2350, 0.5
    %v2352 = vadd.f32 %v378, %v2275
    %v2353 = vmul.f32 %v2352, 0.5
    %v2354 = vtanh.pop %v2353
    %v2355 = vmul.f32 %v2354, 0.5
    %v2356 = vadd.f32 %v2355, 0.5
    %v2357 = vadd.f32 %v2344, %v566
    %v2358 = vmul.f32 %v2351, %v2357
    %v2359 = vadd.f32 %v503, %v2358
    %v2360 = vtanh.pop %v2359
    %v2361 = vsub.f32 %v2201, %v2360
    %v2362 = vmul.f32 %v2356, %v2361
    %v2363 = vadd.f32 %v2360, %v2362
    %vm2364 = vcmp.gt.s32.totalorder %v511, 10
    %v2365 = vsel %vm2364, %v2363, %v2201
    %v2366 = vsel %vm2364, %v2363, 0.0
    %v2367 = vadd.f32 %v2203, %v2366
    %v2368 = vmax.f32 %v2205, %v2363
    %v2369 = vsel %vm2364, %v2368, %v2205
    %2370 = vmatprep.subr.mxu0 %v513
    %2371 = vmatpush1.msra.mxu0 %v512
    %2372 = vmatprep.subr.mxu0 %v516
    %2373 = vmatpush1.msra.mxu0 %v515
    %2374 = vmatprep.subr.mxu0 %v519
    %2375 = vmatpush1.msra.mxu0 %v518
    %2376 = vmatprep.subr.mxu0 %v522
    %2377 = vmatpush1.msra.mxu0 %v521
    %2378 = vmatprep.subr.mxu0 %v525
    %2379 = vmatpush1.msra.mxu0 %v524
    %2380 = vmatprep.subr.mxu0 %v528
    %2381 = vmatpush1.msra.mxu0 %v527
    %2382 = vmatprep.subr.mxu0 %v531
    %2383 = vmatpush1.msra.mxu0 %v530
    %2384 = vmatprep.subr.mxu0 %v534
    %2385 = vmatpush1.msra.mxu0 %v533
    %2386 = vmatprep.subr.mxu0 %v537
    %2387 = vmatpush1.msra.mxu0 %v536
    %2388 = vmatprep.subr.mxu0 %v540
    %2389 = vmatpush1.msra.mxu0 %v539
    %2390 = vmatprep.subr.mxu0 %v543
    %2391 = vmatpush1.msra.mxu0 %v542
    %2392 = vmatprep.subr.mxu0 %v546
    %2393 = vmatpush1.msra.mxu0 %v545
    %2394 = vmatprep.subr.mxu0 %v549
    %2395 = vmatpush1.msra.mxu0 %v548
    %2396 = vmatprep.subr.mxu0 %v552
    %2397 = vmatpush1.msra.mxu0 %v551
    %2398 = vmatprep.subr.mxu0 %v555
    %2399 = vmatpush1.msra.mxu0 %v554
    %2400 = vmatprep.subr.mxu0 %v558
    %2401 = vmatpush1.msra.mxu0 %v557
    %2402 = vmatprep.subr.mxu0 0.0
    %2403 = vmatpush1.msra.mxu0 0.0
    %2404 = vmatprep.subr.mxu0 0.0
    %2405 = vmatpush1.msra.mxu0 0.0
    %2406 = vmatprep.subr.mxu0 0.0
    %2407 = vmatpush1.msra.mxu0 0.0
    %2408 = vmatprep.subr.mxu0 0.0
    %2409 = vmatpush1.msra.mxu0 0.0
    %2410 = vmatprep.subr.mxu0 0.0
    %2411 = vmatpush1.msra.mxu0 0.0
    %2412 = vmatprep.subr.mxu0 0.0
    %2413 = vmatpush1.msra.mxu0 0.0
    %2414 = vmatprep.subr.mxu0 0.0
    %2415 = vmatpush1.msra.mxu0 0.0
    %2416 = vmatprep.subr.mxu0 0.0
    %2417 = vmatpush1.msra.mxu0 0.0
    %2418 = vmatprep.subr.mxu0 0.0
    %2419 = vmatpush1.msra.mxu0 0.0
    %2420 = vmatprep.subr.mxu0 0.0
    %2421 = vmatpush1.msra.mxu0 0.0
    %2422 = vmatprep.subr.mxu0 0.0
    %2423 = vmatpush1.msra.mxu0 0.0
    %2424 = vmatprep.subr.mxu0 0.0
    %2425 = vmatpush1.msra.mxu0 0.0
    %2426 = vmatprep.subr.mxu0 0.0
    %2427 = vmatpush1.msra.mxu0 0.0
    %2428 = vmatprep.subr.mxu0 0.0
    %2429 = vmatpush1.msra.mxu0 0.0
    %2430 = vmatprep.subr.mxu0 0.0
    %2431 = vmatpush1.msra.mxu0 0.0
    %2432 = vmatprep.subr.mxu0 0.0
    %2433 = vmatpush1.msra.mxu0 0.0
    %2434 = vmatprep.mubr.f32.mxu0 0.0
    %2435 = vmatmul.mubr.f32.gmra.mrb[0].mxu0 %v2365
    %v2436 = vpop.f32.mrb[0].mxu0
    %v2437 = vadd.f32 0.0, %v2436
    %v2438 = vpop.f32.mrb[0].mxu0
    %v2439 = vadd.f32 0.0, %v2438
    %2440 = vdwg.mxu0
    %2441 = vmatprep.subr.mxu0 0.0
    %2442 = vmatpush1.msra.mxu0 %v514
    %2443 = vmatprep.subr.mxu0 0.0
    %2444 = vmatpush1.msra.mxu0 %v517
    %2445 = vmatprep.subr.mxu0 0.0
    %2446 = vmatpush1.msra.mxu0 %v520
    %2447 = vmatprep.subr.mxu0 0.0
    %2448 = vmatpush1.msra.mxu0 %v523
    %2449 = vmatprep.subr.mxu0 0.0
    %2450 = vmatpush1.msra.mxu0 %v526
    %2451 = vmatprep.subr.mxu0 0.0
    %2452 = vmatpush1.msra.mxu0 %v529
    %2453 = vmatprep.subr.mxu0 0.0
    %2454 = vmatpush1.msra.mxu0 %v532
    %2455 = vmatprep.subr.mxu0 0.0
    %2456 = vmatpush1.msra.mxu0 %v535
    %2457 = vmatprep.subr.mxu0 0.0
    %2458 = vmatpush1.msra.mxu0 %v538
    %2459 = vmatprep.subr.mxu0 0.0
    %2460 = vmatpush1.msra.mxu0 %v541
    %2461 = vmatprep.subr.mxu0 0.0
    %2462 = vmatpush1.msra.mxu0 %v544
    %2463 = vmatprep.subr.mxu0 0.0
    %2464 = vmatpush1.msra.mxu0 %v547
    %2465 = vmatprep.subr.mxu0 0.0
    %2466 = vmatpush1.msra.mxu0 %v550
    %2467 = vmatprep.subr.mxu0 0.0
    %2468 = vmatpush1.msra.mxu0 %v553
    %2469 = vmatprep.subr.mxu0 0.0
    %2470 = vmatpush1.msra.mxu0 %v556
    %2471 = vmatprep.subr.mxu0 0.0
    %2472 = vmatpush1.msra.mxu0 %v559
    %2473 = vmatprep.subr.mxu0 0.0
    %2474 = vmatpush1.msra.mxu0 0.0
    %2475 = vmatprep.subr.mxu0 0.0
    %2476 = vmatpush1.msra.mxu0 0.0
    %2477 = vmatprep.subr.mxu0 0.0
    %2478 = vmatpush1.msra.mxu0 0.0
    %2479 = vmatprep.subr.mxu0 0.0
    %2480 = vmatpush1.msra.mxu0 0.0
    %2481 = vmatprep.subr.mxu0 0.0
    %2482 = vmatpush1.msra.mxu0 0.0
    %2483 = vmatprep.subr.mxu0 0.0
    %2484 = vmatpush1.msra.mxu0 0.0
    %2485 = vmatprep.subr.mxu0 0.0
    %2486 = vmatpush1.msra.mxu0 0.0
    %2487 = vmatprep.subr.mxu0 0.0
    %2488 = vmatpush1.msra.mxu0 0.0
    %2489 = vmatprep.subr.mxu0 0.0
    %2490 = vmatpush1.msra.mxu0 0.0
    %2491 = vmatprep.subr.mxu0 0.0
    %2492 = vmatpush1.msra.mxu0 0.0
    %2493 = vmatprep.subr.mxu0 0.0
    %2494 = vmatpush1.msra.mxu0 0.0
    %2495 = vmatprep.subr.mxu0 0.0
    %2496 = vmatpush1.msra.mxu0 0.0
    %2497 = vmatprep.subr.mxu0 0.0
    %2498 = vmatpush1.msra.mxu0 0.0
    %2499 = vmatprep.subr.mxu0 0.0
    %2500 = vmatpush1.msra.mxu0 0.0
    %2501 = vmatprep.subr.mxu0 0.0
    %2502 = vmatpush1.msra.mxu0 0.0
    %2503 = vmatprep.subr.mxu0 0.0
    %2504 = vmatpush1.msra.mxu0 0.0
    %2505 = vmatprep.mubr.f32.mxu0 0.0
    %2506 = vmatmul.mubr.f32.gmra.mrb[0].mxu0 %v2365
    %v2507 = vpop.f32.mrb[0].mxu0
    %v2508 = vadd.f32 0.0, %v2507
    %v2509 = vpop.f32.mrb[0].mxu0
    %2510 = vdwg.mxu0
    %v2511 = vadd.f32 %v382, %v2437
    %v2512 = vmul.f32 %v2511, 0.5
    %v2513 = vtanh.pop %v2512
    %v2514 = vmul.f32 %v2513, 0.5
    %v2515 = vadd.f32 %v2514, 0.5
    %v2516 = vadd.f32 %v384, %v2439
    %v2517 = vmul.f32 %v2516, 0.5
    %v2518 = vtanh.pop %v2517
    %v2519 = vmul.f32 %v2518, 0.5
    %v2520 = vadd.f32 %v2519, 0.5
    %v2521 = vadd.f32 %v2508, %v566
    %v2522 = vmul.f32 %v2515, %v2521
    %v2523 = vadd.f32 %v508, %v2522
    %v2524 = vtanh.pop %v2523
    %v2525 = vsub.f32 %v2365, %v2524
    %v2526 = vmul.f32 %v2520, %v2525
    %v2527 = vadd.f32 %v2524, %v2526
    %vm2528 = vcmp.gt.s32.totalorder %v511, 11
    %v2529 = vsel %vm2528, %v2527, %v2365
    %v2530 = vsel %vm2528, %v2527, 0.0
    %v2531 = vadd.f32 %v2367, %v2530
    %v2532 = vmax.f32 %v2369, %v2527
    %v2533 = vsel %vm2528, %v2532, %v2369
    %v2534 = vcvt.s32.f32 %v511
    %v2535 = vrcp.pop %v2534
    %v2536 = vmul.f32 %v2531, %v2535
    %v2537 = vld [vmem:[#allocation4] sm:$0xff]
    %v2538 = vld [vmem:[#allocation4 + $0x8] sm:$0xff]
    %v2539 = vld [vmem:[#allocation4 + $0x10] sm:$0xff]
    %v2540 = vld [vmem:[#allocation4 + $0x18] sm:$0xff]
    %v2541 = vld [vmem:[#allocation4 + $0x20] sm:$0xff]
    %v2542 = vld [vmem:[#allocation4 + $0x28] sm:$0xff]
    %v2543 = vld [vmem:[#allocation4 + $0x30] sm:$0xff]
    %v2544 = vld [vmem:[#allocation4 + $0x38] sm:$0xff]
    %v2545 = vld [vmem:[#allocation4 + $0x40] sm:$0xff]
    %v2546 = vld [vmem:[#allocation4 + $0x48] sm:$0xff]
    %v2547 = vld [vmem:[#allocation4 + $0x50] sm:$0xff]
    %v2548 = vld [vmem:[#allocation4 + $0x58] sm:$0xff]
    %v2549 = vld [vmem:[#allocation4 + $0x60] sm:$0xff]
    %v2550 = vld [vmem:[#allocation4 + $0x68] sm:$0xff]
    %v2551 = vld [vmem:[#allocation4 + $0x70] sm:$0xff]
    %v2552 = vld [vmem:[#allocation4 + $0x78] sm:$0xff]
    %s2553 = scalar_lea.vmem [#allocation4], 128
    %v2554 = vld [vmem:[%s2553] sm:$0xff]
    %v2555 = vld [vmem:[%s2553 + $0x8] sm:$0xff]
    %v2556 = vld [vmem:[%s2553 + $0x10] sm:$0xff]
    %v2557 = vld [vmem:[%s2553 + $0x18] sm:$0xff]
    %v2558 = vld [vmem:[%s2553 + $0x20] sm:$0xff]
    %v2559 = vld [vmem:[%s2553 + $0x28] sm:$0xff]
    %v2560 = vld [vmem:[%s2553 + $0x30] sm:$0xff]
    %v2561 = vld [vmem:[%s2553 + $0x38] sm:$0xff]
    %v2562 = vld [vmem:[%s2553 + $0x40] sm:$0xff]
    %v2563 = vld [vmem:[%s2553 + $0x48] sm:$0xff]
    %v2564 = vld [vmem:[%s2553 + $0x50] sm:$0xff]
    %v2565 = vld [vmem:[%s2553 + $0x58] sm:$0xff]
    %v2566 = vld [vmem:[%s2553 + $0x60] sm:$0xff]
    %v2567 = vld [vmem:[%s2553 + $0x68] sm:$0xff]
    %v2568 = vld [vmem:[%s2553 + $0x70] sm:$0xff]
    %v2569 = vld [vmem:[%s2553 + $0x78] sm:$0xff]
    %2570 = vmatprep.subr.mxu0 0.0
    %2571 = vmatpush1.msra.mxu0 %v2554
    %2572 = vmatprep.subr.mxu0 0.0
    %2573 = vmatpush1.msra.mxu0 %v2555
    %2574 = vmatprep.subr.mxu0 0.0
    %2575 = vmatpush1.msra.mxu0 %v2556
    %2576 = vmatprep.subr.mxu0 0.0
    %2577 = vmatpush1.msra.mxu0 %v2557
    %2578 = vmatprep.subr.mxu0 0.0
    %2579 = vmatpush1.msra.mxu0 %v2558
    %2580 = vmatprep.subr.mxu0 0.0
    %2581 = vmatpush1.msra.mxu0 %v2559
    %2582 = vmatprep.subr.mxu0 0.0
    %2583 = vmatpush1.msra.mxu0 %v2560
    %2584 = vmatprep.subr.mxu0 0.0
    %2585 = vmatpush1.msra.mxu0 %v2561
    %2586 = vmatprep.subr.mxu0 0.0
    %2587 = vmatpush1.msra.mxu0 %v2562
    %2588 = vmatprep.subr.mxu0 0.0
    %2589 = vmatpush1.msra.mxu0 %v2563
    %2590 = vmatprep.subr.mxu0 0.0
    %2591 = vmatpush1.msra.mxu0 %v2564
    %2592 = vmatprep.subr.mxu0 0.0
    %2593 = vmatpush1.msra.mxu0 %v2565
    %2594 = vmatprep.subr.mxu0 0.0
    %2595 = vmatpush1.msra.mxu0 %v2566
    %2596 = vmatprep.subr.mxu0 0.0
    %2597 = vmatpush1.msra.mxu0 %v2567
    %2598 = vmatprep.subr.mxu0 0.0
    %2599 = vmatpush1.msra.mxu0 %v2568
    %2600 = vmatprep.subr.mxu0 0.0
    %2601 = vmatpush1.msra.mxu0 %v2569
    %2602 = vmatprep.subr.mxu0 0.0
    %2603 = vmatpush1.msra.mxu0 0.0
    %2604 = vmatprep.subr.mxu0 0.0
    %2605 = vmatpush1.msra.mxu0 0.0
    %2606 = vmatprep.subr.mxu0 0.0
    %2607 = vmatpush1.msra.mxu0 0.0
    %2608 = vmatprep.subr.mxu0 0.0
    %2609 = vmatpush1.msra.mxu0 0.0
    %2610 = vmatprep.subr.mxu0 0.0
    %2611 = vmatpush1.msra.mxu0 0.0
    %2612 = vmatprep.subr.mxu0 0.0
    %2613 = vmatpush1.msra.mxu0 0.0
    %2614 = vmatprep.subr.mxu0 0.0
    %2615 = vmatpush1.msra.mxu0 0.0
    %2616 = vmatprep.subr.mxu0 0.0
    %2617 = vmatpush1.msra.mxu0 0.0
    %2618 = vmatprep.subr.mxu0 0.0
    %2619 = vmatpush1.msra.mxu0 0.0
    %2620 = vmatprep.subr.mxu0 0.0
    %2621 = vmatpush1.msra.mxu0 0.0
    %2622 = vmatprep.subr.mxu0 0.0
    %2623 = vmatpush1.msra.mxu0 0.0
    %2624 = vmatprep.subr.mxu0 0.0
    %2625 = vmatpush1.msra.mxu0 0.0
    %2626 = vmatprep.subr.mxu0 0.0
    %2627 = vmatpush1.msra.mxu0 0.0
    %2628 = vmatprep.subr.mxu0 0.0
    %2629 = vmatpush1.msra.mxu0 0.0
    %2630 = vmatprep.subr.mxu0 0.0
    %2631 = vmatpush1.msra.mxu0 0.0
    %2632 = vmatprep.subr.mxu0 0.0
    %2633 = vmatpush1.msra.mxu0 0.0
    %2634 = vmatprep.mubr.f32.mxu0 0.0
    %2635 = vmatmul.mubr.f32.gmra.mrb[0].mxu0 %v2536
    %v2636 = vpop.f32.mrb[0].mxu0
    %v2637 = vadd.f32 0.0, %v2636
    %v2638 = vpop.f32.mrb[0].mxu0
    %2639 = vdwg.mxu0
    %2640 = vmatprep.subr.mxu0 0.0
    %2641 = vmatpush1.msra.mxu0 %v2537
    %2642 = vmatprep.subr.mxu0 0.0
    %2643 = vmatpush1.msra.mxu0 %v2538
    %2644 = vmatprep.subr.mxu0 0.0
    %2645 = vmatpush1.msra.mxu0 %v2539
    %2646 = vmatprep.subr.mxu0 0.0
    %2647 = vmatpush1.msra.mxu0 %v2540
    %2648 = vmatprep.subr.mxu0 0.0
    %2649 = vmatpush1.msra.mxu0 %v2541
    %2650 = vmatprep.subr.mxu0 0.0
    %2651 = vmatpush1.msra.mxu0 %v2542
    %2652 = vmatprep.subr.mxu0 0.0
    %2653 = vmatpush1.msra.mxu0 %v2543
    %2654 = vmatprep.subr.mxu0 0.0
    %2655 = vmatpush1.msra.mxu0 %v2544
    %2656 = vmatprep.subr.mxu0 0.0
    %2657 = vmatpush1.msra.mxu0 %v2545
    %2658 = vmatprep.subr.mxu0 0.0
    %2659 = vmatpush1.msra.mxu0 %v2546
    %2660 = vmatprep.subr.mxu0 0.0
    %2661 = vmatpush1.msra.mxu0 %v2547
    %2662 = vmatprep.subr.mxu0 0.0
    %2663 = vmatpush1.msra.mxu0 %v2548
    %2664 = vmatprep.subr.mxu0 0.0
    %2665 = vmatpush1.msra.mxu0 %v2549
    %2666 = vmatprep.subr.mxu0 0.0
    %2667 = vmatpush1.msra.mxu0 %v2550
    %2668 = vmatprep.subr.mxu0 0.0
    %2669 = vmatpush1.msra.mxu0 %v2551
    %2670 = vmatprep.subr.mxu0 0.0
    %2671 = vmatpush1.msra.mxu0 %v2552
    %2672 = vmatprep.subr.mxu0 0.0
    %2673 = vmatpush1.msra.mxu0 0.0
    %2674 = vmatprep.subr.mxu0 0.0
    %2675 = vmatpush1.msra.mxu0 0.0
    %2676 = vmatprep.subr.mxu0 0.0
    %2677 = vmatpush1.msra.mxu0 0.0
    %2678 = vmatprep.subr.mxu0 0.0
    %2679 = vmatpush1.msra.mxu0 0.0
    %2680 = vmatprep.subr.mxu0 0.0
    %2681 = vmatpush1.msra.mxu0 0.0
    %2682 = vmatprep.subr.mxu0 0.0
    %2683 = vmatpush1.msra.mxu0 0.0
    %2684 = vmatprep.subr.mxu0 0.0
    %2685 = vmatpush1.msra.mxu0 0.0
    %2686 = vmatprep.subr.mxu0 0.0
    %2687 = vmatpush1.msra.mxu0 0.0
    %2688 = vmatprep.subr.mxu0 0.0
    %2689 = vmatpush1.msra.mxu0 0.0
    %2690 = vmatprep.subr.mxu0 0.0
    %2691 = vmatpush1.msra.mxu0 0.0
    %2692 = vmatprep.subr.mxu0 0.0
    %2693 = vmatpush1.msra.mxu0 0.0
    %2694 = vmatprep.subr.mxu0 0.0
    %2695 = vmatpush1.msra.mxu0 0.0
    %2696 = vmatprep.subr.mxu0 0.0
    %2697 = vmatpush1.msra.mxu0 0.0
    %2698 = vmatprep.subr.mxu0 0.0
    %2699 = vmatpush1.msra.mxu0 0.0
    %2700 = vmatprep.subr.mxu0 0.0
    %2701 = vmatpush1.msra.mxu0 0.0
    %2702 = vmatprep.subr.mxu0 0.0
    %2703 = vmatpush1.msra.mxu0 0.0
    %2704 = vmatprep.mubr.f32.mxu0 0.0
    %2705 = vmatmul.mubr.f32.gmra.mrb[0].mxu0 %v2529
    %v2706 = vpop.f32.mrb[0].mxu0
    %v2707 = vadd.f32 %v2637, %v2706
    %v2708 = vpop.f32.mrb[0].mxu0
    %2709 = vdwg.mxu0
    %s2710 = scalar_lea.vmem [#allocation4], 256
    %v2711 = vld [vmem:[%s2710] sm:$0xff]
    %v2712 = vld [vmem:[%s2710 + $0x8] sm:$0xff]
    %v2713 = vld [vmem:[%s2710 + $0x10] sm:$0xff]
    %v2714 = vld [vmem:[%s2710 + $0x18] sm:$0xff]
    %v2715 = vld [vmem:[%s2710 + $0x20] sm:$0xff]
    %v2716 = vld [vmem:[%s2710 + $0x28] sm:$0xff]
    %v2717 = vld [vmem:[%s2710 + $0x30] sm:$0xff]
    %v2718 = vld [vmem:[%s2710 + $0x38] sm:$0xff]
    %v2719 = vld [vmem:[%s2710 + $0x40] sm:$0xff]
    %v2720 = vld [vmem:[%s2710 + $0x48] sm:$0xff]
    %v2721 = vld [vmem:[%s2710 + $0x50] sm:$0xff]
    %v2722 = vld [vmem:[%s2710 + $0x58] sm:$0xff]
    %v2723 = vld [vmem:[%s2710 + $0x60] sm:$0xff]
    %v2724 = vld [vmem:[%s2710 + $0x68] sm:$0xff]
    %v2725 = vld [vmem:[%s2710 + $0x70] sm:$0xff]
    %v2726 = vld [vmem:[%s2710 + $0x78] sm:$0xff]
    %2727 = vmatprep.subr.mxu0 0.0
    %2728 = vmatpush1.msra.mxu0 %v2711
    %2729 = vmatprep.subr.mxu0 0.0
    %2730 = vmatpush1.msra.mxu0 %v2712
    %2731 = vmatprep.subr.mxu0 0.0
    %2732 = vmatpush1.msra.mxu0 %v2713
    %2733 = vmatprep.subr.mxu0 0.0
    %2734 = vmatpush1.msra.mxu0 %v2714
    %2735 = vmatprep.subr.mxu0 0.0
    %2736 = vmatpush1.msra.mxu0 %v2715
    %2737 = vmatprep.subr.mxu0 0.0
    %2738 = vmatpush1.msra.mxu0 %v2716
    %2739 = vmatprep.subr.mxu0 0.0
    %2740 = vmatpush1.msra.mxu0 %v2717
    %2741 = vmatprep.subr.mxu0 0.0
    %2742 = vmatpush1.msra.mxu0 %v2718
    %2743 = vmatprep.subr.mxu0 0.0
    %2744 = vmatpush1.msra.mxu0 %v2719
    %2745 = vmatprep.subr.mxu0 0.0
    %2746 = vmatpush1.msra.mxu0 %v2720
    %2747 = vmatprep.subr.mxu0 0.0
    %2748 = vmatpush1.msra.mxu0 %v2721
    %2749 = vmatprep.subr.mxu0 0.0
    %2750 = vmatpush1.msra.mxu0 %v2722
    %2751 = vmatprep.subr.mxu0 0.0
    %2752 = vmatpush1.msra.mxu0 %v2723
    %2753 = vmatprep.subr.mxu0 0.0
    %2754 = vmatpush1.msra.mxu0 %v2724
    %2755 = vmatprep.subr.mxu0 0.0
    %2756 = vmatpush1.msra.mxu0 %v2725
    %2757 = vmatprep.subr.mxu0 0.0
    %2758 = vmatpush1.msra.mxu0 %v2726
    %2759 = vmatprep.subr.mxu0 0.0
    %2760 = vmatpush1.msra.mxu0 0.0
    %2761 = vmatprep.subr.mxu0 0.0
    %2762 = vmatpush1.msra.mxu0 0.0
    %2763 = vmatprep.subr.mxu0 0.0
    %2764 = vmatpush1.msra.mxu0 0.0
    %2765 = vmatprep.subr.mxu0 0.0
    %2766 = vmatpush1.msra.mxu0 0.0
    %2767 = vmatprep.subr.mxu0 0.0
    %2768 = vmatpush1.msra.mxu0 0.0
    %2769 = vmatprep.subr.mxu0 0.0
    %2770 = vmatpush1.msra.mxu0 0.0
    %2771 = vmatprep.subr.mxu0 0.0
    %2772 = vmatpush1.msra.mxu0 0.0
    %2773 = vmatprep.subr.mxu0 0.0
    %2774 = vmatpush1.msra.mxu0 0.0
    %2775 = vmatprep.subr.mxu0 0.0
    %2776 = vmatpush1.msra.mxu0 0.0
    %2777 = vmatprep.subr.mxu0 0.0
    %2778 = vmatpush1.msra.mxu0 0.0
    %2779 = vmatprep.subr.mxu0 0.0
    %2780 = vmatpush1.msra.mxu0 0.0
    %2781 = vmatprep.subr.mxu0 0.0
    %2782 = vmatpush1.msra.mxu0 0.0
    %2783 = vmatprep.subr.mxu0 0.0
    %2784 = vmatpush1.msra.mxu0 0.0
    %2785 = vmatprep.subr.mxu0 0.0
    %2786 = vmatpush1.msra.mxu0 0.0
    %2787 = vmatprep.subr.mxu0 0.0
    %2788 = vmatpush1.msra.mxu0 0.0
    %2789 = vmatprep.subr.mxu0 0.0
    %2790 = vmatpush1.msra.mxu0 0.0
    %2791 = vmatprep.mubr.f32.mxu0 0.0
    %2792 = vmatmul.mubr.f32.gmra.mrb[0].mxu0 %v2533
    %v2793 = vpop.f32.mrb[0].mxu0
    %v2794 = vadd.f32 0.0, %v2793
    %v2795 = vpop.f32.mrb[0].mxu0
    %2796 = vdwg.mxu0
    %v2797 = vadd.f32 %v2707, %v2794
    %v2798 = vld [vmem:[%s6] sm:$0x1]
    %v2800 = vlaneseq
    %v2801 = vshrl.u32 %v2800, 7
    %v2802 = vsub.s32 0, %v2801
    %v2803 = vrot.slane %v2798, %v2802
    %v2805 = vadd.f32 %v2797, %v2803
    %vm2806 = vcmp.ge.f32.partialorder %v2805, 0.0
    %v2807 = vmul.f32 %v2805, 0.01
    %v2808 = vsel %vm2806, %v2805, %v2807
    %v2809 = vld [vmem:[%s2] sm:$0xff]
    %s2810 = scalar_lea.vmem [#allocation4], 384
    %v2811 = vld [vmem:[%s2810] sm:$0xff]
    %v2812 = vld [vmem:[%s2810 + $0x8] sm:$0xff]
    %v2813 = vld [vmem:[%s2810 + $0x10] sm:$0xff]
    %v2814 = vld [vmem:[%s2810 + $0x18] sm:$0xff]
    %v2815 = vld [vmem:[%s2810 + $0x20] sm:$0xff]
    %v2816 = vld [vmem:[%s2810 + $0x28] sm:$0xff]
    %v2817 = vld [vmem:[%s2810 + $0x30] sm:$0xff]
    %v2818 = vld [vmem:[%s2810 + $0x38] sm:$0xff]
    %v2819 = vld [vmem:[%s2810 + $0x40] sm:$0xff]
    %v2820 = vld [vmem:[%s2810 + $0x48] sm:$0xff]
    %v2821 = vld [vmem:[%s2810 + $0x50] sm:$0xff]
    %v2822 = vld [vmem:[%s2810 + $0x58] sm:$0xff]
    %v2823 = vld [vmem:[%s2810 + $0x60] sm:$0xff]
    %v2824 = vld [vmem:[%s2810 + $0x68] sm:$0xff]
    %v2825 = vld [vmem:[%s2810 + $0x70] sm:$0xff]
    %v2826 = vld [vmem:[%s2810 + $0x78] sm:$0xff]
    %s2827 = scalar_lea.vmem %s6, 1
    %v2828 = vld [vmem:[%s2827] sm:$0x1]
    %v2830 = vlaneseq
    %v2831 = vshrl.u32 %v2830, 7
    %v2832 = vsub.s32 0, %v2831
    %v2833 = vrot.slane %v2828, %v2832
    %2835 = vmatprep.subr.mxu0 0.0
    %2836 = vmatpush1.msra.mxu0 %v2811
    %2837 = vmatprep.subr.mxu0 0.0
    %2838 = vmatpush1.msra.mxu0 %v2812
    %2839 = vmatprep.subr.mxu0 0.0
    %2840 = vmatpush1.msra.mxu0 %v2813
    %2841 = vmatprep.subr.mxu0 0.0
    %2842 = vmatpush1.msra.mxu0 %v2814
    %2843 = vmatprep.subr.mxu0 0.0
    %2844 = vmatpush1.msra.mxu0 %v2815
    %2845 = vmatprep.subr.mxu0 0.0
    %2846 = vmatpush1.msra.mxu0 %v2816
    %2847 = vmatprep.subr.mxu0 0.0
    %2848 = vmatpush1.msra.mxu0 %v2817
    %2849 = vmatprep.subr.mxu0 0.0
    %2850 = vmatpush1.msra.mxu0 %v2818
    %2851 = vmatprep.subr.mxu0 0.0
    %2852 = vmatpush1.msra.mxu0 %v2819
    %2853 = vmatprep.subr.mxu0 0.0
    %2854 = vmatpush1.msra.mxu0 %v2820
    %2855 = vmatprep.subr.mxu0 0.0
    %2856 = vmatpush1.msra.mxu0 %v2821
    %2857 = vmatprep.subr.mxu0 0.0
    %2858 = vmatpush1.msra.mxu0 %v2822
    %2859 = vmatprep.subr.mxu0 0.0
    %2860 = vmatpush1.msra.mxu0 %v2823
    %2861 = vmatprep.subr.mxu0 0.0
    %2862 = vmatpush1.msra.mxu0 %v2824
    %2863 = vmatprep.subr.mxu0 0.0
    %2864 = vmatpush1.msra.mxu0 %v2825
    %2865 = vmatprep.subr.mxu0 0.0
    %2866 = vmatpush1.msra.mxu0 %v2826
    %2867 = vmatprep.subr.mxu0 0.0
    %2868 = vmatpush1.msra.mxu0 0.0
    %2869 = vmatprep.subr.mxu0 0.0
    %2870 = vmatpush1.msra.mxu0 0.0
    %2871 = vmatprep.subr.mxu0 0.0
    %2872 = vmatpush1.msra.mxu0 0.0
    %2873 = vmatprep.subr.mxu0 0.0
    %2874 = vmatpush1.msra.mxu0 0.0
    %2875 = vmatprep.subr.mxu0 0.0
    %2876 = vmatpush1.msra.mxu0 0.0
    %2877 = vmatprep.subr.mxu0 0.0
    %2878 = vmatpush1.msra.mxu0 0.0
    %2879 = vmatprep.subr.mxu0 0.0
    %2880 = vmatpush1.msra.mxu0 0.0
    %2881 = vmatprep.subr.mxu0 0.0
    %2882 = vmatpush1.msra.mxu0 0.0
    %2883 = vmatprep.subr.mxu0 0.0
    %2884 = vmatpush1.msra.mxu0 0.0
    %2885 = vmatprep.subr.mxu0 0.0
    %2886 = vmatpush1.msra.mxu0 0.0
    %2887 = vmatprep.subr.mxu0 0.0
    %2888 = vmatpush1.msra.mxu0 0.0
    %2889 = vmatprep.subr.mxu0 0.0
    %2890 = vmatpush1.msra.mxu0 0.0
    %2891 = vmatprep.subr.mxu0 0.0
    %2892 = vmatpush1.msra.mxu0 0.0
    %2893 = vmatprep.subr.mxu0 0.0
    %2894 = vmatpush1.msra.mxu0 0.0
    %2895 = vmatprep.subr.mxu0 0.0
    %2896 = vmatpush1.msra.mxu0 0.0
    %2897 = vmatprep.subr.mxu0 0.0
    %2898 = vmatpush1.msra.mxu0 0.0
    %2899 = vmatprep.mubr.f32.mxu0 0.0
    %2900 = vmatmul.mubr.f32.gmra.mrb[0].mxu0 %v2809
    %v2901 = vpop.f32.mrb[0].mxu0
    %v2902 = vadd.f32 %v2833, %v2901
    %v2903 = vpop.f32.mrb[0].mxu0
    %2904 = vdwg.mxu0
    %v2905 = vmax.f32 %v2902, 0.0
    %s2906 = scalar_lea.vmem [#allocation4], 512
    %v2907 = vld [vmem:[%s2906] sm:$0xff]
    %v2908 = vld [vmem:[%s2906 + $0x8] sm:$0xff]
    %v2909 = vld [vmem:[%s2906 + $0x10] sm:$0xff]
    %v2910 = vld [vmem:[%s2906 + $0x18] sm:$0xff]
    %v2911 = vld [vmem:[%s2906 + $0x20] sm:$0xff]
    %v2912 = vld [vmem:[%s2906 + $0x28] sm:$0xff]
    %v2913 = vld [vmem:[%s2906 + $0x30] sm:$0xff]
    %v2914 = vld [vmem:[%s2906 + $0x38] sm:$0xff]
    %v2915 = vld [vmem:[%s2906 + $0x40] sm:$0xff]
    %v2916 = vld [vmem:[%s2906 + $0x48] sm:$0xff]
    %v2917 = vld [vmem:[%s2906 + $0x50] sm:$0xff]
    %v2918 = vld [vmem:[%s2906 + $0x58] sm:$0xff]
    %v2919 = vld [vmem:[%s2906 + $0x60] sm:$0xff]
    %v2920 = vld [vmem:[%s2906 + $0x68] sm:$0xff]
    %v2921 = vld [vmem:[%s2906 + $0x70] sm:$0xff]
    %v2922 = vld [vmem:[%s2906 + $0x78] sm:$0xff]
    %s2923 = scalar_lea.vmem %s6, 2
    %v2924 = vld [vmem:[%s2923] sm:$0x1]
    %v2926 = vlaneseq
    %v2927 = vshrl.u32 %v2926, 7
    %v2928 = vsub.s32 0, %v2927
    %v2929 = vrot.slane %v2924, %v2928
    %2931 = vmatprep.subr.mxu0 0.0
    %2932 = vmatpush1.msra.mxu0 %v2907
    %2933 = vmatprep.subr.mxu0 0.0
    %2934 = vmatpush1.msra.mxu0 %v2908
    %2935 = vmatprep.subr.mxu0 0.0
    %2936 = vmatpush1.msra.mxu0 %v2909
    %2937 = vmatprep.subr.mxu0 0.0
    %2938 = vmatpush1.msra.mxu0 %v2910
    %2939 = vmatprep.subr.mxu0 0.0
    %2940 = vmatpush1.msra.mxu0 %v2911
    %2941 = vmatprep.subr.mxu0 0.0
    %2942 = vmatpush1.msra.mxu0 %v2912
    %2943 = vmatprep.subr.mxu0 0.0
    %2944 = vmatpush1.msra.mxu0 %v2913
    %2945 = vmatprep.subr.mxu0 0.0
    %2946 = vmatpush1.msra.mxu0 %v2914
    %2947 = vmatprep.subr.mxu0 0.0
    %2948 = vmatpush1.msra.mxu0 %v2915
    %2949 = vmatprep.subr.mxu0 0.0
    %2950 = vmatpush1.msra.mxu0 %v2916
    %2951 = vmatprep.subr.mxu0 0.0
    %2952 = vmatpush1.msra.mxu0 %v2917
    %2953 = vmatprep.subr.mxu0 0.0
    %2954 = vmatpush1.msra.mxu0 %v2918
    %2955 = vmatprep.subr.mxu0 0.0
    %2956 = vmatpush1.msra.mxu0 %v2919
    %2957 = vmatprep.subr.mxu0 0.0
    %2958 = vmatpush1.msra.mxu0 %v2920
    %2959 = vmatprep.subr.mxu0 0.0
    %2960 = vmatpush1.msra.mxu0 %v2921
    %2961 = vmatprep.subr.mxu0 0.0
    %2962 = vmatpush1.msra.mxu0 %v2922
    %2963 = vmatprep.subr.mxu0 0.0
    %2964 = vmatpush1.msra.mxu0 0.0
    %2965 = vmatprep.subr.mxu0 0.0
    %2966 = vmatpush1.msra.mxu0 0.0
    %2967 = vmatprep.subr.mxu0 0.0
    %2968 = vmatpush1.msra.mxu0 0.0
    %2969 = vmatprep.subr.mxu0 0.0
    %2970 = vmatpush1.msra.mxu0 0.0
    %2971 = vmatprep.subr.mxu0 0.0
    %2972 = vmatpush1.msra.mxu0 0.0
    %2973 = vmatprep.subr.mxu0 0.0
    %2974 = vmatpush1.msra.mxu0 0.0
    %2975 = vmatprep.subr.mxu0 0.0
    %2976 = vmatpush1.msra.mxu0 0.0
    %2977 = vmatprep.subr.mxu0 0.0
    %2978 = vmatpush1.msra.mxu0 0.0
    %2979 = vmatprep.subr.mxu0 0.0
    %2980 = vmatpush1.msra.mxu0 0.0
    %2981 = vmatprep.subr.mxu0 0.0
    %2982 = vmatpush1.msra.mxu0 0.0
    %2983 = vmatprep.subr.mxu0 0.0
    %2984 = vmatpush1.msra.mxu0 0.0
    %2985 = vmatprep.subr.mxu0 0.0
    %2986 = vmatpush1.msra.mxu0 0.0
    %2987 = vmatprep.subr.mxu0 0.0
    %2988 = vmatpush1.msra.mxu0 0.0
    %2989 = vmatprep.subr.mxu0 0.0
    %2990 = vmatpush1.msra.mxu0 0.0
    %2991 = vmatprep.subr.mxu0 0.0
    %2992 = vmatpush1.msra.mxu0 0.0
    %2993 = vmatprep.subr.mxu0 0.0
    %2994 = vmatpush1.msra.mxu0 0.0
    %2995 = vmatprep.mubr.f32.mxu0 0.0
    %2996 = vmatmul.mubr.f32.gmra.mrb[0].mxu0 %v2905
    %v2997 = vpop.f32.mrb[0].mxu0
    %v2998 = vadd.f32 %v2929, %v2997
    %v2999 = vpop.f32.mrb[0].mxu0
    %3000 = vdwg.mxu0
    %vm3001 = vcmp.ge.f32.partialorder %v2998, 0.0
    %v3002 = vmul.f32 %v2998, 0.01
    %v3003 = vsel %vm3001, %v2998, %v3002
    %s3004 = scalar_lea.vmem [#allocation4], 640
    %v3005 = vld [vmem:[%s3004] sm:$0xff]
    %v3006 = vld [vmem:[%s3004 + $0x8] sm:$0xff]
    %v3007 = vld [vmem:[%s3004 + $0x10] sm:$0xff]
    %v3008 = vld [vmem:[%s3004 + $0x18] sm:$0xff]
    %v3009 = vld [vmem:[%s3004 + $0x20] sm:$0xff]
    %v3010 = vld [vmem:[%s3004 + $0x28] sm:$0xff]
    %v3011 = vld [vmem:[%s3004 + $0x30] sm:$0xff]
    %v3012 = vld [vmem:[%s3004 + $0x38] sm:$0xff]
    %v3013 = vld [vmem:[%s3004 + $0x40] sm:$0xff]
    %v3014 = vld [vmem:[%s3004 + $0x48] sm:$0xff]
    %v3015 = vld [vmem:[%s3004 + $0x50] sm:$0xff]
    %v3016 = vld [vmem:[%s3004 + $0x58] sm:$0xff]
    %v3017 = vld [vmem:[%s3004 + $0x60] sm:$0xff]
    %v3018 = vld [vmem:[%s3004 + $0x68] sm:$0xff]
    %v3019 = vld [vmem:[%s3004 + $0x70] sm:$0xff]
    %v3020 = vld [vmem:[%s3004 + $0x78] sm:$0xff]
    %s3021 = scalar_lea.vmem [#allocation4], 768
    %v3022 = vld [vmem:[%s3021] sm:$0xff]
    %v3023 = vld [vmem:[%s3021 + $0x8] sm:$0xff]
    %v3024 = vld [vmem:[%s3021 + $0x10] sm:$0xff]
    %v3025 = vld [vmem:[%s3021 + $0x18] sm:$0xff]
    %v3026 = vld [vmem:[%s3021 + $0x20] sm:$0xff]
    %v3027 = vld [vmem:[%s3021 + $0x28] sm:$0xff]
    %v3028 = vld [vmem:[%s3021 + $0x30] sm:$0xff]
    %v3029 = vld [vmem:[%s3021 + $0x38] sm:$0xff]
    %v3030 = vld [vmem:[%s3021 + $0x40] sm:$0xff]
    %v3031 = vld [vmem:[%s3021 + $0x48] sm:$0xff]
    %v3032 = vld [vmem:[%s3021 + $0x50] sm:$0xff]
    %v3033 = vld [vmem:[%s3021 + $0x58] sm:$0xff]
    %v3034 = vld [vmem:[%s3021 + $0x60] sm:$0xff]
    %v3035 = vld [vmem:[%s3021 + $0x68] sm:$0xff]
    %v3036 = vld [vmem:[%s3021 + $0x70] sm:$0xff]
    %v3037 = vld [vmem:[%s3021 + $0x78] sm:$0xff]
    %3038 = vmatprep.subr.mxu0 0.0
    %3039 = vmatpush1.msra.mxu0 %v3022
    %3040 = vmatprep.subr.mxu0 0.0
    %3041 = vmatpush1.msra.mxu0 %v3023
    %3042 = vmatprep.subr.mxu0 0.0
    %3043 = vmatpush1.msra.mxu0 %v3024
    %3044 = vmatprep.subr.mxu0 0.0
    %3045 = vmatpush1.msra.mxu0 %v3025
    %3046 = vmatprep.subr.mxu0 0.0
    %3047 = vmatpush1.msra.mxu0 %v3026
    %3048 = vmatprep.subr.mxu0 0.0
    %3049 = vmatpush1.msra.mxu0 %v3027
    %3050 = vmatprep.subr.mxu0 0.0
    %3051 = vmatpush1.msra.mxu0 %v3028
    %3052 = vmatprep.subr.mxu0 0.0
    %3053 = vmatpush1.msra.mxu0 %v3029
    %3054 = vmatprep.subr.mxu0 0.0
    %3055 = vmatpush1.msra.mxu0 %v3030
    %3056 = vmatprep.subr.mxu0 0.0
    %3057 = vmatpush1.msra.mxu0 %v3031
    %3058 = vmatprep.subr.mxu0 0.0
    %3059 = vmatpush1.msra.mxu0 %v3032
    %3060 = vmatprep.subr.mxu0 0.0
    %3061 = vmatpush1.msra.mxu0 %v3033
    %3062 = vmatprep.subr.mxu0 0.0
    %3063 = vmatpush1.msra.mxu0 %v3034
    %3064 = vmatprep.subr.mxu0 0.0
    %3065 = vmatpush1.msra.mxu0 %v3035
    %3066 = vmatprep.subr.mxu0 0.0
    %3067 = vmatpush1.msra.mxu0 %v3036
    %3068 = vmatprep.subr.mxu0 0.0
    %3069 = vmatpush1.msra.mxu0 %v3037
    %3070 = vmatprep.subr.mxu0 0.0
    %3071 = vmatpush1.msra.mxu0 0.0
    %3072 = vmatprep.subr.mxu0 0.0
    %3073 = vmatpush1.msra.mxu0 0.0
    %3074 = vmatprep.subr.mxu0 0.0
    %3075 = vmatpush1.msra.mxu0 0.0
    %3076 = vmatprep.subr.mxu0 0.0
    %3077 = vmatpush1.msra.mxu0 0.0
    %3078 = vmatprep.subr.mxu0 0.0
    %3079 = vmatpush1.msra.mxu0 0.0
    %3080 = vmatprep.subr.mxu0 0.0
    %3081 = vmatpush1.msra.mxu0 0.0
    %3082 = vmatprep.subr.mxu0 0.0
    %3083 = vmatpush1.msra.mxu0 0.0
    %3084 = vmatprep.subr.mxu0 0.0
    %3085 = vmatpush1.msra.mxu0 0.0
    %3086 = vmatprep.subr.mxu0 0.0
    %3087 = vmatpush1.msra.mxu0 0.0
    %3088 = vmatprep.subr.mxu0 0.0
    %3089 = vmatpush1.msra.mxu0 0.0
    %3090 = vmatprep.subr.mxu0 0.0
    %3091 = vmatpush1.msra.mxu0 0.0
    %3092 = vmatprep.subr.mxu0 0.0
    %3093 = vmatpush1.msra.mxu0 0.0
    %3094 = vmatprep.subr.mxu0 0.0
    %3095 = vmatpush1.msra.mxu0 0.0
    %3096 = vmatprep.subr.mxu0 0.0
    %3097 = vmatpush1.msra.mxu0 0.0
    %3098 = vmatprep.subr.mxu0 0.0
    %3099 = vmatpush1.msra.mxu0 0.0
    %3100 = vmatprep.subr.mxu0 0.0
    %3101 = vmatpush1.msra.mxu0 0.0
    %3102 = vmatprep.mubr.f32.mxu0 0.0
    %3103 = vmatmul.mubr.f32.gmra.mrb[0].mxu0 %v3003
    %v3104 = vpop.f32.mrb[0].mxu0
    %v3105 = vadd.f32 0.0, %v3104
    %v3106 = vpop.f32.mrb[0].mxu0
    %3107 = vdwg.mxu0
    %3108 = vmatprep.subr.mxu0 0.0
    %3109 = vmatpush1.msra.mxu0 %v3005
    %3110 = vmatprep.subr.mxu0 0.0
    %3111 = vmatpush1.msra.mxu0 %v3006
    %3112 = vmatprep.subr.mxu0 0.0
    %3113 = vmatpush1.msra.mxu0 %v3007
    %3114 = vmatprep.subr.mxu0 0.0
    %3115 = vmatpush1.msra.mxu0 %v3008
    %3116 = vmatprep.subr.mxu0 0.0
    %3117 = vmatpush1.msra.mxu0 %v3009
    %3118 = vmatprep.subr.mxu0 0.0
    %3119 = vmatpush1.msra.mxu0 %v3010
    %3120 = vmatprep.subr.mxu0 0.0
    %3121 = vmatpush1.msra.mxu0 %v3011
    %3122 = vmatprep.subr.mxu0 0.0
    %3123 = vmatpush1.msra.mxu0 %v3012
    %3124 = vmatprep.subr.mxu0 0.0
    %3125 = vmatpush1.msra.mxu0 %v3013
    %3126 = vmatprep.subr.mxu0 0.0
    %3127 = vmatpush1.msra.mxu0 %v3014
    %3128 = vmatprep.subr.mxu0 0.0
    %3129 = vmatpush1.msra.mxu0 %v3015
    %3130 = vmatprep.subr.mxu0 0.0
    %3131 = vmatpush1.msra.mxu0 %v3016
    %3132 = vmatprep.subr.mxu0 0.0
    %3133 = vmatpush1.msra.mxu0 %v3017
    %3134 = vmatprep.subr.mxu0 0.0
    %3135 = vmatpush1.msra.mxu0 %v3018
    %3136 = vmatprep.subr.mxu0 0.0
    %3137 = vmatpush1.msra.mxu0 %v3019
    %3138 = vmatprep.subr.mxu0 0.0
    %3139 = vmatpush1.msra.mxu0 %v3020
    %3140 = vmatprep.subr.mxu0 0.0
    %3141 = vmatpush1.msra.mxu0 0.0
    %3142 = vmatprep.subr.mxu0 0.0
    %3143 = vmatpush1.msra.mxu0 0.0
    %3144 = vmatprep.subr.mxu0 0.0
    %3145 = vmatpush1.msra.mxu0 0.0
    %3146 = vmatprep.subr.mxu0 0.0
    %3147 = vmatpush1.msra.mxu0 0.0
    %3148 = vmatprep.subr.mxu0 0.0
    %3149 = vmatpush1.msra.mxu0 0.0
    %3150 = vmatprep.subr.mxu0 0.0
    %3151 = vmatpush1.msra.mxu0 0.0
    %3152 = vmatprep.subr.mxu0 0.0
    %3153 = vmatpush1.msra.mxu0 0.0
    %3154 = vmatprep.subr.mxu0 0.0
    %3155 = vmatpush1.msra.mxu0 0.0
    %3156 = vmatprep.subr.mxu0 0.0
    %3157 = vmatpush1.msra.mxu0 0.0
    %3158 = vmatprep.subr.mxu0 0.0
    %3159 = vmatpush1.msra.mxu0 0.0
    %3160 = vmatprep.subr.mxu0 0.0
    %3161 = vmatpush1.msra.mxu0 0.0
    %3162 = vmatprep.subr.mxu0 0.0
    %3163 = vmatpush1.msra.mxu0 0.0
    %3164 = vmatprep.subr.mxu0 0.0
    %3165 = vmatpush1.msra.mxu0 0.0
    %3166 = vmatprep.subr.mxu0 0.0
    %3167 = vmatpush1.msra.mxu0 0.0
    %3168 = vmatprep.subr.mxu0 0.0
    %3169 = vmatpush1.msra.mxu0 0.0
    %3170 = vmatprep.subr.mxu0 0.0
    %3171 = vmatpush1.msra.mxu0 0.0
    %3172 = vmatprep.mubr.f32.mxu0 0.0
    %3173 = vmatmul.mubr.f32.gmra.mrb[0].mxu0 %v2808
    %v3174 = vpop.f32.mrb[0].mxu0
    %v3175 = vadd.f32 %v3105, %v3174
    %v3176 = vpop.f32.mrb[0].mxu0
    %3177 = vdwg.mxu0
    %s3178 = scalar_lea.vmem %s6, 3
    %v3179 = vld [vmem:[%s3178] sm:$0x1]
    %v3181 = vlaneseq
    %v3182 = vshrl.u32 %v3181, 7
    %v3183 = vsub.s32 0, %v3182
    %v3184 = vrot.slane %v3179, %v3183
    %v3186 = vadd.f32 %v3175, %v3184
    %v3187 = vmax.f32 %v3186, 0.0
    %s3188 = scalar_lea.vmem [#allocation4], 896
    %v3189 = vld [vmem:[%s3188] sm:$0xff]
    %v3190 = vld [vmem:[%s3188 + $0x8] sm:$0xff]
    %v3191 = vld [vmem:[%s3188 + $0x10] sm:$0xff]
    %v3192 = vld [vmem:[%s3188 + $0x18] sm:$0xff]
    %v3193 = vld [vmem:[%s3188 + $0x20] sm:$0xff]
    %v3194 = vld [vmem:[%s3188 + $0x28] sm:$0xff]
    %v3195 = vld [vmem:[%s3188 + $0x30] sm:$0xff]
    %v3196 = vld [vmem:[%s3188 + $0x38] sm:$0xff]
    %v3197 = vld [vmem:[%s3188 + $0x40] sm:$0xff]
    %v3198 = vld [vmem:[%s3188 + $0x48] sm:$0xff]
    %v3199 = vld [vmem:[%s3188 + $0x50] sm:$0xff]
    %v3200 = vld [vmem:[%s3188 + $0x58] sm:$0xff]
    %v3201 = vld [vmem:[%s3188 + $0x60] sm:$0xff]
    %v3202 = vld [vmem:[%s3188 + $0x68] sm:$0xff]
    %v3203 = vld [vmem:[%s3188 + $0x70] sm:$0xff]
    %v3204 = vld [vmem:[%s3188 + $0x78] sm:$0xff]
    %s3205 = scalar_lea.vmem %s6, 4
    %v3206 = vld [vmem:[%s3205] sm:$0x1]
    %v3208 = vlaneseq
    %v3209 = vshrl.u32 %v3208, 7
    %v3210 = vsub.s32 0, %v3209
    %v3211 = vrot.slane %v3206, %v3210
    %3213 = vmatprep.subr.mxu0 0.0
    %3214 = vmatpush1.msra.mxu0 %v3189
    %3215 = vmatprep.subr.mxu0 0.0
    %3216 = vmatpush1.msra.mxu0 %v3190
    %3217 = vmatprep.subr.mxu0 0.0
    %3218 = vmatpush1.msra.mxu0 %v3191
    %3219 = vmatprep.subr.mxu0 0.0
    %3220 = vmatpush1.msra.mxu0 %v3192
    %3221 = vmatprep.subr.mxu0 0.0
    %3222 = vmatpush1.msra.mxu0 %v3193
    %3223 = vmatprep.subr.mxu0 0.0
    %3224 = vmatpush1.msra.mxu0 %v3194
    %3225 = vmatprep.subr.mxu0 0.0
    %3226 = vmatpush1.msra.mxu0 %v3195
    %3227 = vmatprep.subr.mxu0 0.0
    %3228 = vmatpush1.msra.mxu0 %v3196
    %3229 = vmatprep.subr.mxu0 0.0
    %3230 = vmatpush1.msra.mxu0 %v3197
    %3231 = vmatprep.subr.mxu0 0.0
    %3232 = vmatpush1.msra.mxu0 %v3198
    %3233 = vmatprep.subr.mxu0 0.0
    %3234 = vmatpush1.msra.mxu0 %v3199
    %3235 = vmatprep.subr.mxu0 0.0
    %3236 = vmatpush1.msra.mxu0 %v3200
    %3237 = vmatprep.subr.mxu0 0.0
    %3238 = vmatpush1.msra.mxu0 %v3201
    %3239 = vmatprep.subr.mxu0 0.0
    %3240 = vmatpush1.msra.mxu0 %v3202
    %3241 = vmatprep.subr.mxu0 0.0
    %3242 = vmatpush1.msra.mxu0 %v3203
    %3243 = vmatprep.subr.mxu0 0.0
    %3244 = vmatpush1.msra.mxu0 %v3204
    %3245 = vmatprep.subr.mxu0 0.0
    %3246 = vmatpush1.msra.mxu0 0.0
    %3247 = vmatprep.subr.mxu0 0.0
    %3248 = vmatpush1.msra.mxu0 0.0
    %3249 = vmatprep.subr.mxu0 0.0
    %3250 = vmatpush1.msra.mxu0 0.0
    %3251 = vmatprep.subr.mxu0 0.0
    %3252 = vmatpush1.msra.mxu0 0.0
    %3253 = vmatprep.subr.mxu0 0.0
    %3254 = vmatpush1.msra.mxu0 0.0
    %3255 = vmatprep.subr.mxu0 0.0
    %3256 = vmatpush1.msra.mxu0 0.0
    %3257 = vmatprep.subr.mxu0 0.0
    %3258 = vmatpush1.msra.mxu0 0.0
    %3259 = vmatprep.subr.mxu0 0.0
    %3260 = vmatpush1.msra.mxu0 0.0
    %3261 = vmatprep.subr.mxu0 0.0
    %3262 = vmatpush1.msra.mxu0 0.0
    %3263 = vmatprep.subr.mxu0 0.0
    %3264 = vmatpush1.msra.mxu0 0.0
    %3265 = vmatprep.subr.mxu0 0.0
    %3266 = vmatpush1.msra.mxu0 0.0
    %3267 = vmatprep.subr.mxu0 0.0
    %3268 = vmatpush1.msra.mxu0 0.0
    %3269 = vmatprep.subr.mxu0 0.0
    %3270 = vmatpush1.msra.mxu0 0.0
    %3271 = vmatprep.subr.mxu0 0.0
    %3272 = vmatpush1.msra.mxu0 0.0
    %3273 = vmatprep.subr.mxu0 0.0
    %3274 = vmatpush1.msra.mxu0 0.0
    %3275 = vmatprep.subr.mxu0 0.0
    %3276 = vmatpush1.msra.mxu0 0.0
    %3277 = vmatprep.mubr.f32.mxu0 0.0
    %3278 = vmatmul.mubr.f32.gmra.mrb[0].mxu0 %v3187
    %v3279 = vpop.f32.mrb[0].mxu0
    %v3280 = vadd.f32 %v3211, %v3279
    %v3281 = vpop.f32.mrb[0].mxu0
    %3282 = vdwg.mxu0
    %3283 = vst [vmem:[%s7] sm:$0xff] %v3280
    // Predicated region
    $region38: #{model_forward.1} parent=1 // pred_check
      _
    $region39: #{model_forward.1} parent=1 // pred_check_branch
      %3285 = sbr.rel (0) target = $region41
    $region40: #{model_forward.1} parent=1 // pred_region
      _
    $region41: #{model_forward.1} parent=1 // pred_fallthru
      _
    // Predicated region
    $region42: #{model_forward.1} parent=1 // pred_check
      _
    $region43: #{model_forward.1} parent=1 // pred_check_branch
      %3287 = sbr.rel (0) target = $region45
    $region44: #{model_forward.1} parent=1 // pred_region
      _
    $region45: #{model_forward.1} parent=1 // pred_fallthru
      _
    %3288 = vsyncpa [#allocation3], 1
    %3289 = vsyncpa [#allocation5], 1

</llo_original>
